<compile_context>
chip_gen: v6e
topology: v6e:2x2x1
jax: 0.10.0
libtpu: 0.0.40
codegen_flags: <defaults>
</compile_context>

<pallas_src>
import math

import jax
import jax.numpy as jnp
import numpy as np
from jax.experimental import pallas as pl
from jax.experimental.pallas import tpu as pltpu

_LN_EPS = 1e-5
_LANE = 128


def _round_up(x, m):
    return (x + m - 1) // m * m


def _pad2(a, rows, cols):
    a = jnp.asarray(a, jnp.float32)
    return jnp.pad(a, ((0, rows - a.shape[0]), (0, cols - a.shape[1])))


# ---------------------------------------------------------------------------
# Fused kernel factory: LN + conv1 + ResNet blocks + time-mean + conv2 + linear
# for one (batch, T-tile) grid point.
# ---------------------------------------------------------------------------
def _make_kernel(has_ds, tile_t, c3, t_final, stage_c, dot_dtype):
    n_blocks = len(has_ds)
    t_out_tile = tile_t // (3 ** n_blocks)
    inv_c3 = 1.0 / float(c3)
    inv_t_final = 1.0 / float(t_final)

    def dot(a, b):
        # Cast only the MXU operands (bf16 fast path on v5e/v6e/v7x); the
        # accumulate and all elementwise math stay f32.
        return jnp.dot(a.astype(dot_dtype), b.astype(dot_dtype),
                       preferred_element_type=jnp.float32)

    def kernel(*refs):
        alphas = refs[0]                       # SMEM: (2*n_blocks,) PReLU slopes
        x_ref, w1, b1 = refs[1:4]
        pos = 4
        blk = []
        for _ in has_ds:
            blk.append(refs[pos:pos + 4])
            pos += 4
        w2, b2, wl, bl = refs[pos:pos + 4]
        pos += 4
        ref_out, log_out = refs[pos:pos + 2]
        acc, xpad, pool = refs[pos + 2:pos + 5]

        t = pl.program_id(1)

        @pl.when(t == 0)
        def _():
            acc[...] = jnp.zeros_like(acc)
            # Lanes >= c3 of the conv1 staging buffer must be zero; they are
            # never written afterwards, so one memset per batch row suffices.
            xpad[...] = jnp.zeros_like(xpad)

        # ---- LayerNorm over the c3 true channels (no padded lanes in x) ----
        # gamma/beta are folded into w1/b1 in the wrapper.
        x = x_ref[0]                                          # (tile_t, c3)
        mu = jnp.sum(x, axis=-1, keepdims=True) * inv_c3
        xm = x - mu
        var = jnp.sum(xm * xm, axis=-1, keepdims=True) * inv_c3
        xhat = xm * jax.lax.rsqrt(var + _LN_EPS)

        # ---- conv1: pad the real lanes up to 128 in VMEM, one lane-dense
        #      MXU matmul (1x1 conv == channel matmul). ----------------------
        xpad[:, 0:c3] = xhat
        y = dot(xpad[...], w1[...]) + b1[...]                 # (tile_t, Cp)

        # ---- ResNet blocks (BN folded; skip projection fused into conv-a) --
        cur_t = tile_t
        for i, d in enumerate(has_ds):
            wa, ba, wb, bb = blk[i]
            a1 = alphas[2 * i]
            a2 = alphas[2 * i + 1]
            zc = stage_c[i + 1]
            zb = dot(y, wa[...]) + ba[...]       # (cur_t, zc) or (cur_t, 2*zc)
            if d:
                z1 = zb[:, 0:zc]                 # main path (conv-a + BN1)
                skip = zb[:, zc:2 * zc]          # projected residual
            else:
                z1 = zb
                skip = y
            z1 = jnp.where(z1 >= 0, z1, a1 * z1)              # PReLU
            z2 = dot(z1, wb[...]) + bb[...] + skip
            z2 = jnp.where(z2 >= 0, z2, a2 * z2)              # PReLU
            # MaxPool1d(3): max the three row-shifted copies first, store once,
            # then a single aligned stride-3 sublane read from VMEM scratch.
            t_out = cur_t // 3
            m = jnp.maximum(jnp.maximum(z2[0:cur_t - 2], z2[1:cur_t - 1]),
                            z2[2:cur_t])
            pool[0:cur_t - 2, 0:zc] = m
            y = pool[pl.ds(0, t_out, stride=3), 0:zc]
            cur_t = t_out

        # ---- masked partial time-sum into the accumulator ------------------
        # Padded-T rows never mix with real rows inside any pooling window
        # (tile_t is a multiple of 3^n), so masking the final sum is exact.
        valid = jnp.clip(t_final - t * t_out_tile, 0, t_out_tile)
        rows = jax.lax.broadcasted_iota(jnp.int32, y.shape, 0)
        acc[...] += jnp.sum(jnp.where(rows < valid, y, 0.0), axis=0,
                            keepdims=True)

        # ---- head at the last T tile: mean commutes with the 1x1 conv2 -----
        @pl.when(t == pl.num_programs(1) - 1)
        def _():
            rv = dot(acc[...] * inv_t_final, w2[...]) + b2[...]   # (1, Cp)
            ref_out[0] = rv
            log_out[0] = dot(rv, wl[...]) + bl[...]

    return kernel


# ---------------------------------------------------------------------------
# Wrapper (glue): layout, weight padding, LN/BN folding, T tiling, pallas_call.
# ---------------------------------------------------------------------------
def speaker_encoder_forward(x_bct, params, have_relevant_speakers=True, *,
                            dot_dtype=jnp.bfloat16, tile_rows=None):
    """x_bct: (B, 3*in_channels, T) float32 (PyTorch NCL layout)."""
    # TODO(synk): an NCL-input path with an in-kernel tile transpose would
    # remove this HBM relayout pass over x entirely.
    x = jnp.transpose(x_bct, (0, 2, 1)).astype(jnp.float32)    # (B, T, 3C)
    B, T, c3 = x.shape

    blocks = params["blocks"]
    n_blocks = len(blocks)
    p3 = 3 ** n_blocks
    t_final = T // p3                        # rows surviving the maxpool chain
    assert t_final > 0, "sequence too short for the MaxPool(3) chain"
    t_eff = t_final * p3                     # frames that actually contribute

    c3_pad = _round_up(c3, _LANE)
    c_in_pad = _round_up(params["w1"].shape[1], _LANE)

    def wcast(a):                            # matmul operands only
        return a.astype(dot_dtype)

    # Fold LayerNorm gamma/beta into conv1: w1' = diag(g) @ w1, b1' = b@w1 + b1
    ln_g = jnp.asarray(params["ln_g"], jnp.float32)
    ln_b = jnp.asarray(params["ln_b"], jnp.float32)
    w1_t = jnp.asarray(params["w1"], jnp.float32)
    w1f = ln_g.T * w1_t
    b1f = ln_b @ w1_t + jnp.asarray(params["b1"], jnp.float32)
    flat = [wcast(_pad2(w1f, c3_pad, c_in_pad)), _pad2(b1f, 1, c_in_pad)]

    has_ds, alphas, stage_c = [], [], [c_in_pad]
    for blk in blocks:
        cin, cout = blk["w1"].shape
        cin_p, cout_p = _round_up(cin, _LANE), _round_up(cout, _LANE)
        wb1 = blk["w1"] * blk["s1"]                      # fold BN1
        bb1 = blk["b1"] * blk["s1"] + blk["h1"]
        wb2 = blk["w2"] * blk["s2"]                      # fold BN2
        bb2 = blk["b2"] * blk["s2"] + blk["h2"]
        d = "wd" in blk
        if d:
            # Fuse conv-a and the skip projection along N: one 256-wide matmul
            # per block (native v6e/v7x MXU width), y read/cast once.
            wa = jnp.concatenate([_pad2(wb1, cin_p, cout_p),
                                  _pad2(blk["wd"], cin_p, cout_p)], axis=1)
            ba = jnp.concatenate([_pad2(bb1, 1, cout_p),
                                  _pad2(blk["bd"], 1, cout_p)], axis=1)
        else:
            wa, ba = _pad2(wb1, cin_p, cout_p), _pad2(bb1, 1, cout_p)
        flat += [wcast(wa), ba,
                 wcast(_pad2(wb2, cout_p, cout_p)), _pad2(bb2, 1, cout_p)]
        has_ds.append(d)
        alphas += [blk["a1"][0, 0], blk["a2"][0, 0]]
        stage_c.append(cout_p)

    c_out = params["w2"].shape[1]
    n_spk = params["wl"].shape[1]
    c_out_pad = _round_up(c_out, _LANE)
    s_pad = _round_up(n_spk, _LANE)
    flat += [wcast(_pad2(params["w2"], c_out_pad, c_out_pad)),
             _pad2(params["b2"], 1, c_out_pad),
             wcast(_pad2(params["wl"], c_out_pad, s_pad)),
             _pad2(params["bl"], 1, s_pad)]
    alphas = jnp.stack(alphas).astype(jnp.float32)             # -> SMEM scalars

    # ---- T tiling: multiples of lcm(8, 3^n) keep per-tile pooling exact and
    #      sublane blocks 8-aligned; ~2160-row tiles amortize grid overhead. --
    unit = (p3 * 8) // math.gcd(p3, 8)
    if tile_rows is None:
        tile_rows = unit * ((2048 + unit - 1) // unit)         # ~2160 rows
    assert tile_rows % unit == 0
    if t_eff <= tile_rows:
        tile_t, t_pad, num_t = t_eff, t_eff, 1                 # one full-T tile
    else:
        tile_t = tile_rows
        t_pad = _round_up(t_eff, tile_t)
        num_t = t_pad // tile_t
    # x stays channel-UNPADDED in HBM: the block's last dim equals the true
    # channel count, so per-tile DMAs move only real data.
    x = jnp.pad(x[:, :t_eff, :], ((0, 0), (0, t_pad - t_eff), (0, 0)))

    def rep_spec(shape):                     # weights: resident, fetched once
        nd = len(shape)
        return pl.BlockSpec(shape, lambda b, t, _nd=nd: (0,) * _nd)

    in_specs = ([pl.BlockSpec(memory_space=pltpu.MemorySpace.SMEM)] +  # alphas
                [pl.BlockSpec((1, tile_t, c3), lambda b, t: (b, t, 0))] +
                [rep_spec(a.shape) for a in flat])
    out_specs = (pl.BlockSpec((1, 1, c_out_pad), lambda b, t: (b, 0, 0)),
                 pl.BlockSpec((1, 1, s_pad), lambda b, t: (b, 0, 0)))

    kernel = _make_kernel(tuple(has_ds), tile_t, c3, t_final, tuple(stage_c),
                          dot_dtype)
    ref3, log3 = pl.pallas_call(
        kernel,
        out_shape=(jax.ShapeDtypeStruct((B, 1, c_out_pad), jnp.float32),
                   jax.ShapeDtypeStruct((B, 1, s_pad), jnp.float32)),
        grid=(B, num_t),
        in_specs=in_specs,
        out_specs=out_specs,
        scratch_shapes=[pltpu.VMEM((1, c_out_pad), jnp.float32),      # time-sum
                        pltpu.VMEM((tile_t, c3_pad), jnp.float32),    # conv1 pad
                        pltpu.VMEM((tile_t, max(stage_c)), jnp.float32)],  # pool
        compiler_params=pltpu.CompilerParams(
            # B is independent work ("parallel"); the T-tile axis carries the
            # running time-sum -> "arbitrary" (reduction axis last).
            dimension_semantics=("parallel", "arbitrary"),
            vmem_limit_bytes=32 * 1024 * 1024),
    )(alphas, x, *flat)

    ref_vec = ref3[:, 0, :c_out]
    logits = log3[:, 0, :n_spk]
    if have_relevant_speakers:
        return ref_vec, logits
    return ref_vec


# ---------------------------------------------------------------------------
# Deterministic parameter init (shapes mirror the PyTorch module)
# ---------------------------------------------------------------------------
def init_params(key, in_channels, out_channels, n_resnetblocks, n_speakers):
    C3 = in_channels * 3
    keys = iter(jax.random.split(key, 128))

    def nrm(shape, scale=0.1):
        return (scale * jax.random.normal(next(keys), shape)).astype(jnp.float32)

    p = {"ln_g": (1.0 + nrm((1, C3))).astype(jnp.float32),
         "ln_b": nrm((1, C3)),
         "w1": nrm((C3, in_channels)),      # conv1 weight, stored (Cin, Cout)
         "b1": nrm((1, in_channels))}

    chans = ([(in_channels, in_channels)] * (n_resnetblocks // 2)
             + [(in_channels, out_channels)]
             + [(out_channels, out_channels)]
             * (n_resnetblocks - n_resnetblocks // 2 - 1))

    eps = 1e-5
    blocks = []
    for cin, cout in chans:
        def folded_bn(c):
            gamma = (1.0 + nrm((1, c))).astype(jnp.float32)
            beta = nrm((1, c))
            mean = nrm((1, c))
            var = (1.0 + jnp.abs(nrm((1, c)))).astype(jnp.float32)
            scale = gamma / jnp.sqrt(var + eps)
            shift = beta - mean * scale
            return scale.astype(jnp.float32), shift.astype(jnp.float32)

        s1, h1 = folded_bn(cout)
        s2, h2 = folded_bn(cout)
        blk = {"w1": nrm((cin, cout)), "b1": nrm((1, cout)),
               "s1": s1, "h1": h1, "a1": jnp.full((1, 1), 0.25, jnp.float32),
               "w2": nrm((cout, cout)), "b2": nrm((1, cout)),
               "s2": s2, "h2": h2, "a2": jnp.full((1, 1), 0.25, jnp.float32)}
        if cin != cout:
            blk["wd"] = nrm((cin, cout))
            blk["bd"] = nrm((1, cout))
        blocks.append(blk)
    p["blocks"] = blocks
    p["w2"] = nrm((out_channels, out_channels))
    p["b2"] = nrm((1, out_channels))
    p["wl"] = nrm((out_channels, n_speakers))
    p["bl"] = nrm((1, n_speakers))
    return p


# ---------------------------------------------------------------------------
# Pure-JAX reference (unfolded BN/LN, unpadded, f32) for correctness checks
# ---------------------------------------------------------------------------
def reference_forward(x_bct, p):
    x = jnp.transpose(x_bct, (0, 2, 1))
    mu = x.mean(-1, keepdims=True)
    var = ((x - mu) ** 2).mean(-1, keepdims=True)
    y = (x - mu) / jnp.sqrt(var + _LN_EPS) * p["ln_g"][0] + p["ln_b"][0]
    y = y @ p["w1"] + p["b1"][0]
    for blk in p["blocks"]:
        r = y
        z = y @ blk["w1"] + blk["b1"][0]
        z = z * blk["s1"][0] + blk["h1"][0]
        z = jnp.where(z >= 0, z, blk["a1"][0, 0] * z)
        z = z @ blk["w2"] + blk["b2"][0]
        z = z * blk["s2"][0] + blk["h2"][0]
        if "wd" in blk:
            r = r @ blk["wd"] + blk["bd"][0]
        z = z + r
        z = jnp.where(z >= 0, z, blk["a2"][0, 0] * z)
        B, T, C = z.shape
        to = T // 3
        y = z[:, : 3 * to].reshape(B, to, 3, C).max(axis=2)
    y = y @ p["w2"] + p["b2"][0]
    ref_vec = y.mean(axis=1)
    logits = ref_vec @ p["wl"] + p["bl"][0]
    return ref_vec, logits


if __name__ == "__main__":
    in_channels, out_channels = 8, 16
    n_resnetblocks, n_speakers = 3, 12
    B, T = 2, 81                       # 81 -> 27 -> 9 -> 3 after 3 maxpool(3)

    key = jax.random.PRNGKey(0)
    kx, kp = jax.random.split(key)
    x = jax.random.normal(kx, (B, in_channels * 3, T), dtype=jnp.float32)
    params = init_params(kp, in_channels, out_channels, n_resnetblocks,
                         n_speakers)

    r_ref, l_ref = reference_forward(x, params)

    # 1) exact f32-MXU path, single full-T tile.
    ref_vec, logits = speaker_encoder_forward(x, params, True,
                                              dot_dtype=jnp.float32)
    jax.block_until_ready((ref_vec, logits))
    assert ref_vec.shape == (B, out_channels)
    assert logits.shape == (B, n_speakers)
    assert np.allclose(np.asarray(ref_vec), np.asarray(r_ref),
                       atol=1e-4, rtol=1e-4)
    assert np.allclose(np.asarray(logits), np.asarray(l_ref),
                       atol=1e-4, rtol=1e-4)

    # 2) multi-tile T path (forced small tile) with ragged T (maxpool floor).
    T2 = 500
    x2 = jax.random.normal(jax.random.PRNGKey(1), (B, in_channels * 3, T2),
                           dtype=jnp.float32)
    rv2, lg2 = speaker_encoder_forward(x2, params, True,
                                       dot_dtype=jnp.float32, tile_rows=216)
    jax.block_until_ready((rv2, lg2))
    r2, l2 = reference_forward(x2, params)
    assert np.allclose(np.asarray(rv2), np.asarray(r2), atol=1e-4, rtol=1e-4)
    assert np.allclose(np.asarray(lg2), np.asarray(l2), atol=1e-4, rtol=1e-4)

    # 3) default fast path: bf16 at the MXU (v5e/v6e/v7x); loose tolerance.
    rv3, lg3 = speaker_encoder_forward(x, params, True)
    jax.block_until_ready((rv3, lg3))
    assert np.allclose(np.asarray(rv3), np.asarray(r_ref), atol=0.1, rtol=0.1)
    assert np.allclose(np.asarray(lg3), np.asarray(l_ref), atol=0.1, rtol=0.1)

    print("KERNEL_OK")
</pallas_src>

<mosaic_0001>
module attributes {stable_mosaic.version = 11 : i64} {
  func.func @kernel(%arg0: i32, %arg1: i32, %arg2: memref<6xf32, #tpu.memory_space<smem>>, %arg3: memref<1x81x24xf32, #tpu.memory_space<vmem>>, %arg4: memref<128x128xf32, #tpu.memory_space<vmem>>, %arg5: memref<1x128xf32, #tpu.memory_space<vmem>>, %arg6: memref<128x128xf32, #tpu.memory_space<vmem>>, %arg7: memref<1x128xf32, #tpu.memory_space<vmem>>, %arg8: memref<128x128xf32, #tpu.memory_space<vmem>>, %arg9: memref<1x128xf32, #tpu.memory_space<vmem>>, %arg10: memref<128x256xf32, #tpu.memory_space<vmem>>, %arg11: memref<1x256xf32, #tpu.memory_space<vmem>>, %arg12: memref<128x128xf32, #tpu.memory_space<vmem>>, %arg13: memref<1x128xf32, #tpu.memory_space<vmem>>, %arg14: memref<128x128xf32, #tpu.memory_space<vmem>>, %arg15: memref<1x128xf32, #tpu.memory_space<vmem>>, %arg16: memref<128x128xf32, #tpu.memory_space<vmem>>, %arg17: memref<1x128xf32, #tpu.memory_space<vmem>>, %arg18: memref<128x128xf32, #tpu.memory_space<vmem>>, %arg19: memref<1x128xf32, #tpu.memory_space<vmem>>, %arg20: memref<128x128xf32, #tpu.memory_space<vmem>>, %arg21: memref<1x128xf32, #tpu.memory_space<vmem>>, %arg22: memref<1x1x128xf32, #tpu.memory_space<vmem>>, %arg23: memref<1x1x128xf32, #tpu.memory_space<vmem>>, %arg24: memref<1x128xf32, #tpu.memory_space<vmem>>, %arg25: memref<81x128xf32, #tpu.memory_space<vmem>>, %arg26: memref<81x128xf32, #tpu.memory_space<vmem>>) attributes {dimension_semantics = [#tpu.dimension_semantics<parallel>, #tpu.dimension_semantics<arbitrary>], iteration_bounds = array<i64: 2, 1>, scalar_prefetch = 0 : i64, scratch_operands = 3 : i64, tpu.core_type = #tpu.core_type<tc>, window_params = [{transform_indices = @transform_0, window_bounds = array<i64: 6>}, {transform_indices = @transform_1, window_bounds = array<i64: 1, 81, 24>}, {pipeline_mode = #tpu.pipeline_mode<synchronous>, transform_indices = @transform_2, window_bounds = array<i64: 128, 128>}, {pipeline_mode = #tpu.pipeline_mode<synchronous>, transform_indices = @transform_3, window_bounds = array<i64: 1, 128>}, {pipeline_mode = #tpu.pipeline_mode<synchronous>, transform_indices = @transform_4, window_bounds = array<i64: 128, 128>}, {pipeline_mode = #tpu.pipeline_mode<synchronous>, transform_indices = @transform_5, window_bounds = array<i64: 1, 128>}, {pipeline_mode = #tpu.pipeline_mode<synchronous>, transform_indices = @transform_6, window_bounds = array<i64: 128, 128>}, {pipeline_mode = #tpu.pipeline_mode<synchronous>, transform_indices = @transform_7, window_bounds = array<i64: 1, 128>}, {pipeline_mode = #tpu.pipeline_mode<synchronous>, transform_indices = @transform_8, window_bounds = array<i64: 128, 256>}, {pipeline_mode = #tpu.pipeline_mode<synchronous>, transform_indices = @transform_9, window_bounds = array<i64: 1, 256>}, {pipeline_mode = #tpu.pipeline_mode<synchronous>, transform_indices = @transform_10, window_bounds = array<i64: 128, 128>}, {pipeline_mode = #tpu.pipeline_mode<synchronous>, transform_indices = @transform_11, window_bounds = array<i64: 1, 128>}, {pipeline_mode = #tpu.pipeline_mode<synchronous>, transform_indices = @transform_12, window_bounds = array<i64: 128, 128>}, {pipeline_mode = #tpu.pipeline_mode<synchronous>, transform_indices = @transform_13, window_bounds = array<i64: 1, 128>}, {pipeline_mode = #tpu.pipeline_mode<synchronous>, transform_indices = @transform_14, window_bounds = array<i64: 128, 128>}, {pipeline_mode = #tpu.pipeline_mode<synchronous>, transform_indices = @transform_15, window_bounds = array<i64: 1, 128>}, {pipeline_mode = #tpu.pipeline_mode<synchronous>, transform_indices = @transform_16, window_bounds = array<i64: 128, 128>}, {pipeline_mode = #tpu.pipeline_mode<synchronous>, transform_indices = @transform_17, window_bounds = array<i64: 1, 128>}, {pipeline_mode = #tpu.pipeline_mode<synchronous>, transform_indices = @transform_18, window_bounds = array<i64: 128, 128>}, {pipeline_mode = #tpu.pipeline_mode<synchronous>, transform_indices = @transform_19, window_bounds = array<i64: 1, 128>}, {transform_indices = @transform_20, window_bounds = array<i64: 1, 1, 128>}, {transform_indices = @transform_21, window_bounds = array<i64: 1, 1, 128>}]} {
    %c0_i32 = arith.constant 0 : i32
    %0 = arith.cmpi eq, %arg1, %c0_i32 : i32
    %1 = arith.extui %0 : i1 to i32
    %c0_i32_0 = arith.constant 0 : i32
    %2 = arith.cmpi ne, %1, %c0_i32_0 : i32
    scf.if %2 {
      %cst_76 = arith.constant 0.000000e+00 : f32
      %137 = vector.broadcast %cst_76 : f32 to vector<1x128xf32>
      %c0_77 = arith.constant 0 : index
      %c0_78 = arith.constant 0 : index
      %138 = vector.load %arg24[%c0_77, %c0_78] : memref<1x128xf32, #tpu.memory_space<vmem>>, vector<1x128xf32>
      tpu.vector_store %arg24[%c0_77, %c0_78], %137 {strides = array<i32>} : memref<1x128xf32, #tpu.memory_space<vmem>>, vector<1x128xf32>,
      %cst_79 = arith.constant 0.000000e+00 : f32
      %139 = vector.broadcast %cst_79 : f32 to vector<81x128xf32>
      %c0_80 = arith.constant 0 : index
      %c0_81 = arith.constant 0 : index
      %140 = vector.load %arg25[%c0_80, %c0_81] : memref<81x128xf32, #tpu.memory_space<vmem>>, vector<81x128xf32>
      tpu.vector_store %arg25[%c0_80, %c0_81], %139 {strides = array<i32>} : memref<81x128xf32, #tpu.memory_space<vmem>>, vector<81x128xf32>,
    } else {
    }
    %c0 = arith.constant 0 : index
    %c0_1 = arith.constant 0 : index
    %c0_2 = arith.constant 0 : index
    %3 = vector.load %arg3[%c0, %c0_1, %c0_2] : memref<1x81x24xf32, #tpu.memory_space<vmem>>, vector<1x81x24xf32>
    %4 = vector.shape_cast %3 : vector<1x81x24xf32> to vector<81x24xf32>
    %cst = arith.constant dense<0.000000e+00> : vector<81xf32>
    %5 = vector.multi_reduction <add>, %4, %cst [1] : vector<81x24xf32> to vector<81xf32>
    %6 = vector.shape_cast %5 : vector<81xf32> to vector<81x1xf32>
    %cst_3 = arith.constant 0.0416666679 : f32
    %7 = vector.broadcast %cst_3 : f32 to vector<81x1xf32>
    %8 = arith.mulf %6, %7 : vector<81x1xf32>
    %9 = vector.broadcast %8 : vector<81x1xf32> to vector<81x24xf32>
    %10 = arith.subf %4, %9 : vector<81x24xf32>
    %11 = arith.mulf %10, %10 : vector<81x24xf32>
    %cst_4 = arith.constant dense<0.000000e+00> : vector<81xf32>
    %12 = vector.multi_reduction <add>, %11, %cst_4 [1] : vector<81x24xf32> to vector<81xf32>
    %13 = vector.shape_cast %12 : vector<81xf32> to vector<81x1xf32>
    %cst_5 = arith.constant 0.0416666679 : f32
    %14 = vector.broadcast %cst_5 : f32 to vector<81x1xf32>
    %15 = arith.mulf %13, %14 : vector<81x1xf32>
    %cst_6 = arith.constant 9.99999974E-6 : f32
    %16 = vector.broadcast %cst_6 : f32 to vector<81x1xf32>
    %17 = arith.addf %15, %16 : vector<81x1xf32>
    %18 = math.rsqrt %17 : vector<81x1xf32>
    %19 = vector.broadcast %18 : vector<81x1xf32> to vector<81x24xf32>
    %20 = arith.mulf %10, %19 : vector<81x24xf32>
    %c0_7 = arith.constant 0 : index
    %c0_8 = arith.constant 0 : index
    %21 = vector.load %arg25[%c0_7, %c0_8] : memref<81x128xf32, #tpu.memory_space<vmem>>, vector<81x24xf32>
    tpu.vector_store %arg25[%c0_7, %c0_8], %20 {strides = array<i32>} : memref<81x128xf32, #tpu.memory_space<vmem>>, vector<81x24xf32>,
    %c0_9 = arith.constant 0 : index
    %c0_10 = arith.constant 0 : index
    %22 = vector.load %arg25[%c0_9, %c0_10] : memref<81x128xf32, #tpu.memory_space<vmem>>, vector<81x128xf32>
    %c0_11 = arith.constant 0 : index
    %c0_12 = arith.constant 0 : index
    %23 = vector.load %arg4[%c0_11, %c0_12] : memref<128x128xf32, #tpu.memory_space<vmem>>, vector<128x128xf32>
    %cst_13 = arith.constant dense<0.000000e+00> : vector<81x128xf32>
    %24 = tpu.matmul %22, %23, %cst_13 {dimension_numbers = #tpu.dot_dimension_numbers<[1], [0], [0], [1], [0, 0, 1, 1], [], []>} : vector<81x128xf32>, vector<128x128xf32>, vector<81x128xf32> -> vector<81x128xf32>
    %c0_14 = arith.constant 0 : index
    %c0_15 = arith.constant 0 : index
    %25 = vector.load %arg5[%c0_14, %c0_15] : memref<1x128xf32, #tpu.memory_space<vmem>>, vector<1x128xf32>
    %26 = vector.broadcast %25 : vector<1x128xf32> to vector<81x128xf32>
    %27 = arith.addf %24, %26 : vector<81x128xf32>
    %c0_16 = arith.constant 0 : index
    %28 = memref.load %arg2[%c0_16] : memref<6xf32, #tpu.memory_space<smem>>
    %c1 = arith.constant 1 : index
    %29 = memref.load %arg2[%c1] : memref<6xf32, #tpu.memory_space<smem>>
    %c0_17 = arith.constant 0 : index
    %c0_18 = arith.constant 0 : index
    %30 = vector.load %arg6[%c0_17, %c0_18] : memref<128x128xf32, #tpu.memory_space<vmem>>, vector<128x128xf32>
    %cst_19 = arith.constant dense<0.000000e+00> : vector<81x128xf32>
    %31 = tpu.matmul %27, %30, %cst_19 {dimension_numbers = #tpu.dot_dimension_numbers<[1], [0], [0], [1], [0, 0, 1, 1], [], []>} : vector<81x128xf32>, vector<128x128xf32>, vector<81x128xf32> -> vector<81x128xf32>
    %c0_20 = arith.constant 0 : index
    %c0_21 = arith.constant 0 : index
    %32 = vector.load %arg7[%c0_20, %c0_21] : memref<1x128xf32, #tpu.memory_space<vmem>>, vector<1x128xf32>
    %33 = vector.broadcast %32 : vector<1x128xf32> to vector<81x128xf32>
    %34 = arith.addf %31, %33 : vector<81x128xf32>
    %cst_22 = arith.constant 0.000000e+00 : f32
    %35 = vector.broadcast %cst_22 : f32 to vector<81x128xf32>
    %36 = arith.cmpf oge, %34, %35 : vector<81x128xf32>
    %37 = vector.broadcast %28 : f32 to vector<81x128xf32>
    %38 = arith.mulf %37, %34 : vector<81x128xf32>
    %39 = arith.select %36, %34, %38 : vector<81x128xi1>, vector<81x128xf32>
    %c0_23 = arith.constant 0 : index
    %c0_24 = arith.constant 0 : index
    %40 = vector.load %arg8[%c0_23, %c0_24] : memref<128x128xf32, #tpu.memory_space<vmem>>, vector<128x128xf32>
    %cst_25 = arith.constant dense<0.000000e+00> : vector<81x128xf32>
    %41 = tpu.matmul %39, %40, %cst_25 {dimension_numbers = #tpu.dot_dimension_numbers<[1], [0], [0], [1], [0, 0, 1, 1], [], []>} : vector<81x128xf32>, vector<128x128xf32>, vector<81x128xf32> -> vector<81x128xf32>
    %c0_26 = arith.constant 0 : index
    %c0_27 = arith.constant 0 : index
    %42 = vector.load %arg9[%c0_26, %c0_27] : memref<1x128xf32, #tpu.memory_space<vmem>>, vector<1x128xf32>
    %43 = vector.broadcast %42 : vector<1x128xf32> to vector<81x128xf32>
    %44 = arith.addf %41, %43 : vector<81x128xf32>
    %45 = arith.addf %44, %27 : vector<81x128xf32>
    %cst_28 = arith.constant 0.000000e+00 : f32
    %46 = vector.broadcast %cst_28 : f32 to vector<81x128xf32>
    %47 = arith.cmpf oge, %45, %46 : vector<81x128xf32>
    %48 = vector.broadcast %29 : f32 to vector<81x128xf32>
    %49 = arith.mulf %48, %45 : vector<81x128xf32>
    %50 = arith.select %47, %45, %49 : vector<81x128xi1>, vector<81x128xf32>
    %51 = vector.extract_strided_slice %50 {offsets = [0, 0], sizes = [79, 128], strides = [1, 1]} : vector<81x128xf32> to vector<79x128xf32>
    %52 = vector.extract_strided_slice %50 {offsets = [1, 0], sizes = [79, 128], strides = [1, 1]} : vector<81x128xf32> to vector<79x128xf32>
    %53 = arith.maximumf %51, %52 : vector<79x128xf32>
    %54 = vector.extract_strided_slice %50 {offsets = [2, 0], sizes = [79, 128], strides = [1, 1]} : vector<81x128xf32> to vector<79x128xf32>
    %55 = arith.maximumf %53, %54 : vector<79x128xf32>
    %c0_29 = arith.constant 0 : index
    %c0_30 = arith.constant 0 : index
    %56 = vector.load %arg26[%c0_29, %c0_30] : memref<81x128xf32, #tpu.memory_space<vmem>>, vector<79x128xf32>
    tpu.vector_store %arg26[%c0_29, %c0_30], %55 {strides = array<i32>} : memref<81x128xf32, #tpu.memory_space<vmem>>, vector<79x128xf32>,
    %c0_31 = arith.constant 0 : index
    %c0_32 = arith.constant 0 : index
    %57 = tpu.strided_load %arg26[%c0_31, %c0_32] {strides = array<i32: 3, 1>} : memref<81x128xf32, #tpu.memory_space<vmem>>, vector<27x128xf32>
    %c2 = arith.constant 2 : index
    %58 = memref.load %arg2[%c2] : memref<6xf32, #tpu.memory_space<smem>>
    %c3 = arith.constant 3 : index
    %59 = memref.load %arg2[%c3] : memref<6xf32, #tpu.memory_space<smem>>
    %c0_33 = arith.constant 0 : index
    %c0_34 = arith.constant 0 : index
    %60 = vector.load %arg10[%c0_33, %c0_34] : memref<128x256xf32, #tpu.memory_space<vmem>>, vector<128x256xf32>
    %cst_35 = arith.constant dense<0.000000e+00> : vector<27x256xf32>
    %61 = tpu.matmul %57, %60, %cst_35 {dimension_numbers = #tpu.dot_dimension_numbers<[1], [0], [0], [1], [0, 0, 1, 1], [], []>} : vector<27x128xf32>, vector<128x256xf32>, vector<27x256xf32> -> vector<27x256xf32>
    %c0_36 = arith.constant 0 : index
    %c0_37 = arith.constant 0 : index
    %62 = vector.load %arg11[%c0_36, %c0_37] : memref<1x256xf32, #tpu.memory_space<vmem>>, vector<1x256xf32>
    %63 = vector.broadcast %62 : vector<1x256xf32> to vector<27x256xf32>
    %64 = arith.addf %61, %63 : vector<27x256xf32>
    %65 = vector.extract_strided_slice %64 {offsets = [0, 0], sizes = [27, 128], strides = [1, 1]} : vector<27x256xf32> to vector<27x128xf32>
    %66 = vector.extract_strided_slice %64 {offsets = [0, 128], sizes = [27, 128], strides = [1, 1]} : vector<27x256xf32> to vector<27x128xf32>
    %cst_38 = arith.constant 0.000000e+00 : f32
    %67 = vector.broadcast %cst_38 : f32 to vector<27x128xf32>
    %68 = arith.cmpf oge, %65, %67 : vector<27x128xf32>
    %69 = vector.broadcast %58 : f32 to vector<27x128xf32>
    %70 = arith.mulf %69, %65 : vector<27x128xf32>
    %71 = arith.select %68, %65, %70 : vector<27x128xi1>, vector<27x128xf32>
    %c0_39 = arith.constant 0 : index
    %c0_40 = arith.constant 0 : index
    %72 = vector.load %arg12[%c0_39, %c0_40] : memref<128x128xf32, #tpu.memory_space<vmem>>, vector<128x128xf32>
    %cst_41 = arith.constant dense<0.000000e+00> : vector<27x128xf32>
    %73 = tpu.matmul %71, %72, %cst_41 {dimension_numbers = #tpu.dot_dimension_numbers<[1], [0], [0], [1], [0, 0, 1, 1], [], []>} : vector<27x128xf32>, vector<128x128xf32>, vector<27x128xf32> -> vector<27x128xf32>
    %c0_42 = arith.constant 0 : index
    %c0_43 = arith.constant 0 : index
    %74 = vector.load %arg13[%c0_42, %c0_43] : memref<1x128xf32, #tpu.memory_space<vmem>>, vector<1x128xf32>
    %75 = vector.broadcast %74 : vector<1x128xf32> to vector<27x128xf32>
    %76 = arith.addf %73, %75 : vector<27x128xf32>
    %77 = arith.addf %76, %66 : vector<27x128xf32>
    %cst_44 = arith.constant 0.000000e+00 : f32
    %78 = vector.broadcast %cst_44 : f32 to vector<27x128xf32>
    %79 = arith.cmpf oge, %77, %78 : vector<27x128xf32>
    %80 = vector.broadcast %59 : f32 to vector<27x128xf32>
    %81 = arith.mulf %80, %77 : vector<27x128xf32>
    %82 = arith.select %79, %77, %81 : vector<27x128xi1>, vector<27x128xf32>
    %83 = vector.extract_strided_slice %82 {offsets = [0, 0], sizes = [25, 128], strides = [1, 1]} : vector<27x128xf32> to vector<25x128xf32>
    %84 = vector.extract_strided_slice %82 {offsets = [1, 0], sizes = [25, 128], strides = [1, 1]} : vector<27x128xf32> to vector<25x128xf32>
    %85 = arith.maximumf %83, %84 : vector<25x128xf32>
    %86 = vector.extract_strided_slice %82 {offsets = [2, 0], sizes = [25, 128], strides = [1, 1]} : vector<27x128xf32> to vector<25x128xf32>
    %87 = arith.maximumf %85, %86 : vector<25x128xf32>
    %c0_45 = arith.constant 0 : index
    %c0_46 = arith.constant 0 : index
    %88 = vector.load %arg26[%c0_45, %c0_46] : memref<81x128xf32, #tpu.memory_space<vmem>>, vector<25x128xf32>
    tpu.vector_store %arg26[%c0_45, %c0_46], %87 {strides = array<i32>} : memref<81x128xf32, #tpu.memory_space<vmem>>, vector<25x128xf32>,
    %c0_47 = arith.constant 0 : index
    %c0_48 = arith.constant 0 : index
    %89 = tpu.strided_load %arg26[%c0_47, %c0_48] {strides = array<i32: 3, 1>} : memref<81x128xf32, #tpu.memory_space<vmem>>, vector<9x128xf32>
    %c4 = arith.constant 4 : index
    %90 = memref.load %arg2[%c4] : memref<6xf32, #tpu.memory_space<smem>>
    %c5 = arith.constant 5 : index
    %91 = memref.load %arg2[%c5] : memref<6xf32, #tpu.memory_space<smem>>
    %c0_49 = arith.constant 0 : index
    %c0_50 = arith.constant 0 : index
    %92 = vector.load %arg14[%c0_49, %c0_50] : memref<128x128xf32, #tpu.memory_space<vmem>>, vector<128x128xf32>
    %cst_51 = arith.constant dense<0.000000e+00> : vector<9x128xf32>
    %93 = tpu.matmul %89, %92, %cst_51 {dimension_numbers = #tpu.dot_dimension_numbers<[1], [0], [0], [1], [0, 0, 1, 1], [], []>} : vector<9x128xf32>, vector<128x128xf32>, vector<9x128xf32> -> vector<9x128xf32>
    %c0_52 = arith.constant 0 : index
    %c0_53 = arith.constant 0 : index
    %94 = vector.load %arg15[%c0_52, %c0_53] : memref<1x128xf32, #tpu.memory_space<vmem>>, vector<1x128xf32>
    %95 = vector.broadcast %94 : vector<1x128xf32> to vector<9x128xf32>
    %96 = arith.addf %93, %95 : vector<9x128xf32>
    %cst_54 = arith.constant 0.000000e+00 : f32
    %97 = vector.broadcast %cst_54 : f32 to vector<9x128xf32>
    %98 = arith.cmpf oge, %96, %97 : vector<9x128xf32>
    %99 = vector.broadcast %90 : f32 to vector<9x128xf32>
    %100 = arith.mulf %99, %96 : vector<9x128xf32>
    %101 = arith.select %98, %96, %100 : vector<9x128xi1>, vector<9x128xf32>
    %c0_55 = arith.constant 0 : index
    %c0_56 = arith.constant 0 : index
    %102 = vector.load %arg16[%c0_55, %c0_56] : memref<128x128xf32, #tpu.memory_space<vmem>>, vector<128x128xf32>
    %cst_57 = arith.constant dense<0.000000e+00> : vector<9x128xf32>
    %103 = tpu.matmul %101, %102, %cst_57 {dimension_numbers = #tpu.dot_dimension_numbers<[1], [0], [0], [1], [0, 0, 1, 1], [], []>} : vector<9x128xf32>, vector<128x128xf32>, vector<9x128xf32> -> vector<9x128xf32>
    %c0_58 = arith.constant 0 : index
    %c0_59 = arith.constant 0 : index
    %104 = vector.load %arg17[%c0_58, %c0_59] : memref<1x128xf32, #tpu.memory_space<vmem>>, vector<1x128xf32>
    %105 = vector.broadcast %104 : vector<1x128xf32> to vector<9x128xf32>
    %106 = arith.addf %103, %105 : vector<9x128xf32>
    %107 = arith.addf %106, %89 : vector<9x128xf32>
    %cst_60 = arith.constant 0.000000e+00 : f32
    %108 = vector.broadcast %cst_60 : f32 to vector<9x128xf32>
    %109 = arith.cmpf oge, %107, %108 : vector<9x128xf32>
    %110 = vector.broadcast %91 : f32 to vector<9x128xf32>
    %111 = arith.mulf %110, %107 : vector<9x128xf32>
    %112 = arith.select %109, %107, %111 : vector<9x128xi1>, vector<9x128xf32>
    %113 = vector.extract_strided_slice %112 {offsets = [0, 0], sizes = [7, 128], strides = [1, 1]} : vector<9x128xf32> to vector<7x128xf32>
    %114 = vector.extract_strided_slice %112 {offsets = [1, 0], sizes = [7, 128], strides = [1, 1]} : vector<9x128xf32> to vector<7x128xf32>
    %115 = arith.maximumf %113, %114 : vector<7x128xf32>
    %116 = vector.extract_strided_slice %112 {offsets = [2, 0], sizes = [7, 128], strides = [1, 1]} : vector<9x128xf32> to vector<7x128xf32>
    %117 = arith.maximumf %115, %116 : vector<7x128xf32>
    %c0_61 = arith.constant 0 : index
    %c0_62 = arith.constant 0 : index
    %118 = vector.load %arg26[%c0_61, %c0_62] : memref<81x128xf32, #tpu.memory_space<vmem>>, vector<7x128xf32>
    tpu.vector_store %arg26[%c0_61, %c0_62], %117 {strides = array<i32>} : memref<81x128xf32, #tpu.memory_space<vmem>>, vector<7x128xf32>,
    %c0_63 = arith.constant 0 : index
    %c0_64 = arith.constant 0 : index
    %119 = tpu.strided_load %arg26[%c0_63, %c0_64] {strides = array<i32: 3, 1>} : memref<81x128xf32, #tpu.memory_space<vmem>>, vector<3x128xf32>
    %c3_i32 = arith.constant 3 : i32
    %120 = arith.muli %arg1, %c3_i32 : i32
    %c3_i32_65 = arith.constant 3 : i32
    %121 = arith.subi %c3_i32_65, %120 : i32
    %c0_i32_66 = arith.constant 0 : i32
    %c3_i32_67 = arith.constant 3 : i32
    %122 = arith.maxsi %c0_i32_66, %121 : i32
    %123 = arith.minsi %c3_i32_67, %122 : i32
    %124 = tpu.iota {dimensions = array<i32: 0>} : vector<3x128xi32>
    %c0_68 = arith.constant 0 : index
    %c0_69 = arith.constant 0 : index
    %125 = vector.load %arg24[%c0_68, %c0_69] : memref<1x128xf32, #tpu.memory_space<vmem>>, vector<1x128xf32>
    %126 = vector.broadcast %123 : i32 to vector<3x128xi32>
    %127 = arith.cmpi slt, %124, %126 : vector<3x128xi32>
    %cst_70 = arith.constant 0.000000e+00 : f32
    %128 = vector.broadcast %cst_70 : f32 to vector<3x128xf32>
    %129 = arith.select %127, %119, %128 : vector<3x128xi1>, vector<3x128xf32>
    %cst_71 = arith.constant dense<0.000000e+00> : vector<128xf32>
    %130 = vector.multi_reduction <add>, %129, %cst_71 [0] : vector<3x128xf32> to vector<128xf32>
    %131 = vector.shape_cast %130 : vector<128xf32> to vector<1x128xf32>
    %132 = arith.addf %125, %131 : vector<1x128xf32>
    %c0_72 = arith.constant 0 : index
    %c0_73 = arith.constant 0 : index
    %133 = vector.load %arg24[%c0_72, %c0_73] : memref<1x128xf32, #tpu.memory_space<vmem>>, vector<1x128xf32>
    tpu.vector_store %arg24[%c0_72, %c0_73], %132 {strides = array<i32>} : memref<1x128xf32, #tpu.memory_space<vmem>>, vector<1x128xf32>,
    %c0_i32_74 = arith.constant 0 : i32
    %134 = arith.cmpi eq, %arg1, %c0_i32_74 : i32
    %135 = arith.extui %134 : i1 to i32
    %c0_i32_75 = arith.constant 0 : i32
    %136 = arith.cmpi ne, %135, %c0_i32_75 : i32
    scf.if %136 {
      %c0_76 = arith.constant 0 : index
      %c0_77 = arith.constant 0 : index
      %137 = vector.load %arg24[%c0_76, %c0_77] : memref<1x128xf32, #tpu.memory_space<vmem>>, vector<1x128xf32>
      %cst_78 = arith.constant 0.333333343 : f32
      %138 = vector.broadcast %cst_78 : f32 to vector<1x128xf32>
      %139 = arith.mulf %137, %138 : vector<1x128xf32>
      %c0_79 = arith.constant 0 : index
      %c0_80 = arith.constant 0 : index
      %140 = vector.load %arg18[%c0_79, %c0_80] : memref<128x128xf32, #tpu.memory_space<vmem>>, vector<128x128xf32>
      %cst_81 = arith.constant dense<0.000000e+00> : vector<1x128xf32>
      %141 = tpu.matmul %139, %140, %cst_81 {dimension_numbers = #tpu.dot_dimension_numbers<[1], [0], [0], [1], [0, 0, 1, 1], [], []>} : vector<1x128xf32>, vector<128x128xf32>, vector<1x128xf32> -> vector<1x128xf32>
      %c0_82 = arith.constant 0 : index
      %c0_83 = arith.constant 0 : index
      %142 = vector.load %arg19[%c0_82, %c0_83] : memref<1x128xf32, #tpu.memory_space<vmem>>, vector<1x128xf32>
      %143 = arith.addf %141, %142 : vector<1x128xf32>
      %c0_84 = arith.constant 0 : index
      %c0_85 = arith.constant 0 : index
      %c0_86 = arith.constant 0 : index
      %144 = vector.load %arg22[%c0_84, %c0_85, %c0_86] : memref<1x1x128xf32, #tpu.memory_space<vmem>>, vector<1x1x128xf32>
      %145 = vector.shape_cast %144 : vector<1x1x128xf32> to vector<1x128xf32>
      %146 = vector.shape_cast %143 : vector<1x128xf32> to vector<1x1x128xf32>
      tpu.vector_store %arg22[%c0_84, %c0_85, %c0_86], %146 {strides = array<i32>} : memref<1x1x128xf32, #tpu.memory_space<vmem>>, vector<1x1x128xf32>,
      %c0_87 = arith.constant 0 : index
      %c0_88 = arith.constant 0 : index
      %147 = vector.load %arg20[%c0_87, %c0_88] : memref<128x128xf32, #tpu.memory_space<vmem>>, vector<128x128xf32>
      %cst_89 = arith.constant dense<0.000000e+00> : vector<1x128xf32>
      %148 = tpu.matmul %143, %147, %cst_89 {dimension_numbers = #tpu.dot_dimension_numbers<[1], [0], [0], [1], [0, 0, 1, 1], [], []>} : vector<1x128xf32>, vector<128x128xf32>, vector<1x128xf32> -> vector<1x128xf32>
      %c0_90 = arith.constant 0 : index
      %c0_91 = arith.constant 0 : index
      %149 = vector.load %arg21[%c0_90, %c0_91] : memref<1x128xf32, #tpu.memory_space<vmem>>, vector<1x128xf32>
      %150 = arith.addf %148, %149 : vector<1x128xf32>
      %c0_92 = arith.constant 0 : index
      %c0_93 = arith.constant 0 : index
      %c0_94 = arith.constant 0 : index
      %151 = vector.load %arg23[%c0_92, %c0_93, %c0_94] : memref<1x1x128xf32, #tpu.memory_space<vmem>>, vector<1x1x128xf32>
      %152 = vector.shape_cast %151 : vector<1x1x128xf32> to vector<1x128xf32>
      %153 = vector.shape_cast %150 : vector<1x128xf32> to vector<1x1x128xf32>
      tpu.vector_store %arg23[%c0_92, %c0_93, %c0_94], %153 {strides = array<i32>} : memref<1x1x128xf32, #tpu.memory_space<vmem>>, vector<1x1x128xf32>,
    } else {
    }
    return
  }
  func.func @transform_0(%arg0: i32, %arg1: i32) -> i32 {
    %c0_i32 = arith.constant 0 : i32
    %c0_i32_0 = arith.constant 0 : i32
    return %c0_i32 : i32
  }
  func.func @transform_1(%arg0: i32, %arg1: i32) -> (i32, i32, i32) {
    %c0_i32 = arith.constant 0 : i32
    %c0_i32_0 = arith.constant 0 : i32
    return %arg0, %arg1, %c0_i32 : i32, i32, i32
  }
  func.func @transform_2(%arg0: i32, %arg1: i32) -> (i32, i32) {
    %c0_i32 = arith.constant 0 : i32
    %c0_i32_0 = arith.constant 0 : i32
    %c0_i32_1 = arith.constant 0 : i32
    return %c0_i32, %c0_i32_0 : i32, i32
  }
  func.func @transform_3(%arg0: i32, %arg1: i32) -> (i32, i32) {
    %c0_i32 = arith.constant 0 : i32
    %c0_i32_0 = arith.constant 0 : i32
    %c0_i32_1 = arith.constant 0 : i32
    return %c0_i32, %c0_i32_0 : i32, i32
  }
  func.func @transform_4(%arg0: i32, %arg1: i32) -> (i32, i32) {
    %c0_i32 = arith.constant 0 : i32
    %c0_i32_0 = arith.constant 0 : i32
    %c0_i32_1 = arith.constant 0 : i32
    return %c0_i32, %c0_i32_0 : i32, i32
  }
  func.func @transform_5(%arg0: i32, %arg1: i32) -> (i32, i32) {
    %c0_i32 = arith.constant 0 : i32
    %c0_i32_0 = arith.constant 0 : i32
    %c0_i32_1 = arith.constant 0 : i32
    return %c0_i32, %c0_i32_0 : i32, i32
  }
  func.func @transform_6(%arg0: i32, %arg1: i32) -> (i32, i32) {
    %c0_i32 = arith.constant 0 : i32
    %c0_i32_0 = arith.constant 0 : i32
    %c0_i32_1 = arith.constant 0 : i32
    return %c0_i32, %c0_i32_0 : i32, i32
  }
  func.func @transform_7(%arg0: i32, %arg1: i32) -> (i32, i32) {
    %c0_i32 = arith.constant 0 : i32
    %c0_i32_0 = arith.constant 0 : i32
    %c0_i32_1 = arith.constant 0 : i32
    return %c0_i32, %c0_i32_0 : i32, i32
  }
  func.func @transform_8(%arg0: i32, %arg1: i32) -> (i32, i32) {
    %c0_i32 = arith.constant 0 : i32
    %c0_i32_0 = arith.constant 0 : i32
    %c0_i32_1 = arith.constant 0 : i32
    return %c0_i32, %c0_i32_0 : i32, i32
  }
  func.func @transform_9(%arg0: i32, %arg1: i32) -> (i32, i32) {
    %c0_i32 = arith.constant 0 : i32
    %c0_i32_0 = arith.constant 0 : i32
    %c0_i32_1 = arith.constant 0 : i32
    return %c0_i32, %c0_i32_0 : i32, i32
  }
  func.func @transform_10(%arg0: i32, %arg1: i32) -> (i32, i32) {
    %c0_i32 = arith.constant 0 : i32
    %c0_i32_0 = arith.constant 0 : i32
    %c0_i32_1 = arith.constant 0 : i32
    return %c0_i32, %c0_i32_0 : i32, i32
  }
  func.func @transform_11(%arg0: i32, %arg1: i32) -> (i32, i32) {
    %c0_i32 = arith.constant 0 : i32
    %c0_i32_0 = arith.constant 0 : i32
    %c0_i32_1 = arith.constant 0 : i32
    return %c0_i32, %c0_i32_0 : i32, i32
  }
  func.func @transform_12(%arg0: i32, %arg1: i32) -> (i32, i32) {
    %c0_i32 = arith.constant 0 : i32
    %c0_i32_0 = arith.constant 0 : i32
    %c0_i32_1 = arith.constant 0 : i32
    return %c0_i32, %c0_i32_0 : i32, i32
  }
  func.func @transform_13(%arg0: i32, %arg1: i32) -> (i32, i32) {
    %c0_i32 = arith.constant 0 : i32
    %c0_i32_0 = arith.constant 0 : i32
    %c0_i32_1 = arith.constant 0 : i32
    return %c0_i32, %c0_i32_0 : i32, i32
  }
  func.func @transform_14(%arg0: i32, %arg1: i32) -> (i32, i32) {
    %c0_i32 = arith.constant 0 : i32
    %c0_i32_0 = arith.constant 0 : i32
    %c0_i32_1 = arith.constant 0 : i32
    return %c0_i32, %c0_i32_0 : i32, i32
  }
  func.func @transform_15(%arg0: i32, %arg1: i32) -> (i32, i32) {
    %c0_i32 = arith.constant 0 : i32
    %c0_i32_0 = arith.constant 0 : i32
    %c0_i32_1 = arith.constant 0 : i32
    return %c0_i32, %c0_i32_0 : i32, i32
  }
  func.func @transform_16(%arg0: i32, %arg1: i32) -> (i32, i32) {
    %c0_i32 = arith.constant 0 : i32
    %c0_i32_0 = arith.constant 0 : i32
    %c0_i32_1 = arith.constant 0 : i32
    return %c0_i32, %c0_i32_0 : i32, i32
  }
  func.func @transform_17(%arg0: i32, %arg1: i32) -> (i32, i32) {
    %c0_i32 = arith.constant 0 : i32
    %c0_i32_0 = arith.constant 0 : i32
    %c0_i32_1 = arith.constant 0 : i32
    return %c0_i32, %c0_i32_0 : i32, i32
  }
  func.func @transform_18(%arg0: i32, %arg1: i32) -> (i32, i32) {
    %c0_i32 = arith.constant 0 : i32
    %c0_i32_0 = arith.constant 0 : i32
    %c0_i32_1 = arith.constant 0 : i32
    return %c0_i32, %c0_i32_0 : i32, i32
  }
  func.func @transform_19(%arg0: i32, %arg1: i32) -> (i32, i32) {
    %c0_i32 = arith.constant 0 : i32
    %c0_i32_0 = arith.constant 0 : i32
    %c0_i32_1 = arith.constant 0 : i32
    return %c0_i32, %c0_i32_0 : i32, i32
  }
  func.func @transform_20(%arg0: i32, %arg1: i32) -> (i32, i32, i32) {
    %c0_i32 = arith.constant 0 : i32
    %c0_i32_0 = arith.constant 0 : i32
    %c0_i32_1 = arith.constant 0 : i32
    return %arg0, %c0_i32, %c0_i32_0 : i32, i32, i32
  }
  func.func @transform_21(%arg0: i32, %arg1: i32) -> (i32, i32, i32) {
    %c0_i32 = arith.constant 0 : i32
    %c0_i32_0 = arith.constant 0 : i32
    %c0_i32_1 = arith.constant 0 : i32
    return %arg0, %c0_i32, %c0_i32_0 : i32, i32, i32
  }
}

</mosaic_0001>

<llo_original>
// kernel: tpu_custom_call.1
$region0: #{tpu_custom_call.1}
  #allocation0 [shape = 'u32[]', space=smem, size = 0x4, offset = 0x4, fixed_abs, tag = 'smem constant byte address 0x4 - core index']
  #allocation1 [shape = 'u32[144,128]{1,0:T(1,128)}', space=vmem, size = 0x12000, scoped, tag = 'internal scratch']
  #allocation2 [shape = 'f32[1,128]{1,0:T(1,128)}', space=vmem, size = 0x200, scoped, tag = 'scratch operand']
  #allocation3 [shape = 'f32[81,128]{1,0:T(8,128)}', space=vmem, size = 0xb000, scoped, tag = 'scratch operand']
  #allocation4 [shape = 'f32[81,128]{1,0:T(8,128)}', space=vmem, size = 0xb000, scoped, tag = 'scratch operand']
  %s0 = inlined_call_operand.hbm [shape: f32[6], index: 0, kind: input, shape index: {}]
  %s1 = inlined_call_operand.vmem [shape: f32[2,81,24], index: 1, kind: input, shape index: {}]
  %s2 = inlined_call_operand.vmem [shape: f32[128,128], index: 2, kind: input, shape index: {}]
  %s3 = inlined_call_operand.hbm [shape: f32[1,128], index: 3, kind: input, shape index: {}]
  %s4 = inlined_call_operand.hbm [shape: f32[128,128], index: 4, kind: input, shape index: {}]
  %s5 = inlined_call_operand.hbm [shape: f32[1,128], index: 5, kind: input, shape index: {}]
  %s6 = inlined_call_operand.hbm [shape: f32[128,128], index: 6, kind: input, shape index: {}]
  %s7 = inlined_call_operand.hbm [shape: f32[1,128], index: 7, kind: input, shape index: {}]
  %s8 = inlined_call_operand.hbm [shape: f32[128,256], index: 8, kind: input, shape index: {}]
  %s9 = inlined_call_operand.hbm [shape: f32[1,256], index: 9, kind: input, shape index: {}]
  %s10 = inlined_call_operand.hbm [shape: f32[128,128], index: 10, kind: input, shape index: {}]
  %s11 = inlined_call_operand.hbm [shape: f32[1,128], index: 11, kind: input, shape index: {}]
  %s12 = inlined_call_operand.hbm [shape: f32[128,128], index: 12, kind: input, shape index: {}]
  %s13 = inlined_call_operand.hbm [shape: f32[1,128], index: 13, kind: input, shape index: {}]
  %s14 = inlined_call_operand.hbm [shape: f32[128,128], index: 14, kind: input, shape index: {}]
  %s15 = inlined_call_operand.hbm [shape: f32[1,128], index: 15, kind: input, shape index: {}]
  %s16 = inlined_call_operand.hbm [shape: f32[128,128], index: 16, kind: input, shape index: {}]
  %s17 = inlined_call_operand.hbm [shape: f32[1,128], index: 17, kind: input, shape index: {}]
  %s18 = inlined_call_operand.vmem [shape: f32[128,128], index: 18, kind: input, shape index: {}]
  %s19 = inlined_call_operand.hbm [shape: f32[1,128], index: 19, kind: input, shape index: {}]
  %s20 = inlined_call_operand.hbm [shape: f32[2,1,128], index: 20, kind: output, shape index: {0}]
  %s21 = inlined_call_operand.hbm [shape: f32[2,1,128], index: 21, kind: output, shape index: {1}]
  %22 = xla_tuple %s20, %s21
  %s23 = sld [smem:[#allocation0]]
  $region197: #{tpu_custom_call.1} parent=0
    _
  %s25 = ssub.s32 1, %s23
  %s26 = scalar_select 0, %s25, %s23
  $region1: #{tpu_custom_call.1} parent=0
    #allocation5 [shape = 'u8[512]{0}', space=smem, size = 0x200, scoped, tag = 'input window, operand 0, single buffered']
    #allocation6 [shape = 's32[2]{0}', space=sflag, size = 0x8, scoped, tag = 'scoped memory for tpu_custom_call.1']
    #allocation7 [shape = 's32[2]{0}', space=sflag, size = 0x8, scoped, tag = 'scoped memory for tpu_custom_call.1']
    #allocation8 [shape = 's32[2]{0}', space=sflag, size = 0x8, scoped, tag = 'scoped memory for tpu_custom_call.1']
    #allocation9 [shape = 'u8[512]{0}', space=vmem, size = 0x400, scoped, tag = 'input window, operand 3, single buffered']
    #allocation10 [shape = 'u8[65536]{0}', space=vmem, size = 0x10000, scoped, tag = 'input window, operand 4, single buffered']
    #allocation11 [shape = 's32[1]{0}', space=sflag, size = 0x4, scoped, tag = 'scoped memory for tpu_custom_call.1']
    #allocation12 [shape = 'u8[512]{0}', space=vmem, size = 0x400, scoped, tag = 'input window, operand 5, single buffered']
    #allocation13 [shape = 'u8[65536]{0}', space=vmem, size = 0x10000, scoped, tag = 'input window, operand 6, single buffered']
    #allocation14 [shape = 's32[1]{0}', space=sflag, size = 0x4, scoped, tag = 'scoped memory for tpu_custom_call.1']
    #allocation15 [shape = 'u8[512]{0}', space=vmem, size = 0x400, scoped, tag = 'input window, operand 7, single buffered']
    #allocation16 [shape = 'u8[131072]{0}', space=vmem, size = 0x20000, scoped, tag = 'input window, operand 8, single buffered']
    #allocation17 [shape = 's32[1]{0}', space=sflag, size = 0x4, scoped, tag = 'scoped memory for tpu_custom_call.1']
    #allocation18 [shape = 'u8[1024]{0}', space=vmem, size = 0x400, scoped, tag = 'input window, operand 9, single buffered']
    #allocation19 [shape = 'u8[65536]{0}', space=vmem, size = 0x10000, scoped, tag = 'input window, operand 10, single buffered']
    #allocation20 [shape = 's32[1]{0}', space=sflag, size = 0x4, scoped, tag = 'scoped memory for tpu_custom_call.1']
    #allocation21 [shape = 'u8[512]{0}', space=vmem, size = 0x400, scoped, tag = 'input window, operand 11, single buffered']
    #allocation22 [shape = 'u8[65536]{0}', space=vmem, size = 0x10000, scoped, tag = 'input window, operand 12, single buffered']
    #allocation23 [shape = 's32[1]{0}', space=sflag, size = 0x4, scoped, tag = 'scoped memory for tpu_custom_call.1']
    #allocation24 [shape = 'u8[512]{0}', space=vmem, size = 0x400, scoped, tag = 'input window, operand 13, single buffered']
    #allocation25 [shape = 'u8[65536]{0}', space=vmem, size = 0x10000, scoped, tag = 'input window, operand 14, single buffered']
    #allocation26 [shape = 's32[1]{0}', space=sflag, size = 0x4, scoped, tag = 'scoped memory for tpu_custom_call.1']
    #allocation27 [shape = 'u8[512]{0}', space=vmem, size = 0x400, scoped, tag = 'input window, operand 15, single buffered']
    #allocation28 [shape = 'u8[65536]{0}', space=vmem, size = 0x10000, scoped, tag = 'input window, operand 16, single buffered']
    #allocation29 [shape = 's32[1]{0}', space=sflag, size = 0x4, scoped, tag = 'scoped memory for tpu_custom_call.1']
    #allocation30 [shape = 'u8[512]{0}', space=vmem, size = 0x400, scoped, tag = 'input window, operand 17, single buffered']
    #allocation31 [shape = 'u8[512]{0}', space=vmem, size = 0x400, scoped, tag = 'input window, operand 19, single buffered']
    #allocation32 [shape = 's32[1]{0}', space=sflag, size = 0x4, scoped, tag = 'scoped memory for tpu_custom_call.1']
    #allocation33 [shape = 'u8[1024]{0}', space=vmem, size = 0x400, scoped, tag = 'output window, operand 0']
    #allocation34 [shape = 'u8[1024]{0}', space=vmem, size = 0x400, scoped, tag = 'output window, operand 1']
    #allocation35 [shape = 's32[2]{0}', space=sflag, size = 0x8, scoped, tag = 'scoped memory for tpu_custom_call.1']
    %27 = vsyncpa [#allocation8], 0
    %28 = vsyncpa [#allocation6], 0
    %29 = vsyncpa [#allocation11], 0
    %30 = vsyncpa [#allocation14], 0
    %31 = vsyncpa [#allocation17], 0
    %32 = vsyncpa [#allocation20], 0
    %33 = vsyncpa [#allocation23], 0
    %34 = vsyncpa [#allocation26], 0
    %35 = vsyncpa [#allocation29], 0
    %36 = vsyncpa [#allocation32], 0
    %37 = vsyncpa [#allocation7], 0
    %s38 = scalar_lea.sflag [#allocation7], 1
    %39 = vsyncpa %s38, 0
    %40 = vsyncpa [#allocation35], 0
    %s41 = scalar_lea.sflag [#allocation35], 1
    %42 = vsyncpa %s41, 0
    loop: start=0, step=1, limit=4
    $region2: #{tpu_custom_call.1} parent=1 // loop_pre_header
      _
    $region3: #{tpu_custom_call.1} parent=1 // loop_header
      %s44 = sphi 0, %s48
      %p45 = scmp.ge.s32.totalorder %s44, 4
      %s51 = sphi 0, %s63
      %s52 = sphi 0, %s59
      %s53 = sphi 0, %s51
      %s54 = sphi 0, %s52
      %s55 = sphi 0, %s53
      %s56 = sphi 0, %s54
      %s64 = sphi 0, %s64
      %s66 = sphi 0, %s64
      %s67 = sphi 0, %s66
      %s81 = sphi 0, %s67
      %s89 = sphi 0, %s91
      %s92 = sphi 0, %s89
      %s93 = sphi 0, %s92
      %s109 = sphi 0, %s93
      %s113 = sphi 0, %s113
      %s115 = sphi 0, %s113
      %s116 = sphi 0, %s115
      %s130 = sphi 0, %s116
      %s134 = sphi 0, %s134
      %s136 = sphi 0, %s134
      %s137 = sphi 0, %s136
      %s151 = sphi 0, %s137
      %s155 = sphi 0, %s155
      %s157 = sphi 0, %s155
      %s158 = sphi 0, %s157
      %s172 = sphi 0, %s158
      %s176 = sphi 0, %s176
      %s178 = sphi 0, %s176
      %s179 = sphi 0, %s178
      %s193 = sphi 0, %s179
      %s197 = sphi 0, %s197
      %s199 = sphi 0, %s197
      %s200 = sphi 0, %s199
      %s214 = sphi 0, %s200
      %s218 = sphi 0, %s218
      %s220 = sphi 0, %s218
      %s221 = sphi 0, %s220
      %s235 = sphi 0, %s221
      %s239 = sphi 0, %s239
      %s241 = sphi 0, %s239
      %s242 = sphi 0, %s241
      %s256 = sphi 0, %s242
      %s260 = sphi 0, %s260
      %s262 = sphi 0, %s260
      %s263 = sphi 0, %s262
      %s277 = sphi 0, %s263
      %s281 = sphi 0, %s281
      %s283 = sphi 0, %s281
      %s284 = sphi 0, %s283
      %s298 = sphi 0, %s284
      %s302 = sphi 0, %s302
      %s304 = sphi 0, %s302
      %s305 = sphi 0, %s304
      %s319 = sphi 0, %s305
      %s323 = sphi 0, %s323
      %s325 = sphi 0, %s323
      %s326 = sphi 0, %s325
      %s340 = sphi 0, %s326
      %s344 = sphi 0, %s344
      %s346 = sphi 0, %s344
      %s347 = sphi 0, %s346
      %s361 = sphi 0, %s347
      %s365 = sphi 0, %s365
      %s367 = sphi 0, %s365
      %s368 = sphi 0, %s367
      %s382 = sphi 0, %s368
      %s386 = sphi 0, %s386
      %s388 = sphi 0, %s386
      %s389 = sphi 0, %s388
      %s403 = sphi 0, %s389
      %s407 = sphi 0, %s407
      %s409 = sphi 0, %s407
      %s410 = sphi 0, %s409
      %s424 = sphi 0, %s410
      %s428 = sphi 0, %s428
      %s430 = sphi 0, %s428
      %s431 = sphi 0, %s430
      %s445 = sphi 0, %s431
      %s449 = sphi 0, %s449
      %s451 = sphi 0, %s449
      %s452 = sphi 0, %s451
      %s466 = sphi 0, %s452
      %s470 = sphi 0, %s470
      %s472 = sphi 0, %s470
      %s473 = sphi 0, %s472
      %s487 = sphi 0, %s473
      %s493 = sphi 0, %s495
      %s496 = sphi 0, %s493
      %s497 = sphi 0, %s496
      %s513 = sphi 0, %s497
      %s519 = sphi 0, %s521
      %s522 = sphi 0, %s519
      %s523 = sphi 0, %s522
      %s539 = sphi 0, %s523
    $region4: #{tpu_custom_call.1} parent=1 // loop_header_branch
      %47 = sbr.rel (%p45) target = $region8
    $region5: #{tpu_custom_call.1} parent=1 // loop_body
      %s49 = ssub.s32 %s44, 1
      %s50 = ssub.s32 %s44, 2
      %s57 = sadd.s32 1, %s52
      %p58 = scmp.ge.s32.totalorder %s57, 1
      %s59 = scalar_select %p58, 0, %s57
      %s60 = sadd.s32 1, %s51
      %s61 = scalar_select %p58, %s60, %s51
      %p62 = scmp.ge.s32.totalorder %s61, 2
      %s63 = scalar_select %p62, 0, %s61
      %s65 = sadd.s32 %s64, 1
      %p68 = scmp.eq.s32.totalorder %s44, 1
      %p69 = scmp.ne.s32.totalorder %s64, %s66
      %p70 = scmp.eq.s32.totalorder %s44, 0
      %p71 = por %p69, %p70
      %p72 = scmp.ne.s32.totalorder %s64, %s66
      %p73 = scmp.eq.s32.totalorder %s49, 1
      %p74 = por %p72, %p73
      %p75 = scmp.ne.s32.totalorder %s66, %s67
      %p76 = scmp.eq.s32.totalorder %s49, 0
      %p77 = por %p75, %p76
      %p78 = scmp.ne.s32.totalorder %s66, %s67
      %p79 = scmp.eq.s32.totalorder %s50, 1
      %p80 = por %p78, %p79
      %p82 = scmp.ne.s32.totalorder %s67, %s81
      %p83 = scmp.eq.s32.totalorder %s50, 0
      %p84 = por %p82, %p83
      %s85 = ssub.s32 %s51, %s63
      %s86 = ssub.s32 %s52, %s59
      %s87 = sor.u32 %s85, %s86
      %p88 = scmp.eq.s32.totalorder %s87, 0
      %s90 = sadd.s32 %s89, 1
      %s91 = scalar_select %p88, %s89, %s90
      %p94 = pneg %p88
      %p95 = scmp.eq.s32.totalorder %s44, 1
      %p96 = por %p94, %p95
      %p97 = scmp.ne.s32.totalorder %s89, %s92
      %p98 = scmp.eq.s32.totalorder %s44, 0
      %p99 = por %p97, %p98
      %p100 = scmp.ne.s32.totalorder %s89, %s92
      %p101 = scmp.eq.s32.totalorder %s49, 1
      %p102 = por %p100, %p101
      %p103 = scmp.ne.s32.totalorder %s92, %s93
      %p104 = scmp.eq.s32.totalorder %s49, 0
      %p105 = por %p103, %p104
      %p106 = scmp.ne.s32.totalorder %s92, %s93
      %p107 = scmp.eq.s32.totalorder %s50, 1
      %p108 = por %p106, %p107
      %p110 = scmp.ne.s32.totalorder %s93, %s109
      %p111 = scmp.eq.s32.totalorder %s50, 0
      %p112 = por %p110, %p111
      %s114 = sadd.s32 %s113, 1
      %p117 = scmp.eq.s32.totalorder %s44, 1
      %p118 = scmp.ne.s32.totalorder %s113, %s115
      %p119 = scmp.eq.s32.totalorder %s44, 0
      %p120 = por %p118, %p119
      %p121 = scmp.ne.s32.totalorder %s113, %s115
      %p122 = scmp.eq.s32.totalorder %s49, 1
      %p123 = por %p121, %p122
      %p124 = scmp.ne.s32.totalorder %s115, %s116
      %p125 = scmp.eq.s32.totalorder %s49, 0
      %p126 = por %p124, %p125
      %p127 = scmp.ne.s32.totalorder %s115, %s116
      %p128 = scmp.eq.s32.totalorder %s50, 1
      %p129 = por %p127, %p128
      %p131 = scmp.ne.s32.totalorder %s116, %s130
      %p132 = scmp.eq.s32.totalorder %s50, 0
      %p133 = por %p131, %p132
      %s135 = sadd.s32 %s134, 1
      %p138 = scmp.eq.s32.totalorder %s44, 1
      %p139 = scmp.ne.s32.totalorder %s134, %s136
      %p140 = scmp.eq.s32.totalorder %s44, 0
      %p141 = por %p139, %p140
      %p142 = scmp.ne.s32.totalorder %s134, %s136
      %p143 = scmp.eq.s32.totalorder %s49, 1
      %p144 = por %p142, %p143
      %p145 = scmp.ne.s32.totalorder %s136, %s137
      %p146 = scmp.eq.s32.totalorder %s49, 0
      %p147 = por %p145, %p146
      %p148 = scmp.ne.s32.totalorder %s136, %s137
      %p149 = scmp.eq.s32.totalorder %s50, 1
      %p150 = por %p148, %p149
      %p152 = scmp.ne.s32.totalorder %s137, %s151
      %p153 = scmp.eq.s32.totalorder %s50, 0
      %p154 = por %p152, %p153
      %s156 = sadd.s32 %s155, 1
      %p159 = scmp.eq.s32.totalorder %s44, 1
      %p160 = scmp.ne.s32.totalorder %s155, %s157
      %p161 = scmp.eq.s32.totalorder %s44, 0
      %p162 = por %p160, %p161
      %p163 = scmp.ne.s32.totalorder %s155, %s157
      %p164 = scmp.eq.s32.totalorder %s49, 1
      %p165 = por %p163, %p164
      %p166 = scmp.ne.s32.totalorder %s157, %s158
      %p167 = scmp.eq.s32.totalorder %s49, 0
      %p168 = por %p166, %p167
      %p169 = scmp.ne.s32.totalorder %s157, %s158
      %p170 = scmp.eq.s32.totalorder %s50, 1
      %p171 = por %p169, %p170
      %p173 = scmp.ne.s32.totalorder %s158, %s172
      %p174 = scmp.eq.s32.totalorder %s50, 0
      %p175 = por %p173, %p174
      %s177 = sadd.s32 %s176, 1
      %p180 = scmp.eq.s32.totalorder %s44, 1
      %p181 = scmp.ne.s32.totalorder %s176, %s178
      %p182 = scmp.eq.s32.totalorder %s44, 0
      %p183 = por %p181, %p182
      %p184 = scmp.ne.s32.totalorder %s176, %s178
      %p185 = scmp.eq.s32.totalorder %s49, 1
      %p186 = por %p184, %p185
      %p187 = scmp.ne.s32.totalorder %s178, %s179
      %p188 = scmp.eq.s32.totalorder %s49, 0
      %p189 = por %p187, %p188
      %p190 = scmp.ne.s32.totalorder %s178, %s179
      %p191 = scmp.eq.s32.totalorder %s50, 1
      %p192 = por %p190, %p191
      %p194 = scmp.ne.s32.totalorder %s179, %s193
      %p195 = scmp.eq.s32.totalorder %s50, 0
      %p196 = por %p194, %p195
      %s198 = sadd.s32 %s197, 1
      %p201 = scmp.eq.s32.totalorder %s44, 1
      %p202 = scmp.ne.s32.totalorder %s197, %s199
      %p203 = scmp.eq.s32.totalorder %s44, 0
      %p204 = por %p202, %p203
      %p205 = scmp.ne.s32.totalorder %s197, %s199
      %p206 = scmp.eq.s32.totalorder %s49, 1
      %p207 = por %p205, %p206
      %p208 = scmp.ne.s32.totalorder %s199, %s200
      %p209 = scmp.eq.s32.totalorder %s49, 0
      %p210 = por %p208, %p209
      %p211 = scmp.ne.s32.totalorder %s199, %s200
      %p212 = scmp.eq.s32.totalorder %s50, 1
      %p213 = por %p211, %p212
      %p215 = scmp.ne.s32.totalorder %s200, %s214
      %p216 = scmp.eq.s32.totalorder %s50, 0
      %p217 = por %p215, %p216
      %s219 = sadd.s32 %s218, 1
      %p222 = scmp.eq.s32.totalorder %s44, 1
      %p223 = scmp.ne.s32.totalorder %s218, %s220
      %p224 = scmp.eq.s32.totalorder %s44, 0
      %p225 = por %p223, %p224
      %p226 = scmp.ne.s32.totalorder %s218, %s220
      %p227 = scmp.eq.s32.totalorder %s49, 1
      %p228 = por %p226, %p227
      %p229 = scmp.ne.s32.totalorder %s220, %s221
      %p230 = scmp.eq.s32.totalorder %s49, 0
      %p231 = por %p229, %p230
      %p232 = scmp.ne.s32.totalorder %s220, %s221
      %p233 = scmp.eq.s32.totalorder %s50, 1
      %p234 = por %p232, %p233
      %p236 = scmp.ne.s32.totalorder %s221, %s235
      %p237 = scmp.eq.s32.totalorder %s50, 0
      %p238 = por %p236, %p237
      %s240 = sadd.s32 %s239, 1
      %p243 = scmp.eq.s32.totalorder %s44, 1
      %p244 = scmp.ne.s32.totalorder %s239, %s241
      %p245 = scmp.eq.s32.totalorder %s44, 0
      %p246 = por %p244, %p245
      %p247 = scmp.ne.s32.totalorder %s239, %s241
      %p248 = scmp.eq.s32.totalorder %s49, 1
      %p249 = por %p247, %p248
      %p250 = scmp.ne.s32.totalorder %s241, %s242
      %p251 = scmp.eq.s32.totalorder %s49, 0
      %p252 = por %p250, %p251
      %p253 = scmp.ne.s32.totalorder %s241, %s242
      %p254 = scmp.eq.s32.totalorder %s50, 1
      %p255 = por %p253, %p254
      %p257 = scmp.ne.s32.totalorder %s242, %s256
      %p258 = scmp.eq.s32.totalorder %s50, 0
      %p259 = por %p257, %p258
      %s261 = sadd.s32 %s260, 1
      %p264 = scmp.eq.s32.totalorder %s44, 1
      %p265 = scmp.ne.s32.totalorder %s260, %s262
      %p266 = scmp.eq.s32.totalorder %s44, 0
      %p267 = por %p265, %p266
      %p268 = scmp.ne.s32.totalorder %s260, %s262
      %p269 = scmp.eq.s32.totalorder %s49, 1
      %p270 = por %p268, %p269
      %p271 = scmp.ne.s32.totalorder %s262, %s263
      %p272 = scmp.eq.s32.totalorder %s49, 0
      %p273 = por %p271, %p272
      %p274 = scmp.ne.s32.totalorder %s262, %s263
      %p275 = scmp.eq.s32.totalorder %s50, 1
      %p276 = por %p274, %p275
      %p278 = scmp.ne.s32.totalorder %s263, %s277
      %p279 = scmp.eq.s32.totalorder %s50, 0
      %p280 = por %p278, %p279
      %s282 = sadd.s32 %s281, 1
      %p285 = scmp.eq.s32.totalorder %s44, 1
      %p286 = scmp.ne.s32.totalorder %s281, %s283
      %p287 = scmp.eq.s32.totalorder %s44, 0
      %p288 = por %p286, %p287
      %p289 = scmp.ne.s32.totalorder %s281, %s283
      %p290 = scmp.eq.s32.totalorder %s49, 1
      %p291 = por %p289, %p290
      %p292 = scmp.ne.s32.totalorder %s283, %s284
      %p293 = scmp.eq.s32.totalorder %s49, 0
      %p294 = por %p292, %p293
      %p295 = scmp.ne.s32.totalorder %s283, %s284
      %p296 = scmp.eq.s32.totalorder %s50, 1
      %p297 = por %p295, %p296
      %p299 = scmp.ne.s32.totalorder %s284, %s298
      %p300 = scmp.eq.s32.totalorder %s50, 0
      %p301 = por %p299, %p300
      %s303 = sadd.s32 %s302, 1
      %p306 = scmp.eq.s32.totalorder %s44, 1
      %p307 = scmp.ne.s32.totalorder %s302, %s304
      %p308 = scmp.eq.s32.totalorder %s44, 0
      %p309 = por %p307, %p308
      %p310 = scmp.ne.s32.totalorder %s302, %s304
      %p311 = scmp.eq.s32.totalorder %s49, 1
      %p312 = por %p310, %p311
      %p313 = scmp.ne.s32.totalorder %s304, %s305
      %p314 = scmp.eq.s32.totalorder %s49, 0
      %p315 = por %p313, %p314
      %p316 = scmp.ne.s32.totalorder %s304, %s305
      %p317 = scmp.eq.s32.totalorder %s50, 1
      %p318 = por %p316, %p317
      %p320 = scmp.ne.s32.totalorder %s305, %s319
      %p321 = scmp.eq.s32.totalorder %s50, 0
      %p322 = por %p320, %p321
      %s324 = sadd.s32 %s323, 1
      %p327 = scmp.eq.s32.totalorder %s44, 1
      %p328 = scmp.ne.s32.totalorder %s323, %s325
      %p329 = scmp.eq.s32.totalorder %s44, 0
      %p330 = por %p328, %p329
      %p331 = scmp.ne.s32.totalorder %s323, %s325
      %p332 = scmp.eq.s32.totalorder %s49, 1
      %p333 = por %p331, %p332
      %p334 = scmp.ne.s32.totalorder %s325, %s326
      %p335 = scmp.eq.s32.totalorder %s49, 0
      %p336 = por %p334, %p335
      %p337 = scmp.ne.s32.totalorder %s325, %s326
      %p338 = scmp.eq.s32.totalorder %s50, 1
      %p339 = por %p337, %p338
      %p341 = scmp.ne.s32.totalorder %s326, %s340
      %p342 = scmp.eq.s32.totalorder %s50, 0
      %p343 = por %p341, %p342
      %s345 = sadd.s32 %s344, 1
      %p348 = scmp.eq.s32.totalorder %s44, 1
      %p349 = scmp.ne.s32.totalorder %s344, %s346
      %p350 = scmp.eq.s32.totalorder %s44, 0
      %p351 = por %p349, %p350
      %p352 = scmp.ne.s32.totalorder %s344, %s346
      %p353 = scmp.eq.s32.totalorder %s49, 1
      %p354 = por %p352, %p353
      %p355 = scmp.ne.s32.totalorder %s346, %s347
      %p356 = scmp.eq.s32.totalorder %s49, 0
      %p357 = por %p355, %p356
      %p358 = scmp.ne.s32.totalorder %s346, %s347
      %p359 = scmp.eq.s32.totalorder %s50, 1
      %p360 = por %p358, %p359
      %p362 = scmp.ne.s32.totalorder %s347, %s361
      %p363 = scmp.eq.s32.totalorder %s50, 0
      %p364 = por %p362, %p363
      %s366 = sadd.s32 %s365, 1
      %p369 = scmp.eq.s32.totalorder %s44, 1
      %p370 = scmp.ne.s32.totalorder %s365, %s367
      %p371 = scmp.eq.s32.totalorder %s44, 0
      %p372 = por %p370, %p371
      %p373 = scmp.ne.s32.totalorder %s365, %s367
      %p374 = scmp.eq.s32.totalorder %s49, 1
      %p375 = por %p373, %p374
      %p376 = scmp.ne.s32.totalorder %s367, %s368
      %p377 = scmp.eq.s32.totalorder %s49, 0
      %p378 = por %p376, %p377
      %p379 = scmp.ne.s32.totalorder %s367, %s368
      %p380 = scmp.eq.s32.totalorder %s50, 1
      %p381 = por %p379, %p380
      %p383 = scmp.ne.s32.totalorder %s368, %s382
      %p384 = scmp.eq.s32.totalorder %s50, 0
      %p385 = por %p383, %p384
      %s387 = sadd.s32 %s386, 1
      %p390 = scmp.eq.s32.totalorder %s44, 1
      %p391 = scmp.ne.s32.totalorder %s386, %s388
      %p392 = scmp.eq.s32.totalorder %s44, 0
      %p393 = por %p391, %p392
      %p394 = scmp.ne.s32.totalorder %s386, %s388
      %p395 = scmp.eq.s32.totalorder %s49, 1
      %p396 = por %p394, %p395
      %p397 = scmp.ne.s32.totalorder %s388, %s389
      %p398 = scmp.eq.s32.totalorder %s49, 0
      %p399 = por %p397, %p398
      %p400 = scmp.ne.s32.totalorder %s388, %s389
      %p401 = scmp.eq.s32.totalorder %s50, 1
      %p402 = por %p400, %p401
      %p404 = scmp.ne.s32.totalorder %s389, %s403
      %p405 = scmp.eq.s32.totalorder %s50, 0
      %p406 = por %p404, %p405
      %s408 = sadd.s32 %s407, 1
      %p411 = scmp.eq.s32.totalorder %s44, 1
      %p412 = scmp.ne.s32.totalorder %s407, %s409
      %p413 = scmp.eq.s32.totalorder %s44, 0
      %p414 = por %p412, %p413
      %p415 = scmp.ne.s32.totalorder %s407, %s409
      %p416 = scmp.eq.s32.totalorder %s49, 1
      %p417 = por %p415, %p416
      %p418 = scmp.ne.s32.totalorder %s409, %s410
      %p419 = scmp.eq.s32.totalorder %s49, 0
      %p420 = por %p418, %p419
      %p421 = scmp.ne.s32.totalorder %s409, %s410
      %p422 = scmp.eq.s32.totalorder %s50, 1
      %p423 = por %p421, %p422
      %p425 = scmp.ne.s32.totalorder %s410, %s424
      %p426 = scmp.eq.s32.totalorder %s50, 0
      %p427 = por %p425, %p426
      %s429 = sadd.s32 %s428, 1
      %p432 = scmp.eq.s32.totalorder %s44, 1
      %p433 = scmp.ne.s32.totalorder %s428, %s430
      %p434 = scmp.eq.s32.totalorder %s44, 0
      %p435 = por %p433, %p434
      %p436 = scmp.ne.s32.totalorder %s428, %s430
      %p437 = scmp.eq.s32.totalorder %s49, 1
      %p438 = por %p436, %p437
      %p439 = scmp.ne.s32.totalorder %s430, %s431
      %p440 = scmp.eq.s32.totalorder %s49, 0
      %p441 = por %p439, %p440
      %p442 = scmp.ne.s32.totalorder %s430, %s431
      %p443 = scmp.eq.s32.totalorder %s50, 1
      %p444 = por %p442, %p443
      %p446 = scmp.ne.s32.totalorder %s431, %s445
      %p447 = scmp.eq.s32.totalorder %s50, 0
      %p448 = por %p446, %p447
      %s450 = sadd.s32 %s449, 1
      %p453 = scmp.eq.s32.totalorder %s44, 1
      %p454 = scmp.ne.s32.totalorder %s449, %s451
      %p455 = scmp.eq.s32.totalorder %s44, 0
      %p456 = por %p454, %p455
      %p457 = scmp.ne.s32.totalorder %s449, %s451
      %p458 = scmp.eq.s32.totalorder %s49, 1
      %p459 = por %p457, %p458
      %p460 = scmp.ne.s32.totalorder %s451, %s452
      %p461 = scmp.eq.s32.totalorder %s49, 0
      %p462 = por %p460, %p461
      %p463 = scmp.ne.s32.totalorder %s451, %s452
      %p464 = scmp.eq.s32.totalorder %s50, 1
      %p465 = por %p463, %p464
      %p467 = scmp.ne.s32.totalorder %s452, %s466
      %p468 = scmp.eq.s32.totalorder %s50, 0
      %p469 = por %p467, %p468
      %s471 = sadd.s32 %s470, 1
      %p474 = scmp.eq.s32.totalorder %s44, 1
      %p475 = scmp.ne.s32.totalorder %s470, %s472
      %p476 = scmp.eq.s32.totalorder %s44, 0
      %p477 = por %p475, %p476
      %p478 = scmp.ne.s32.totalorder %s470, %s472
      %p479 = scmp.eq.s32.totalorder %s49, 1
      %p480 = por %p478, %p479
      %p481 = scmp.ne.s32.totalorder %s472, %s473
      %p482 = scmp.eq.s32.totalorder %s49, 0
      %p483 = por %p481, %p482
      %p484 = scmp.ne.s32.totalorder %s472, %s473
      %p485 = scmp.eq.s32.totalorder %s50, 1
      %p486 = por %p484, %p485
      %p488 = scmp.ne.s32.totalorder %s473, %s487
      %p489 = scmp.eq.s32.totalorder %s50, 0
      %p490 = por %p488, %p489
      %s491 = ssub.s32 %s51, %s63
      %p492 = scmp.eq.s32.totalorder %s491, 0
      %s494 = sadd.s32 %s493, 1
      %s495 = scalar_select %p492, %s493, %s494
      %p498 = pneg %p492
      %p499 = scmp.eq.s32.totalorder %s44, 1
      %p500 = por %p498, %p499
      %p501 = scmp.ne.s32.totalorder %s493, %s496
      %p502 = scmp.eq.s32.totalorder %s44, 0
      %p503 = por %p501, %p502
      %p504 = scmp.ne.s32.totalorder %s493, %s496
      %p505 = scmp.eq.s32.totalorder %s49, 1
      %p506 = por %p504, %p505
      %p507 = scmp.ne.s32.totalorder %s496, %s497
      %p508 = scmp.eq.s32.totalorder %s49, 0
      %p509 = por %p507, %p508
      %p510 = scmp.ne.s32.totalorder %s496, %s497
      %p511 = scmp.eq.s32.totalorder %s50, 1
      %p512 = por %p510, %p511
      %p514 = scmp.ne.s32.totalorder %s497, %s513
      %p515 = scmp.eq.s32.totalorder %s50, 0
      %p516 = por %p514, %p515
      %s517 = ssub.s32 %s51, %s63
      %p518 = scmp.eq.s32.totalorder %s517, 0
      %s520 = sadd.s32 %s519, 1
      %s521 = scalar_select %p518, %s519, %s520
      %p524 = pneg %p518
      %p525 = scmp.eq.s32.totalorder %s44, 1
      %p526 = por %p524, %p525
      %p527 = scmp.ne.s32.totalorder %s519, %s522
      %p528 = scmp.eq.s32.totalorder %s44, 0
      %p529 = por %p527, %p528
      %p530 = scmp.ne.s32.totalorder %s519, %s522
      %p531 = scmp.eq.s32.totalorder %s49, 1
      %p532 = por %p530, %p531
      %p533 = scmp.ne.s32.totalorder %s522, %s523
      %p534 = scmp.eq.s32.totalorder %s49, 0
      %p535 = por %p533, %p534
      %p536 = scmp.ne.s32.totalorder %s522, %s523
      %p537 = scmp.eq.s32.totalorder %s50, 1
      %p538 = por %p536, %p537
      %p540 = scmp.ne.s32.totalorder %s523, %s539
      %p541 = scmp.eq.s32.totalorder %s50, 0
      %p542 = por %p540, %p541
      %p543 = scmp.le.s32.totalorder 1, %s44
      %p544 = scmp.lt.s32.totalorder %s44, 3
      %p545 = pnand %p543, %p544
      %p546 = pneg %p545
      // Predicated region
      $region9: #{tpu_custom_call.1} parent=5 // pred_check
        _
      $region10: #{tpu_custom_call.1} parent=5 // pred_check_branch
        %548 = sbr.rel (%p545) target = $region12
      $region11: #{tpu_custom_call.1} parent=5 // pred_region
        %s549 = ssub.s32 %s44, 1
        // Predicated region
        $region13: #{tpu_custom_call.1} parent=11 // pred_check
          %p550 = pneg %p77
        $region14: #{tpu_custom_call.1} parent=11 // pred_check_branch
          %552 = sbr.rel (%p550) target = $region16
        $region15: #{tpu_custom_call.1} parent=11 // pred_region
          %s554 = ssub.s32 16, 16
          %555 = vsyncadd [#allocation8], %s554
          %558 = dma.hbm_to_smem %s0, 16, [#allocation5], [#allocation8]
        $region16: #{tpu_custom_call.1} parent=11 // pred_fallthru
          _
        // Predicated region
        $region17: #{tpu_custom_call.1} parent=11 // pred_check
          %p559 = pneg %p126
        $region18: #{tpu_custom_call.1} parent=11 // pred_check_branch
          %561 = sbr.rel (%p559) target = $region20
        $region19: #{tpu_custom_call.1} parent=11 // pred_region
          _
        $region20: #{tpu_custom_call.1} parent=11 // pred_fallthru
          _
        // Predicated region
        $region21: #{tpu_custom_call.1} parent=11 // pred_check
          %p562 = pneg %p147
        $region22: #{tpu_custom_call.1} parent=11 // pred_check_branch
          %564 = sbr.rel (%p562) target = $region24
        $region23: #{tpu_custom_call.1} parent=11 // pred_region
          %s566 = ssub.s32 16, 16
          %567 = vsyncadd [#allocation6], %s566
          %s569 = sshll.u32 [#allocation9], 4
          %s570 = int_to_ptr.vmem [resolvable:$true] %s569
          %572 = dma.hbm_to_vmem [thread:$0]  %s3, 16, %s570, [#allocation6]
        $region24: #{tpu_custom_call.1} parent=11 // pred_fallthru
          _
        // Predicated region
        $region25: #{tpu_custom_call.1} parent=11 // pred_check
          %p573 = pneg %p168
        $region26: #{tpu_custom_call.1} parent=11 // pred_check_branch
          %575 = sbr.rel (%p573) target = $region28
        $region27: #{tpu_custom_call.1} parent=11 // pred_region
          %s577 = ssub.s32 2048, 2048
          %578 = vsyncadd [#allocation11], %s577
          %s579 = sshll.u32 [#allocation10], 4
          %s580 = int_to_ptr.vmem [resolvable:$true] %s579
          %585 = dma.hbm_to_vmem [thread:$0]  %s4, 2048, %s580, [#allocation11], 128, 128, 8
        $region28: #{tpu_custom_call.1} parent=11 // pred_fallthru
          _
        // Predicated region
        $region29: #{tpu_custom_call.1} parent=11 // pred_check
          %p586 = pneg %p189
        $region30: #{tpu_custom_call.1} parent=11 // pred_check_branch
          %588 = sbr.rel (%p586) target = $region32
        $region31: #{tpu_custom_call.1} parent=11 // pred_region
          %s590 = ssub.s32 16, 16
          %591 = vsyncadd [#allocation11], %s590
          %s593 = sshll.u32 [#allocation12], 4
          %s594 = int_to_ptr.vmem [resolvable:$true] %s593
          %596 = dma.hbm_to_vmem [thread:$0]  %s5, 16, %s594, [#allocation11]
        $region32: #{tpu_custom_call.1} parent=11 // pred_fallthru
          _
        // Predicated region
        $region33: #{tpu_custom_call.1} parent=11 // pred_check
          %p597 = pneg %p210
        $region34: #{tpu_custom_call.1} parent=11 // pred_check_branch
          %599 = sbr.rel (%p597) target = $region36
        $region35: #{tpu_custom_call.1} parent=11 // pred_region
          %s601 = ssub.s32 2048, 2048
          %602 = vsyncadd [#allocation14], %s601
          %s603 = sshll.u32 [#allocation13], 4
          %s604 = int_to_ptr.vmem [resolvable:$true] %s603
          %609 = dma.hbm_to_vmem [thread:$0]  %s6, 2048, %s604, [#allocation14], 128, 128, 8
        $region36: #{tpu_custom_call.1} parent=11 // pred_fallthru
          _
        // Predicated region
        $region37: #{tpu_custom_call.1} parent=11 // pred_check
          %p610 = pneg %p231
        $region38: #{tpu_custom_call.1} parent=11 // pred_check_branch
          %612 = sbr.rel (%p610) target = $region40
        $region39: #{tpu_custom_call.1} parent=11 // pred_region
          %s614 = ssub.s32 16, 16
          %615 = vsyncadd [#allocation14], %s614
          %s617 = sshll.u32 [#allocation15], 4
          %s618 = int_to_ptr.vmem [resolvable:$true] %s617
          %620 = dma.hbm_to_vmem [thread:$0]  %s7, 16, %s618, [#allocation14]
        $region40: #{tpu_custom_call.1} parent=11 // pred_fallthru
          _
        // Predicated region
        $region41: #{tpu_custom_call.1} parent=11 // pred_check
          %p621 = pneg %p252
        $region42: #{tpu_custom_call.1} parent=11 // pred_check_branch
          %623 = sbr.rel (%p621) target = $region44
        $region43: #{tpu_custom_call.1} parent=11 // pred_region
          %s625 = ssub.s32 4096, 4096
          %626 = vsyncadd [#allocation17], %s625
          %s627 = sshll.u32 [#allocation16], 4
          %s628 = int_to_ptr.vmem [resolvable:$true] %s627
          %633 = dma.hbm_to_vmem [thread:$0]  %s8, 4096, %s628, [#allocation17], 256, 256, 16
        $region44: #{tpu_custom_call.1} parent=11 // pred_fallthru
          _
        // Predicated region
        $region45: #{tpu_custom_call.1} parent=11 // pred_check
          %p634 = pneg %p273
        $region46: #{tpu_custom_call.1} parent=11 // pred_check_branch
          %636 = sbr.rel (%p634) target = $region48
        $region47: #{tpu_custom_call.1} parent=11 // pred_region
          %s638 = ssub.s32 32, 32
          %639 = vsyncadd [#allocation17], %s638
          %s641 = sshll.u32 [#allocation18], 4
          %s642 = int_to_ptr.vmem [resolvable:$true] %s641
          %644 = dma.hbm_to_vmem [thread:$0]  %s9, 32, %s642, [#allocation17]
        $region48: #{tpu_custom_call.1} parent=11 // pred_fallthru
          _
        // Predicated region
        $region49: #{tpu_custom_call.1} parent=11 // pred_check
          %p645 = pneg %p294
        $region50: #{tpu_custom_call.1} parent=11 // pred_check_branch
          %647 = sbr.rel (%p645) target = $region52
        $region51: #{tpu_custom_call.1} parent=11 // pred_region
          %s649 = ssub.s32 2048, 2048
          %650 = vsyncadd [#allocation20], %s649
          %s651 = sshll.u32 [#allocation19], 4
          %s652 = int_to_ptr.vmem [resolvable:$true] %s651
          %657 = dma.hbm_to_vmem [thread:$0]  %s10, 2048, %s652, [#allocation20], 128, 128, 8
        $region52: #{tpu_custom_call.1} parent=11 // pred_fallthru
          _
        // Predicated region
        $region53: #{tpu_custom_call.1} parent=11 // pred_check
          %p658 = pneg %p315
        $region54: #{tpu_custom_call.1} parent=11 // pred_check_branch
          %660 = sbr.rel (%p658) target = $region56
        $region55: #{tpu_custom_call.1} parent=11 // pred_region
          %s662 = ssub.s32 16, 16
          %663 = vsyncadd [#allocation20], %s662
          %s665 = sshll.u32 [#allocation21], 4
          %s666 = int_to_ptr.vmem [resolvable:$true] %s665
          %668 = dma.hbm_to_vmem [thread:$0]  %s11, 16, %s666, [#allocation20]
        $region56: #{tpu_custom_call.1} parent=11 // pred_fallthru
          _
        // Predicated region
        $region57: #{tpu_custom_call.1} parent=11 // pred_check
          %p669 = pneg %p336
        $region58: #{tpu_custom_call.1} parent=11 // pred_check_branch
          %671 = sbr.rel (%p669) target = $region60
        $region59: #{tpu_custom_call.1} parent=11 // pred_region
          %s673 = ssub.s32 2048, 2048
          %674 = vsyncadd [#allocation23], %s673
          %s675 = sshll.u32 [#allocation22], 4
          %s676 = int_to_ptr.vmem [resolvable:$true] %s675
          %681 = dma.hbm_to_vmem [thread:$0]  %s12, 2048, %s676, [#allocation23], 128, 128, 8
        $region60: #{tpu_custom_call.1} parent=11 // pred_fallthru
          _
        // Predicated region
        $region61: #{tpu_custom_call.1} parent=11 // pred_check
          %p682 = pneg %p357
        $region62: #{tpu_custom_call.1} parent=11 // pred_check_branch
          %684 = sbr.rel (%p682) target = $region64
        $region63: #{tpu_custom_call.1} parent=11 // pred_region
          %s686 = ssub.s32 16, 16
          %687 = vsyncadd [#allocation23], %s686
          %s689 = sshll.u32 [#allocation24], 4
          %s690 = int_to_ptr.vmem [resolvable:$true] %s689
          %692 = dma.hbm_to_vmem [thread:$0]  %s13, 16, %s690, [#allocation23]
        $region64: #{tpu_custom_call.1} parent=11 // pred_fallthru
          _
        // Predicated region
        $region65: #{tpu_custom_call.1} parent=11 // pred_check
          %p693 = pneg %p378
        $region66: #{tpu_custom_call.1} parent=11 // pred_check_branch
          %695 = sbr.rel (%p693) target = $region68
        $region67: #{tpu_custom_call.1} parent=11 // pred_region
          %s697 = ssub.s32 2048, 2048
          %698 = vsyncadd [#allocation26], %s697
          %s699 = sshll.u32 [#allocation25], 4
          %s700 = int_to_ptr.vmem [resolvable:$true] %s699
          %705 = dma.hbm_to_vmem [thread:$0]  %s14, 2048, %s700, [#allocation26], 128, 128, 8
        $region68: #{tpu_custom_call.1} parent=11 // pred_fallthru
          _
        // Predicated region
        $region69: #{tpu_custom_call.1} parent=11 // pred_check
          %p706 = pneg %p399
        $region70: #{tpu_custom_call.1} parent=11 // pred_check_branch
          %708 = sbr.rel (%p706) target = $region72
        $region71: #{tpu_custom_call.1} parent=11 // pred_region
          %s710 = ssub.s32 16, 16
          %711 = vsyncadd [#allocation26], %s710
          %s713 = sshll.u32 [#allocation27], 4
          %s714 = int_to_ptr.vmem [resolvable:$true] %s713
          %716 = dma.hbm_to_vmem [thread:$0]  %s15, 16, %s714, [#allocation26]
        $region72: #{tpu_custom_call.1} parent=11 // pred_fallthru
          _
        // Predicated region
        $region73: #{tpu_custom_call.1} parent=11 // pred_check
          %p717 = pneg %p420
        $region74: #{tpu_custom_call.1} parent=11 // pred_check_branch
          %719 = sbr.rel (%p717) target = $region76
        $region75: #{tpu_custom_call.1} parent=11 // pred_region
          %s721 = ssub.s32 2048, 2048
          %722 = vsyncadd [#allocation29], %s721
          %s723 = sshll.u32 [#allocation28], 4
          %s724 = int_to_ptr.vmem [resolvable:$true] %s723
          %729 = dma.hbm_to_vmem [thread:$0]  %s16, 2048, %s724, [#allocation29], 128, 128, 8
        $region76: #{tpu_custom_call.1} parent=11 // pred_fallthru
          _
        // Predicated region
        $region77: #{tpu_custom_call.1} parent=11 // pred_check
          %p730 = pneg %p441
        $region78: #{tpu_custom_call.1} parent=11 // pred_check_branch
          %732 = sbr.rel (%p730) target = $region80
        $region79: #{tpu_custom_call.1} parent=11 // pred_region
          %s734 = ssub.s32 16, 16
          %735 = vsyncadd [#allocation29], %s734
          %s737 = sshll.u32 [#allocation30], 4
          %s738 = int_to_ptr.vmem [resolvable:$true] %s737
          %740 = dma.hbm_to_vmem [thread:$0]  %s17, 16, %s738, [#allocation29]
        $region80: #{tpu_custom_call.1} parent=11 // pred_fallthru
          _
        // Predicated region
        $region81: #{tpu_custom_call.1} parent=11 // pred_check
          %p741 = pneg %p462
        $region82: #{tpu_custom_call.1} parent=11 // pred_check_branch
          %743 = sbr.rel (%p741) target = $region84
        $region83: #{tpu_custom_call.1} parent=11 // pred_region
          _
        $region84: #{tpu_custom_call.1} parent=11 // pred_fallthru
          _
        // Predicated region
        $region85: #{tpu_custom_call.1} parent=11 // pred_check
          %p744 = pneg %p483
        $region86: #{tpu_custom_call.1} parent=11 // pred_check_branch
          %746 = sbr.rel (%p744) target = $region88
        $region87: #{tpu_custom_call.1} parent=11 // pred_region
          %s748 = ssub.s32 16, 16
          %749 = vsyncadd [#allocation32], %s748
          %s751 = sshll.u32 [#allocation31], 4
          %s752 = int_to_ptr.vmem [resolvable:$true] %s751
          %754 = dma.hbm_to_vmem [thread:$0]  %s19, 16, %s752, [#allocation32]
        $region88: #{tpu_custom_call.1} parent=11 // pred_fallthru
          _
      $region12: #{tpu_custom_call.1} parent=5 // pred_fallthru
        _
      %p755 = scmp.lt.s32.totalorder %s44, 2
      // Predicated region
      $region89: #{tpu_custom_call.1} parent=5 // pred_check
        %p756 = pneg %p755
      $region90: #{tpu_custom_call.1} parent=5 // pred_check_branch
        %758 = sbr.rel (%p756) target = $region92
      $region91: #{tpu_custom_call.1} parent=5 // pred_region
        // Predicated region
        $region93: #{tpu_custom_call.1} parent=91 // pred_check
          %p759 = pneg %p99
        $region94: #{tpu_custom_call.1} parent=91 // pred_check_branch
          %761 = sbr.rel (%p759) target = $region96
        $region95: #{tpu_custom_call.1} parent=91 // pred_region
          %s762 = smul.u32 11, %s52
          %p763 = scmp.lt.s32.totalorder %s51, 1
          %s764 = scalar_select %p763, %s51, 1
          %p765 = scmp.lt.s32.totalorder %s762, 10
          %s766 = scalar_select %p765, %s762, 10
          %s767 = smul.addr %s764, 11
          %s768 = sadd.s32 %s766, %s767
          %s769 = smul.addr %s768, 8
          %s770 = scalar_lea.vmem %s1, %s769
          %s771 = smul.u32 11, %s52
        $region96: #{tpu_custom_call.1} parent=91 // pred_fallthru
          _
      $region92: #{tpu_custom_call.1} parent=5 // pred_fallthru
        _
      %p772 = scmp.le.s32.totalorder 1, %s44
      %p773 = scmp.lt.s32.totalorder %s44, 3
      %p774 = pnand %p772, %p773
      %p775 = pneg %p774
      // Predicated region
      $region97: #{tpu_custom_call.1} parent=5 // pred_check
        _
      $region98: #{tpu_custom_call.1} parent=5 // pred_check_branch
        %777 = sbr.rel (%p774) target = $region100
      $region99: #{tpu_custom_call.1} parent=5 // pred_region
        %s778 = ssub.s32 %s44, 1
        // Predicated region
        $region101: #{tpu_custom_call.1} parent=99 // pred_check
          %p779 = pneg %p77
        $region102: #{tpu_custom_call.1} parent=99 // pred_check_branch
          %781 = sbr.rel (%p779) target = $region104
        $region103: #{tpu_custom_call.1} parent=99 // pred_region
          %782 = dma.done [#allocation8], 16
        $region104: #{tpu_custom_call.1} parent=99 // pred_fallthru
          _
        // Predicated region
        $region105: #{tpu_custom_call.1} parent=99 // pred_check
          %p783 = pneg %p147
        $region106: #{tpu_custom_call.1} parent=99 // pred_check_branch
          %785 = sbr.rel (%p783) target = $region108
        $region107: #{tpu_custom_call.1} parent=99 // pred_region
          %786 = dma.done [#allocation6], 16
        $region108: #{tpu_custom_call.1} parent=99 // pred_fallthru
          _
        // Predicated region
        $region109: #{tpu_custom_call.1} parent=99 // pred_check
          %p787 = pneg %p168
        $region110: #{tpu_custom_call.1} parent=99 // pred_check_branch
          %789 = sbr.rel (%p787) target = $region112
        $region111: #{tpu_custom_call.1} parent=99 // pred_region
          %790 = dma.done [#allocation11], 2048
        $region112: #{tpu_custom_call.1} parent=99 // pred_fallthru
          _
        // Predicated region
        $region113: #{tpu_custom_call.1} parent=99 // pred_check
          %p791 = pneg %p189
        $region114: #{tpu_custom_call.1} parent=99 // pred_check_branch
          %793 = sbr.rel (%p791) target = $region116
        $region115: #{tpu_custom_call.1} parent=99 // pred_region
          %794 = dma.done [#allocation11], 16
        $region116: #{tpu_custom_call.1} parent=99 // pred_fallthru
          _
        // Predicated region
        $region117: #{tpu_custom_call.1} parent=99 // pred_check
          %p795 = pneg %p210
        $region118: #{tpu_custom_call.1} parent=99 // pred_check_branch
          %797 = sbr.rel (%p795) target = $region120
        $region119: #{tpu_custom_call.1} parent=99 // pred_region
          %798 = dma.done [#allocation14], 2048
        $region120: #{tpu_custom_call.1} parent=99 // pred_fallthru
          _
        // Predicated region
        $region121: #{tpu_custom_call.1} parent=99 // pred_check
          %p799 = pneg %p231
        $region122: #{tpu_custom_call.1} parent=99 // pred_check_branch
          %801 = sbr.rel (%p799) target = $region124
        $region123: #{tpu_custom_call.1} parent=99 // pred_region
          %802 = dma.done [#allocation14], 16
        $region124: #{tpu_custom_call.1} parent=99 // pred_fallthru
          _
        // Predicated region
        $region125: #{tpu_custom_call.1} parent=99 // pred_check
          %p803 = pneg %p252
        $region126: #{tpu_custom_call.1} parent=99 // pred_check_branch
          %805 = sbr.rel (%p803) target = $region128
        $region127: #{tpu_custom_call.1} parent=99 // pred_region
          %806 = dma.done [#allocation17], 4096
        $region128: #{tpu_custom_call.1} parent=99 // pred_fallthru
          _
        // Predicated region
        $region129: #{tpu_custom_call.1} parent=99 // pred_check
          %p807 = pneg %p273
        $region130: #{tpu_custom_call.1} parent=99 // pred_check_branch
          %809 = sbr.rel (%p807) target = $region132
        $region131: #{tpu_custom_call.1} parent=99 // pred_region
          %810 = dma.done [#allocation17], 32
        $region132: #{tpu_custom_call.1} parent=99 // pred_fallthru
          _
        // Predicated region
        $region133: #{tpu_custom_call.1} parent=99 // pred_check
          %p811 = pneg %p294
        $region134: #{tpu_custom_call.1} parent=99 // pred_check_branch
          %813 = sbr.rel (%p811) target = $region136
        $region135: #{tpu_custom_call.1} parent=99 // pred_region
          %814 = dma.done [#allocation20], 2048
        $region136: #{tpu_custom_call.1} parent=99 // pred_fallthru
          _
        // Predicated region
        $region137: #{tpu_custom_call.1} parent=99 // pred_check
          %p815 = pneg %p315
        $region138: #{tpu_custom_call.1} parent=99 // pred_check_branch
          %817 = sbr.rel (%p815) target = $region140
        $region139: #{tpu_custom_call.1} parent=99 // pred_region
          %818 = dma.done [#allocation20], 16
        $region140: #{tpu_custom_call.1} parent=99 // pred_fallthru
          _
        // Predicated region
        $region141: #{tpu_custom_call.1} parent=99 // pred_check
          %p819 = pneg %p336
        $region142: #{tpu_custom_call.1} parent=99 // pred_check_branch
          %821 = sbr.rel (%p819) target = $region144
        $region143: #{tpu_custom_call.1} parent=99 // pred_region
          %822 = dma.done [#allocation23], 2048
        $region144: #{tpu_custom_call.1} parent=99 // pred_fallthru
          _
        // Predicated region
        $region145: #{tpu_custom_call.1} parent=99 // pred_check
          %p823 = pneg %p357
        $region146: #{tpu_custom_call.1} parent=99 // pred_check_branch
          %825 = sbr.rel (%p823) target = $region148
        $region147: #{tpu_custom_call.1} parent=99 // pred_region
          %826 = dma.done [#allocation23], 16
        $region148: #{tpu_custom_call.1} parent=99 // pred_fallthru
          _
        // Predicated region
        $region149: #{tpu_custom_call.1} parent=99 // pred_check
          %p827 = pneg %p378
        $region150: #{tpu_custom_call.1} parent=99 // pred_check_branch
          %829 = sbr.rel (%p827) target = $region152
        $region151: #{tpu_custom_call.1} parent=99 // pred_region
          %830 = dma.done [#allocation26], 2048
        $region152: #{tpu_custom_call.1} parent=99 // pred_fallthru
          _
        // Predicated region
        $region153: #{tpu_custom_call.1} parent=99 // pred_check
          %p831 = pneg %p399
        $region154: #{tpu_custom_call.1} parent=99 // pred_check_branch
          %833 = sbr.rel (%p831) target = $region156
        $region155: #{tpu_custom_call.1} parent=99 // pred_region
          %834 = dma.done [#allocation26], 16
        $region156: #{tpu_custom_call.1} parent=99 // pred_fallthru
          _
        // Predicated region
        $region157: #{tpu_custom_call.1} parent=99 // pred_check
          %p835 = pneg %p420
        $region158: #{tpu_custom_call.1} parent=99 // pred_check_branch
          %837 = sbr.rel (%p835) target = $region160
        $region159: #{tpu_custom_call.1} parent=99 // pred_region
          %838 = dma.done [#allocation29], 2048
        $region160: #{tpu_custom_call.1} parent=99 // pred_fallthru
          _
        // Predicated region
        $region161: #{tpu_custom_call.1} parent=99 // pred_check
          %p839 = pneg %p441
        $region162: #{tpu_custom_call.1} parent=99 // pred_check_branch
          %841 = sbr.rel (%p839) target = $region164
        $region163: #{tpu_custom_call.1} parent=99 // pred_region
          %842 = dma.done [#allocation29], 16
        $region164: #{tpu_custom_call.1} parent=99 // pred_fallthru
          _
        // Predicated region
        $region165: #{tpu_custom_call.1} parent=99 // pred_check
          %p843 = pneg %p483
        $region166: #{tpu_custom_call.1} parent=99 // pred_check_branch
          %845 = sbr.rel (%p843) target = $region168
        $region167: #{tpu_custom_call.1} parent=99 // pred_region
          %846 = dma.done [#allocation32], 16
        $region168: #{tpu_custom_call.1} parent=99 // pred_fallthru
          _
        %847 = sfence
        %p848 = pneg %p77
        %p849 = pneg %p74
        %s850 = smul.u32 11, %s54
        %p851 = scmp.lt.s32.totalorder %s53, 1
        %s852 = scalar_select %p851, %s53, 1
        %p853 = scmp.lt.s32.totalorder %s850, 10
        %s854 = scalar_select %p853, %s850, 10
        %s855 = smul.addr %s852, 11
        %s856 = sadd.s32 %s854, %s855
        %s857 = smul.addr %s856, 8
        %s858 = scalar_lea.vmem %s1, %s857
        %p859 = pneg %p105
        %p860 = pneg %p102
        %p861 = pneg %p126
        %p862 = pneg %p123
        %p863 = pneg %p147
        %p864 = pneg %p144
        %p865 = pneg %p168
        %p866 = pneg %p165
        %p867 = pneg %p189
        %p868 = pneg %p186
        %p869 = pneg %p210
        %p870 = pneg %p207
        %p871 = pneg %p231
        %p872 = pneg %p228
        %p873 = pneg %p252
        %p874 = pneg %p249
        %p875 = pneg %p273
        %p876 = pneg %p270
        %p877 = pneg %p294
        %p878 = pneg %p291
        %p879 = pneg %p315
        %p880 = pneg %p312
        %p881 = pneg %p336
        %p882 = pneg %p333
        %p883 = pneg %p357
        %p884 = pneg %p354
        %p885 = pneg %p378
        %p886 = pneg %p375
        %p887 = pneg %p399
        %p888 = pneg %p396
        %p889 = pneg %p420
        %p890 = pneg %p417
        %p891 = pneg %p441
        %p892 = pneg %p438
        %p893 = pneg %p462
        %p894 = pneg %p459
        %p895 = pneg %p483
        %p896 = pneg %p480
        %p897 = pneg %p509
        %p898 = pneg %p506
        %s899 = sand.u32 %s496, 1
        %s900 = scalar_lea.sflag [#allocation7], %s899
        %s901 = sand.u32 %s496, 1
        %s902 = scalar_lea.vmem [#allocation33], %s901
        %p903 = pneg %p535
        %p904 = pneg %p532
        %s905 = sand.u32 %s522, 1
        %s906 = scalar_lea.sflag [#allocation35], %s905
        %s907 = sand.u32 %s522, 1
        %s908 = scalar_lea.vmem [#allocation34], %s907
        %s909 = smul.u32 11, %s54
        %p910 = scmp.lt.s32.totalorder %s53, 1
        %s911 = scalar_select %p910, %s53, 1
        %p912 = scmp.lt.s32.totalorder %s909, 10
        %s913 = scalar_select %p912, %s909, 10
        %s914 = smul.addr %s911, 11
        %s915 = sadd.s32 %s913, %s914
        %s916 = smul.addr %s915, 8
        %s917 = scalar_lea.vmem %s1, %s916
        %s918 = smul.u32 11, %s54
        %p919 = scmp.eq.s32.totalorder %s54, 0
        // Predicated region
        $region169: #{tpu_custom_call.1} parent=99 // pred_check
          %p920 = pneg %p919
        $region170: #{tpu_custom_call.1} parent=99 // pred_check_branch
          %922 = sbr.rel (%p920) target = $region172
        $region171: #{tpu_custom_call.1} parent=99 // pred_region
          %923 = vst [vmem:[#allocation2] sm:$0x1] 0.0
          %924 = vst [vmem:[#allocation3] sm:$0xff] 0.0
          %925 = vst [vmem:[#allocation3 + $0x8] sm:$0xff] 0.0
          %926 = vst [vmem:[#allocation3 + $0x10] sm:$0xff] 0.0
          %927 = vst [vmem:[#allocation3 + $0x18] sm:$0xff] 0.0
          %928 = vst [vmem:[#allocation3 + $0x20] sm:$0xff] 0.0
          %929 = vst [vmem:[#allocation3 + $0x28] sm:$0xff] 0.0
          %930 = vst [vmem:[#allocation3 + $0x30] sm:$0xff] 0.0
          %931 = vst [vmem:[#allocation3 + $0x38] sm:$0xff] 0.0
          %932 = vst [vmem:[#allocation3 + $0x40] sm:$0xff] 0.0
          %933 = vst [vmem:[#allocation3 + $0x48] sm:$0xff] 0.0
          %934 = vst [vmem:[#allocation3 + $0x50] sm:$0x1] 0.0
        $region172: #{tpu_custom_call.1} parent=99 // pred_fallthru
          _
        %v935 = vld [vmem:[%s917] sm:$0xff]
        %v936 = vld [vmem:[%s917 + $0x8] sm:$0xff]
        %v937 = vld [vmem:[%s917 + $0x10] sm:$0xff]
        %v938 = vld [vmem:[%s917 + $0x18] sm:$0xff]
        %v939 = vld [vmem:[%s917 + $0x20] sm:$0xff]
        %v940 = vld [vmem:[%s917 + $0x28] sm:$0xff]
        %v941 = vld [vmem:[%s917 + $0x30] sm:$0xff]
        %v942 = vld [vmem:[%s917 + $0x38] sm:$0xff]
        %v943 = vld [vmem:[%s917 + $0x40] sm:$0xff]
        %v944 = vld [vmem:[%s917 + $0x48] sm:$0xff]
        %v945 = vld [vmem:[%s917 + $0x50] sm:$0x1]
        %vm946 = vcmask 195584
        %v947 = vsel %vm946, %v935, 0.0
        %948 = vadd.xlane.f32.xlu0 %v947
        %v949 = vpop.xlane.xlu0 %948
        %v950 = vsel %vm946, %v936, 0.0
        %951 = vadd.xlane.f32.xlu0 %v950
        %v952 = vpop.xlane.xlu0 %951
        %v953 = vsel %vm946, %v937, 0.0
        %954 = vadd.xlane.f32.xlu0 %v953
        %v955 = vpop.xlane.xlu0 %954
        %v956 = vsel %vm946, %v938, 0.0
        %957 = vadd.xlane.f32.xlu0 %v956
        %v958 = vpop.xlane.xlu0 %957
        %v959 = vsel %vm946, %v939, 0.0
        %960 = vadd.xlane.f32.xlu0 %v959
        %v961 = vpop.xlane.xlu0 %960
        %v962 = vsel %vm946, %v940, 0.0
        %963 = vadd.xlane.f32.xlu0 %v962
        %v964 = vpop.xlane.xlu0 %963
        %v965 = vsel %vm946, %v941, 0.0
        %966 = vadd.xlane.f32.xlu0 %v965
        %v967 = vpop.xlane.xlu0 %966
        %v968 = vsel %vm946, %v942, 0.0
        %969 = vadd.xlane.f32.xlu0 %v968
        %v970 = vpop.xlane.xlu0 %969
        %v971 = vsel %vm946, %v943, 0.0
        %972 = vadd.xlane.f32.xlu0 %v971
        %v973 = vpop.xlane.xlu0 %972
        %v974 = vsel %vm946, %v944, 0.0
        %975 = vadd.xlane.f32.xlu0 %v974
        %v976 = vpop.xlane.xlu0 %975
        %vm977 = vcmask 188416
        %v978 = vsel %vm977, %v945, 0.0
        %979 = vadd.xlane.f32.xlu0 %v978
        %v980 = vpop.xlane.xlu0 %979
        %v981 = vmul.f32 %v949, 0.041666668
        %v982 = vmul.f32 %v952, 0.041666668
        %v983 = vmul.f32 %v955, 0.041666668
        %v984 = vmul.f32 %v958, 0.041666668
        %v985 = vmul.f32 %v961, 0.041666668
        %v986 = vmul.f32 %v964, 0.041666668
        %v987 = vmul.f32 %v967, 0.041666668
        %v988 = vmul.f32 %v970, 0.041666668
        %v989 = vmul.f32 %v973, 0.041666668
        %v990 = vmul.f32 %v976, 0.041666668
        %v991 = vmul.f32 %v980, 0.041666668
        %v992 = vsub.f32 %v935, %v981
        %v993 = vsub.f32 %v936, %v982
        %v994 = vsub.f32 %v937, %v983
        %v995 = vsub.f32 %v938, %v984
        %v996 = vsub.f32 %v939, %v985
        %v997 = vsub.f32 %v940, %v986
        %v998 = vsub.f32 %v941, %v987
        %v999 = vsub.f32 %v942, %v988
        %v1000 = vsub.f32 %v943, %v989
        %v1001 = vsub.f32 %v944, %v990
        %v1002 = vsub.f32 %v945, %v991
        %v1003 = vmul.f32 %v992, %v992
        %v1004 = vmul.f32 %v993, %v993
        %v1005 = vmul.f32 %v994, %v994
        %v1006 = vmul.f32 %v995, %v995
        %v1007 = vmul.f32 %v996, %v996
        %v1008 = vmul.f32 %v997, %v997
        %v1009 = vmul.f32 %v998, %v998
        %v1010 = vmul.f32 %v999, %v999
        %v1011 = vmul.f32 %v1000, %v1000
        %v1012 = vmul.f32 %v1001, %v1001
        %v1013 = vmul.f32 %v1002, %v1002
        %v1014 = vsel %vm946, %v1003, 0.0
        %1015 = vadd.xlane.f32.xlu0 %v1014
        %v1016 = vpop.xlane.xlu0 %1015
        %v1017 = vsel %vm946, %v1004, 0.0
        %1018 = vadd.xlane.f32.xlu0 %v1017
        %v1019 = vpop.xlane.xlu0 %1018
        %v1020 = vsel %vm946, %v1005, 0.0
        %1021 = vadd.xlane.f32.xlu0 %v1020
        %v1022 = vpop.xlane.xlu0 %1021
        %v1023 = vsel %vm946, %v1006, 0.0
        %1024 = vadd.xlane.f32.xlu0 %v1023
        %v1025 = vpop.xlane.xlu0 %1024
        %v1026 = vsel %vm946, %v1007, 0.0
        %1027 = vadd.xlane.f32.xlu0 %v1026
        %v1028 = vpop.xlane.xlu0 %1027
        %v1029 = vsel %vm946, %v1008, 0.0
        %1030 = vadd.xlane.f32.xlu0 %v1029
        %v1031 = vpop.xlane.xlu0 %1030
        %v1032 = vsel %vm946, %v1009, 0.0
        %1033 = vadd.xlane.f32.xlu0 %v1032
        %v1034 = vpop.xlane.xlu0 %1033
        %v1035 = vsel %vm946, %v1010, 0.0
        %1036 = vadd.xlane.f32.xlu0 %v1035
        %v1037 = vpop.xlane.xlu0 %1036
        %v1038 = vsel %vm946, %v1011, 0.0
        %1039 = vadd.xlane.f32.xlu0 %v1038
        %v1040 = vpop.xlane.xlu0 %1039
        %v1041 = vsel %vm946, %v1012, 0.0
        %1042 = vadd.xlane.f32.xlu0 %v1041
        %v1043 = vpop.xlane.xlu0 %1042
        %v1044 = vsel %vm977, %v1013, 0.0
        %1045 = vadd.xlane.f32.xlu0 %v1044
        %v1046 = vpop.xlane.xlu0 %1045
        %v1047 = vmul.f32 %v1016, 0.041666668
        %v1048 = vmul.f32 %v1019, 0.041666668
        %v1049 = vmul.f32 %v1022, 0.041666668
        %v1050 = vmul.f32 %v1025, 0.041666668
        %v1051 = vmul.f32 %v1028, 0.041666668
        %v1052 = vmul.f32 %v1031, 0.041666668
        %v1053 = vmul.f32 %v1034, 0.041666668
        %v1054 = vmul.f32 %v1037, 0.041666668
        %v1055 = vmul.f32 %v1040, 0.041666668
        %v1056 = vmul.f32 %v1043, 0.041666668
        %v1057 = vmul.f32 %v1046, 0.041666668
        %v1058 = vadd.f32 %v1047, 1e-05
        %v1059 = vadd.f32 %v1048, 1e-05
        %v1060 = vadd.f32 %v1049, 1e-05
        %v1061 = vadd.f32 %v1050, 1e-05
        %v1062 = vadd.f32 %v1051, 1e-05
        %v1063 = vadd.f32 %v1052, 1e-05
        %v1064 = vadd.f32 %v1053, 1e-05
        %v1065 = vadd.f32 %v1054, 1e-05
        %v1066 = vadd.f32 %v1055, 1e-05
        %v1067 = vadd.f32 %v1056, 1e-05
        %v1068 = vadd.f32 %v1057, 1e-05
        %v1069 = vrsqrt.pop %v1058
        %v1070 = vrsqrt.pop %v1059
        %v1071 = vrsqrt.pop %v1060
        %v1072 = vrsqrt.pop %v1061
        %v1073 = vrsqrt.pop %v1062
        %v1074 = vrsqrt.pop %v1063
        %v1075 = vrsqrt.pop %v1064
        %v1076 = vrsqrt.pop %v1065
        %v1077 = vrsqrt.pop %v1066
        %v1078 = vrsqrt.pop %v1067
        %v1079 = vrsqrt.pop %v1068
        %v1080 = vmul.f32 %v992, %v1069
        %v1081 = vmul.f32 %v993, %v1070
        %v1082 = vmul.f32 %v994, %v1071
        %v1083 = vmul.f32 %v995, %v1072
        %v1084 = vmul.f32 %v996, %v1073
        %v1085 = vmul.f32 %v997, %v1074
        %v1086 = vmul.f32 %v998, %v1075
        %v1087 = vmul.f32 %v999, %v1076
        %v1088 = vmul.f32 %v1000, %v1077
        %v1089 = vmul.f32 %v1001, %v1078
        %v1090 = vmul.f32 %v1002, %v1079
        %1091 = vst.msk [vmem:[#allocation3] sm:$0xff] %vm946, %v1080
        %1092 = vst.msk [vmem:[#allocation3 + $0x8] sm:$0xff] %vm946, %v1081
        %1093 = vst.msk [vmem:[#allocation3 + $0x10] sm:$0xff] %vm946, %v1082
        %1094 = vst.msk [vmem:[#allocation3 + $0x18] sm:$0xff] %vm946, %v1083
        %1095 = vst.msk [vmem:[#allocation3 + $0x20] sm:$0xff] %vm946, %v1084
        %1096 = vst.msk [vmem:[#allocation3 + $0x28] sm:$0xff] %vm946, %v1085
        %1097 = vst.msk [vmem:[#allocation3 + $0x30] sm:$0xff] %vm946, %v1086
        %1098 = vst.msk [vmem:[#allocation3 + $0x38] sm:$0xff] %vm946, %v1087
        %1099 = vst.msk [vmem:[#allocation3 + $0x40] sm:$0xff] %vm946, %v1088
        %1100 = vst.msk [vmem:[#allocation3 + $0x48] sm:$0xff] %vm946, %v1089
        %1101 = vst.msk [vmem:[#allocation3 + $0x50] sm:$0x1] %vm977, %v1090
        %v1102 = vld [vmem:[#allocation3] sm:$0xff]
        %v1103 = vld [vmem:[#allocation3 + $0x8] sm:$0xff]
        %v1104 = vld [vmem:[#allocation3 + $0x10] sm:$0xff]
        %v1105 = vld [vmem:[#allocation3 + $0x18] sm:$0xff]
        %v1106 = vld [vmem:[#allocation3 + $0x20] sm:$0xff]
        %v1107 = vld [vmem:[#allocation3 + $0x28] sm:$0xff]
        %v1108 = vld [vmem:[#allocation3 + $0x30] sm:$0xff]
        %v1109 = vld [vmem:[#allocation3 + $0x38] sm:$0xff]
        %v1110 = vld [vmem:[#allocation3 + $0x40] sm:$0xff]
        %v1111 = vld [vmem:[#allocation3 + $0x48] sm:$0xff]
        %v1112 = vld [vmem:[#allocation3 + $0x50] sm:$0x1]
        %v1113 = vld [vmem:[%s2] sm:$0xff]
        %v1114 = vld [vmem:[%s2 + $0x8] sm:$0xff]
        %v1115 = vld [vmem:[%s2 + $0x10] sm:$0xff]
        %v1116 = vld [vmem:[%s2 + $0x18] sm:$0xff]
        %v1117 = vld [vmem:[%s2 + $0x20] sm:$0xff]
        %v1118 = vld [vmem:[%s2 + $0x28] sm:$0xff]
        %v1119 = vld [vmem:[%s2 + $0x30] sm:$0xff]
        %v1120 = vld [vmem:[%s2 + $0x38] sm:$0xff]
        %v1121 = vld [vmem:[%s2 + $0x40] sm:$0xff]
        %v1122 = vld [vmem:[%s2 + $0x48] sm:$0xff]
        %v1123 = vld [vmem:[%s2 + $0x50] sm:$0xff]
        %v1124 = vld [vmem:[%s2 + $0x58] sm:$0xff]
        %v1125 = vld [vmem:[%s2 + $0x60] sm:$0xff]
        %v1126 = vld [vmem:[%s2 + $0x68] sm:$0xff]
        %v1127 = vld [vmem:[%s2 + $0x70] sm:$0xff]
        %v1128 = vld [vmem:[%s2 + $0x78] sm:$0xff]
        %v1129 = vld [vmem:[#allocation9] sm:$0x1]
        %v1131 = vlaneseq
        %v1132 = vshrl.u32 %v1131, 7
        %v1133 = vsub.s32 0, %v1132
        %v1134 = vrot.slane %v1129, %v1133
        %1136 = vmatprep.subr.mxu0 0.0
        %1137 = vmatpush1.msra.mxu0 %v1128
        %1138 = vmatprep.subr.mxu0 0.0
        %1139 = vmatpush1.msra.mxu0 %v1127
        %1140 = vmatprep.subr.mxu0 0.0
        %1141 = vmatpush1.msra.mxu0 %v1126
        %1142 = vmatprep.subr.mxu0 0.0
        %1143 = vmatpush1.msra.mxu0 %v1125
        %1144 = vmatprep.subr.mxu0 0.0
        %1145 = vmatpush1.msra.mxu0 %v1124
        %1146 = vmatprep.subr.mxu0 0.0
        %1147 = vmatpush1.msra.mxu0 %v1123
        %1148 = vmatprep.subr.mxu0 0.0
        %1149 = vmatpush1.msra.mxu0 %v1122
        %1150 = vmatprep.subr.mxu0 0.0
        %1151 = vmatpush1.msra.mxu0 %v1121
        %1152 = vmatprep.subr.mxu0 0.0
        %1153 = vmatpush1.msra.mxu0 %v1120
        %1154 = vmatprep.subr.mxu0 0.0
        %1155 = vmatpush1.msra.mxu0 %v1119
        %1156 = vmatprep.subr.mxu0 0.0
        %1157 = vmatpush1.msra.mxu0 %v1118
        %1158 = vmatprep.subr.mxu0 0.0
        %1159 = vmatpush1.msra.mxu0 %v1117
        %1160 = vmatprep.subr.mxu0 0.0
        %1161 = vmatpush1.msra.mxu0 %v1116
        %1162 = vmatprep.subr.mxu0 0.0
        %1163 = vmatpush1.msra.mxu0 %v1115
        %1164 = vmatprep.subr.mxu0 0.0
        %1165 = vmatpush1.msra.mxu0 %v1114
        %1166 = vmatprep.subr.mxu0 0.0
        %1167 = vmatpush1.msra.mxu0 %v1113
        %1168 = vmatprep.subr.mxu0 0.0
        %1169 = vmatpush2.msra.mxu0 0.0
        %1170 = vmatprep.subr.mxu0 0.0
        %1171 = vmatpush2.msra.mxu0 0.0
        %1172 = vmatprep.subr.mxu0 0.0
        %1173 = vmatpush2.msra.mxu0 0.0
        %1174 = vmatprep.subr.mxu0 0.0
        %1175 = vmatpush2.msra.mxu0 0.0
        %1176 = vmatprep.subr.mxu0 0.0
        %1177 = vmatpush2.msra.mxu0 0.0
        %1178 = vmatprep.subr.mxu0 0.0
        %1179 = vmatpush2.msra.mxu0 0.0
        %1180 = vmatprep.subr.mxu0 0.0
        %1181 = vmatpush2.msra.mxu0 0.0
        %1182 = vmatprep.subr.mxu0 0.0
        %1183 = vmatpush2.msra.mxu0 0.0
        %1184 = vmatprep.subr.mxu0 0.0
        %1185 = vmatpush2.msra.mxu0 0.0
        %1186 = vmatprep.subr.mxu0 0.0
        %1187 = vmatpush2.msra.mxu0 0.0
        %1188 = vmatprep.subr.mxu0 0.0
        %1189 = vmatpush2.msra.mxu0 0.0
        %1190 = vmatprep.subr.mxu0 0.0
        %1191 = vmatpush2.msra.mxu0 0.0
        %1192 = vmatprep.subr.mxu0 0.0
        %1193 = vmatpush2.msra.mxu0 0.0
        %1194 = vmatprep.subr.mxu0 0.0
        %1195 = vmatpush2.msra.mxu0 0.0
        %1196 = vmatprep.subr.mxu0 0.0
        %1197 = vmatpush2.msra.mxu0 0.0
        %1198 = vmatprep.subr.mxu0 0.0
        %1199 = vmatpush2.msra.mxu0 0.0
        %1200 = vmatprep.mubr.f32.mxu0 0.0
        %1201 = vmatmul.mubr.f32.gmra.mxu0 %v1102
        %v1202 = vpop.f32.mrf.mxu0
        %v1203 = vadd.f32 %v1134, %v1202
        %v1204 = vpop.f32.mrf.mxu0
        %1205 = vmatprep.mubr.f32.mxu0 0.0
        %1206 = vmatmul.mubr.f32.gmra.mxu0 %v1103
        %v1207 = vpop.f32.mrf.mxu0
        %v1208 = vadd.f32 %v1134, %v1207
        %v1209 = vpop.f32.mrf.mxu0
        %1210 = vmatprep.mubr.f32.mxu0 0.0
        %1211 = vmatmul.mubr.f32.gmra.mxu0 %v1104
        %v1212 = vpop.f32.mrf.mxu0
        %v1213 = vadd.f32 %v1134, %v1212
        %v1214 = vpop.f32.mrf.mxu0
        %1215 = vmatprep.mubr.f32.mxu0 0.0
        %1216 = vmatmul.mubr.f32.gmra.mxu0 %v1105
        %v1217 = vpop.f32.mrf.mxu0
        %v1218 = vadd.f32 %v1134, %v1217
        %v1219 = vpop.f32.mrf.mxu0
        %1220 = vmatprep.mubr.f32.mxu0 0.0
        %1221 = vmatmul.mubr.f32.gmra.mxu0 %v1106
        %v1222 = vpop.f32.mrf.mxu0
        %v1223 = vadd.f32 %v1134, %v1222
        %v1224 = vpop.f32.mrf.mxu0
        %1225 = vmatprep.mubr.f32.mxu0 0.0
        %1226 = vmatmul.mubr.f32.gmra.mxu0 %v1107
        %v1227 = vpop.f32.mrf.mxu0
        %v1228 = vadd.f32 %v1134, %v1227
        %v1229 = vpop.f32.mrf.mxu0
        %1230 = vmatprep.mubr.f32.mxu0 0.0
        %1231 = vmatmul.mubr.f32.gmra.mxu0 %v1108
        %v1232 = vpop.f32.mrf.mxu0
        %v1233 = vadd.f32 %v1134, %v1232
        %v1234 = vpop.f32.mrf.mxu0
        %1235 = vmatprep.mubr.f32.mxu0 0.0
        %1236 = vmatmul.mubr.f32.gmra.mxu0 %v1109
        %v1237 = vpop.f32.mrf.mxu0
        %v1238 = vadd.f32 %v1134, %v1237
        %v1239 = vpop.f32.mrf.mxu0
        %1240 = vmatprep.mubr.f32.mxu0 0.0
        %1241 = vmatmul.mubr.f32.gmra.mxu0 %v1110
        %v1242 = vpop.f32.mrf.mxu0
        %v1243 = vadd.f32 %v1134, %v1242
        %v1244 = vpop.f32.mrf.mxu0
        %1245 = vmatprep.mubr.f32.mxu0 0.0
        %1246 = vmatmul.mubr.f32.gmra.mxu0 %v1111
        %v1247 = vpop.f32.mrf.mxu0
        %v1248 = vadd.f32 %v1134, %v1247
        %v1249 = vpop.f32.mrf.mxu0
        %1250 = vmatprep.mubr.f32.mxu0 0.0
        %1251 = vmatmul.mubr.f32.gmra.mxu0 %v1112
        %v1252 = vpop.f32.mrf.mxu0
        %v1253 = vadd.f32 %v1134, %v1252
        %v1254 = vpop.f32.mrf.mxu0
        %1255 = vdwg.mxu0
        %s1256 = sld [smem:[#allocation5]]
        %s1257 = sld [smem:[#allocation5 + $0x1]]
        %v1258 = vld [vmem:[#allocation10] sm:$0xff]
        %v1259 = vld [vmem:[#allocation10 + $0x8] sm:$0xff]
        %v1260 = vld [vmem:[#allocation10 + $0x10] sm:$0xff]
        %v1261 = vld [vmem:[#allocation10 + $0x18] sm:$0xff]
        %v1262 = vld [vmem:[#allocation10 + $0x20] sm:$0xff]
        %v1263 = vld [vmem:[#allocation10 + $0x28] sm:$0xff]
        %v1264 = vld [vmem:[#allocation10 + $0x30] sm:$0xff]
        %v1265 = vld [vmem:[#allocation10 + $0x38] sm:$0xff]
        %v1266 = vld [vmem:[#allocation10 + $0x40] sm:$0xff]
        %v1267 = vld [vmem:[#allocation10 + $0x48] sm:$0xff]
        %v1268 = vld [vmem:[#allocation10 + $0x50] sm:$0xff]
        %v1269 = vld [vmem:[#allocation10 + $0x58] sm:$0xff]
        %v1270 = vld [vmem:[#allocation10 + $0x60] sm:$0xff]
        %v1271 = vld [vmem:[#allocation10 + $0x68] sm:$0xff]
        %v1272 = vld [vmem:[#allocation10 + $0x70] sm:$0xff]
        %v1273 = vld [vmem:[#allocation10 + $0x78] sm:$0xff]
        %v1274 = vld [vmem:[#allocation12] sm:$0x1]
        %v1276 = vlaneseq
        %v1277 = vshrl.u32 %v1276, 7
        %v1278 = vsub.s32 0, %v1277
        %v1279 = vrot.slane %v1274, %v1278
        %1281 = vmatprep.subr.mxu0 0.0
        %1282 = vmatpush1.msra.mxu0 %v1273
        %1283 = vmatprep.subr.mxu0 0.0
        %1284 = vmatpush1.msra.mxu0 %v1272
        %1285 = vmatprep.subr.mxu0 0.0
        %1286 = vmatpush1.msra.mxu0 %v1271
        %1287 = vmatprep.subr.mxu0 0.0
        %1288 = vmatpush1.msra.mxu0 %v1270
        %1289 = vmatprep.subr.mxu0 0.0
        %1290 = vmatpush1.msra.mxu0 %v1269
        %1291 = vmatprep.subr.mxu0 0.0
        %1292 = vmatpush1.msra.mxu0 %v1268
        %1293 = vmatprep.subr.mxu0 0.0
        %1294 = vmatpush1.msra.mxu0 %v1267
        %1295 = vmatprep.subr.mxu0 0.0
        %1296 = vmatpush1.msra.mxu0 %v1266
        %1297 = vmatprep.subr.mxu0 0.0
        %1298 = vmatpush1.msra.mxu0 %v1265
        %1299 = vmatprep.subr.mxu0 0.0
        %1300 = vmatpush1.msra.mxu0 %v1264
        %1301 = vmatprep.subr.mxu0 0.0
        %1302 = vmatpush1.msra.mxu0 %v1263
        %1303 = vmatprep.subr.mxu0 0.0
        %1304 = vmatpush1.msra.mxu0 %v1262
        %1305 = vmatprep.subr.mxu0 0.0
        %1306 = vmatpush1.msra.mxu0 %v1261
        %1307 = vmatprep.subr.mxu0 0.0
        %1308 = vmatpush1.msra.mxu0 %v1260
        %1309 = vmatprep.subr.mxu0 0.0
        %1310 = vmatpush1.msra.mxu0 %v1259
        %1311 = vmatprep.subr.mxu0 0.0
        %1312 = vmatpush1.msra.mxu0 %v1258
        %1313 = vmatprep.subr.mxu0 0.0
        %1314 = vmatpush2.msra.mxu0 0.0
        %1315 = vmatprep.subr.mxu0 0.0
        %1316 = vmatpush2.msra.mxu0 0.0
        %1317 = vmatprep.subr.mxu0 0.0
        %1318 = vmatpush2.msra.mxu0 0.0
        %1319 = vmatprep.subr.mxu0 0.0
        %1320 = vmatpush2.msra.mxu0 0.0
        %1321 = vmatprep.subr.mxu0 0.0
        %1322 = vmatpush2.msra.mxu0 0.0
        %1323 = vmatprep.subr.mxu0 0.0
        %1324 = vmatpush2.msra.mxu0 0.0
        %1325 = vmatprep.subr.mxu0 0.0
        %1326 = vmatpush2.msra.mxu0 0.0
        %1327 = vmatprep.subr.mxu0 0.0
        %1328 = vmatpush2.msra.mxu0 0.0
        %1329 = vmatprep.subr.mxu0 0.0
        %1330 = vmatpush2.msra.mxu0 0.0
        %1331 = vmatprep.subr.mxu0 0.0
        %1332 = vmatpush2.msra.mxu0 0.0
        %1333 = vmatprep.subr.mxu0 0.0
        %1334 = vmatpush2.msra.mxu0 0.0
        %1335 = vmatprep.subr.mxu0 0.0
        %1336 = vmatpush2.msra.mxu0 0.0
        %1337 = vmatprep.subr.mxu0 0.0
        %1338 = vmatpush2.msra.mxu0 0.0
        %1339 = vmatprep.subr.mxu0 0.0
        %1340 = vmatpush2.msra.mxu0 0.0
        %1341 = vmatprep.subr.mxu0 0.0
        %1342 = vmatpush2.msra.mxu0 0.0
        %1343 = vmatprep.subr.mxu0 0.0
        %1344 = vmatpush2.msra.mxu0 0.0
        %1345 = vmatprep.mubr.f32.mxu0 0.0
        %1346 = vmatmul.mubr.f32.gmra.mxu0 %v1203
        %v1347 = vpop.f32.mrf.mxu0
        %v1348 = vadd.f32 %v1279, %v1347
        %v1349 = vpop.f32.mrf.mxu0
        %1350 = vmatprep.mubr.f32.mxu0 0.0
        %1351 = vmatmul.mubr.f32.gmra.mxu0 %v1208
        %v1352 = vpop.f32.mrf.mxu0
        %v1353 = vadd.f32 %v1279, %v1352
        %v1354 = vpop.f32.mrf.mxu0
        %1355 = vmatprep.mubr.f32.mxu0 0.0
        %1356 = vmatmul.mubr.f32.gmra.mxu0 %v1213
        %v1357 = vpop.f32.mrf.mxu0
        %v1358 = vadd.f32 %v1279, %v1357
        %v1359 = vpop.f32.mrf.mxu0
        %1360 = vmatprep.mubr.f32.mxu0 0.0
        %1361 = vmatmul.mubr.f32.gmra.mxu0 %v1218
        %v1362 = vpop.f32.mrf.mxu0
        %v1363 = vadd.f32 %v1279, %v1362
        %v1364 = vpop.f32.mrf.mxu0
        %1365 = vmatprep.mubr.f32.mxu0 0.0
        %1366 = vmatmul.mubr.f32.gmra.mxu0 %v1223
        %v1367 = vpop.f32.mrf.mxu0
        %v1368 = vadd.f32 %v1279, %v1367
        %v1369 = vpop.f32.mrf.mxu0
        %1370 = vmatprep.mubr.f32.mxu0 0.0
        %1371 = vmatmul.mubr.f32.gmra.mxu0 %v1228
        %v1372 = vpop.f32.mrf.mxu0
        %v1373 = vadd.f32 %v1279, %v1372
        %v1374 = vpop.f32.mrf.mxu0
        %1375 = vmatprep.mubr.f32.mxu0 0.0
        %1376 = vmatmul.mubr.f32.gmra.mxu0 %v1233
        %v1377 = vpop.f32.mrf.mxu0
        %v1378 = vadd.f32 %v1279, %v1377
        %v1379 = vpop.f32.mrf.mxu0
        %1380 = vmatprep.mubr.f32.mxu0 0.0
        %1381 = vmatmul.mubr.f32.gmra.mxu0 %v1238
        %v1382 = vpop.f32.mrf.mxu0
        %v1383 = vadd.f32 %v1279, %v1382
        %v1384 = vpop.f32.mrf.mxu0
        %1385 = vmatprep.mubr.f32.mxu0 0.0
        %1386 = vmatmul.mubr.f32.gmra.mxu0 %v1243
        %v1387 = vpop.f32.mrf.mxu0
        %v1388 = vadd.f32 %v1279, %v1387
        %v1389 = vpop.f32.mrf.mxu0
        %1390 = vmatprep.mubr.f32.mxu0 0.0
        %1391 = vmatmul.mubr.f32.gmra.mxu0 %v1248
        %v1392 = vpop.f32.mrf.mxu0
        %v1393 = vadd.f32 %v1279, %v1392
        %v1394 = vpop.f32.mrf.mxu0
        %1395 = vmatprep.mubr.f32.mxu0 0.0
        %1396 = vmatmul.mubr.f32.gmra.mxu0 %v1253
        %v1397 = vpop.f32.mrf.mxu0
        %v1398 = vadd.f32 %v1279, %v1397
        %v1399 = vpop.f32.mrf.mxu0
        %1400 = vdwg.mxu0
        %vm1401 = vcmp.ge.f32.partialorder %v1348, 0.0
        %vm1402 = vcmp.ge.f32.partialorder %v1353, 0.0
        %vm1403 = vcmp.ge.f32.partialorder %v1358, 0.0
        %vm1404 = vcmp.ge.f32.partialorder %v1363, 0.0
        %vm1405 = vcmp.ge.f32.partialorder %v1368, 0.0
        %vm1406 = vcmp.ge.f32.partialorder %v1373, 0.0
        %vm1407 = vcmp.ge.f32.partialorder %v1378, 0.0
        %vm1408 = vcmp.ge.f32.partialorder %v1383, 0.0
        %vm1409 = vcmp.ge.f32.partialorder %v1388, 0.0
        %vm1410 = vcmp.ge.f32.partialorder %v1393, 0.0
        %vm1411 = vcmp.ge.f32.partialorder %v1398, 0.0
        %v1412 = vstv %s1256
        %v1413 = vmul.f32 %v1412, %v1348
        %v1414 = vmul.f32 %v1412, %v1353
        %v1415 = vmul.f32 %v1412, %v1358
        %v1416 = vmul.f32 %v1412, %v1363
        %v1417 = vmul.f32 %v1412, %v1368
        %v1418 = vmul.f32 %v1412, %v1373
        %v1419 = vmul.f32 %v1412, %v1378
        %v1420 = vmul.f32 %v1412, %v1383
        %v1421 = vmul.f32 %v1412, %v1388
        %v1422 = vmul.f32 %v1412, %v1393
        %v1423 = vmul.f32 %v1412, %v1398
        %v1424 = vsel %vm1401, %v1348, %v1413
        %v1425 = vsel %vm1402, %v1353, %v1414
        %v1426 = vsel %vm1403, %v1358, %v1415
        %v1427 = vsel %vm1404, %v1363, %v1416
        %v1428 = vsel %vm1405, %v1368, %v1417
        %v1429 = vsel %vm1406, %v1373, %v1418
        %v1430 = vsel %vm1407, %v1378, %v1419
        %v1431 = vsel %vm1408, %v1383, %v1420
        %v1432 = vsel %vm1409, %v1388, %v1421
        %v1433 = vsel %vm1410, %v1393, %v1422
        %v1434 = vsel %vm1411, %v1398, %v1423
        %v1435 = vld [vmem:[#allocation13] sm:$0xff]
        %v1436 = vld [vmem:[#allocation13 + $0x8] sm:$0xff]
        %v1437 = vld [vmem:[#allocation13 + $0x10] sm:$0xff]
        %v1438 = vld [vmem:[#allocation13 + $0x18] sm:$0xff]
        %v1439 = vld [vmem:[#allocation13 + $0x20] sm:$0xff]
        %v1440 = vld [vmem:[#allocation13 + $0x28] sm:$0xff]
        %v1441 = vld [vmem:[#allocation13 + $0x30] sm:$0xff]
        %v1442 = vld [vmem:[#allocation13 + $0x38] sm:$0xff]
        %v1443 = vld [vmem:[#allocation13 + $0x40] sm:$0xff]
        %v1444 = vld [vmem:[#allocation13 + $0x48] sm:$0xff]
        %v1445 = vld [vmem:[#allocation13 + $0x50] sm:$0xff]
        %v1446 = vld [vmem:[#allocation13 + $0x58] sm:$0xff]
        %v1447 = vld [vmem:[#allocation13 + $0x60] sm:$0xff]
        %v1448 = vld [vmem:[#allocation13 + $0x68] sm:$0xff]
        %v1449 = vld [vmem:[#allocation13 + $0x70] sm:$0xff]
        %v1450 = vld [vmem:[#allocation13 + $0x78] sm:$0xff]
        %v1451 = vld [vmem:[#allocation15] sm:$0x1]
        %v1453 = vlaneseq
        %v1454 = vshrl.u32 %v1453, 7
        %v1455 = vsub.s32 0, %v1454
        %v1456 = vrot.slane %v1451, %v1455
        %1458 = vmatprep.subr.mxu0 0.0
        %1459 = vmatpush1.msra.mxu0 %v1450
        %1460 = vmatprep.subr.mxu0 0.0
        %1461 = vmatpush1.msra.mxu0 %v1449
        %1462 = vmatprep.subr.mxu0 0.0
        %1463 = vmatpush1.msra.mxu0 %v1448
        %1464 = vmatprep.subr.mxu0 0.0
        %1465 = vmatpush1.msra.mxu0 %v1447
        %1466 = vmatprep.subr.mxu0 0.0
        %1467 = vmatpush1.msra.mxu0 %v1446
        %1468 = vmatprep.subr.mxu0 0.0
        %1469 = vmatpush1.msra.mxu0 %v1445
        %1470 = vmatprep.subr.mxu0 0.0
        %1471 = vmatpush1.msra.mxu0 %v1444
        %1472 = vmatprep.subr.mxu0 0.0
        %1473 = vmatpush1.msra.mxu0 %v1443
        %1474 = vmatprep.subr.mxu0 0.0
        %1475 = vmatpush1.msra.mxu0 %v1442
        %1476 = vmatprep.subr.mxu0 0.0
        %1477 = vmatpush1.msra.mxu0 %v1441
        %1478 = vmatprep.subr.mxu0 0.0
        %1479 = vmatpush1.msra.mxu0 %v1440
        %1480 = vmatprep.subr.mxu0 0.0
        %1481 = vmatpush1.msra.mxu0 %v1439
        %1482 = vmatprep.subr.mxu0 0.0
        %1483 = vmatpush1.msra.mxu0 %v1438
        %1484 = vmatprep.subr.mxu0 0.0
        %1485 = vmatpush1.msra.mxu0 %v1437
        %1486 = vmatprep.subr.mxu0 0.0
        %1487 = vmatpush1.msra.mxu0 %v1436
        %1488 = vmatprep.subr.mxu0 0.0
        %1489 = vmatpush1.msra.mxu0 %v1435
        %1490 = vmatprep.subr.mxu0 0.0
        %1491 = vmatpush2.msra.mxu0 0.0
        %1492 = vmatprep.subr.mxu0 0.0
        %1493 = vmatpush2.msra.mxu0 0.0
        %1494 = vmatprep.subr.mxu0 0.0
        %1495 = vmatpush2.msra.mxu0 0.0
        %1496 = vmatprep.subr.mxu0 0.0
        %1497 = vmatpush2.msra.mxu0 0.0
        %1498 = vmatprep.subr.mxu0 0.0
        %1499 = vmatpush2.msra.mxu0 0.0
        %1500 = vmatprep.subr.mxu0 0.0
        %1501 = vmatpush2.msra.mxu0 0.0
        %1502 = vmatprep.subr.mxu0 0.0
        %1503 = vmatpush2.msra.mxu0 0.0
        %1504 = vmatprep.subr.mxu0 0.0
        %1505 = vmatpush2.msra.mxu0 0.0
        %1506 = vmatprep.subr.mxu0 0.0
        %1507 = vmatpush2.msra.mxu0 0.0
        %1508 = vmatprep.subr.mxu0 0.0
        %1509 = vmatpush2.msra.mxu0 0.0
        %1510 = vmatprep.subr.mxu0 0.0
        %1511 = vmatpush2.msra.mxu0 0.0
        %1512 = vmatprep.subr.mxu0 0.0
        %1513 = vmatpush2.msra.mxu0 0.0
        %1514 = vmatprep.subr.mxu0 0.0
        %1515 = vmatpush2.msra.mxu0 0.0
        %1516 = vmatprep.subr.mxu0 0.0
        %1517 = vmatpush2.msra.mxu0 0.0
        %1518 = vmatprep.subr.mxu0 0.0
        %1519 = vmatpush2.msra.mxu0 0.0
        %1520 = vmatprep.subr.mxu0 0.0
        %1521 = vmatpush2.msra.mxu0 0.0
        %1522 = vmatprep.mubr.f32.mxu0 0.0
        %1523 = vmatmul.mubr.f32.gmra.mxu0 %v1424
        %v1524 = vpop.f32.mrf.mxu0
        %v1525 = vadd.f32 %v1456, %v1524
        %v1526 = vpop.f32.mrf.mxu0
        %1527 = vmatprep.mubr.f32.mxu0 0.0
        %1528 = vmatmul.mubr.f32.gmra.mxu0 %v1425
        %v1529 = vpop.f32.mrf.mxu0
        %v1530 = vadd.f32 %v1456, %v1529
        %v1531 = vpop.f32.mrf.mxu0
        %1532 = vmatprep.mubr.f32.mxu0 0.0
        %1533 = vmatmul.mubr.f32.gmra.mxu0 %v1426
        %v1534 = vpop.f32.mrf.mxu0
        %v1535 = vadd.f32 %v1456, %v1534
        %v1536 = vpop.f32.mrf.mxu0
        %1537 = vmatprep.mubr.f32.mxu0 0.0
        %1538 = vmatmul.mubr.f32.gmra.mxu0 %v1427
        %v1539 = vpop.f32.mrf.mxu0
        %v1540 = vadd.f32 %v1456, %v1539
        %v1541 = vpop.f32.mrf.mxu0
        %1542 = vmatprep.mubr.f32.mxu0 0.0
        %1543 = vmatmul.mubr.f32.gmra.mxu0 %v1428
        %v1544 = vpop.f32.mrf.mxu0
        %v1545 = vadd.f32 %v1456, %v1544
        %v1546 = vpop.f32.mrf.mxu0
        %1547 = vmatprep.mubr.f32.mxu0 0.0
        %1548 = vmatmul.mubr.f32.gmra.mxu0 %v1429
        %v1549 = vpop.f32.mrf.mxu0
        %v1550 = vadd.f32 %v1456, %v1549
        %v1551 = vpop.f32.mrf.mxu0
        %1552 = vmatprep.mubr.f32.mxu0 0.0
        %1553 = vmatmul.mubr.f32.gmra.mxu0 %v1430
        %v1554 = vpop.f32.mrf.mxu0
        %v1555 = vadd.f32 %v1456, %v1554
        %v1556 = vpop.f32.mrf.mxu0
        %1557 = vmatprep.mubr.f32.mxu0 0.0
        %1558 = vmatmul.mubr.f32.gmra.mxu0 %v1431
        %v1559 = vpop.f32.mrf.mxu0
        %v1560 = vadd.f32 %v1456, %v1559
        %v1561 = vpop.f32.mrf.mxu0
        %1562 = vmatprep.mubr.f32.mxu0 0.0
        %1563 = vmatmul.mubr.f32.gmra.mxu0 %v1432
        %v1564 = vpop.f32.mrf.mxu0
        %v1565 = vadd.f32 %v1456, %v1564
        %v1566 = vpop.f32.mrf.mxu0
        %1567 = vmatprep.mubr.f32.mxu0 0.0
        %1568 = vmatmul.mubr.f32.gmra.mxu0 %v1433
        %v1569 = vpop.f32.mrf.mxu0
        %v1570 = vadd.f32 %v1456, %v1569
        %v1571 = vpop.f32.mrf.mxu0
        %1572 = vmatprep.mubr.f32.mxu0 0.0
        %1573 = vmatmul.mubr.f32.gmra.mxu0 %v1434
        %v1574 = vpop.f32.mrf.mxu0
        %v1575 = vadd.f32 %v1456, %v1574
        %v1576 = vpop.f32.mrf.mxu0
        %1577 = vdwg.mxu0
        %v1578 = vadd.f32 %v1525, %v1203
        %v1579 = vadd.f32 %v1530, %v1208
        %v1580 = vadd.f32 %v1535, %v1213
        %v1581 = vadd.f32 %v1540, %v1218
        %v1582 = vadd.f32 %v1545, %v1223
        %v1583 = vadd.f32 %v1550, %v1228
        %v1584 = vadd.f32 %v1555, %v1233
        %v1585 = vadd.f32 %v1560, %v1238
        %v1586 = vadd.f32 %v1565, %v1243
        %v1587 = vadd.f32 %v1570, %v1248
        %v1588 = vadd.f32 %v1575, %v1253
        %vm1589 = vcmp.ge.f32.partialorder %v1578, 0.0
        %vm1590 = vcmp.ge.f32.partialorder %v1579, 0.0
        %vm1591 = vcmp.ge.f32.partialorder %v1580, 0.0
        %vm1592 = vcmp.ge.f32.partialorder %v1581, 0.0
        %vm1593 = vcmp.ge.f32.partialorder %v1582, 0.0
        %vm1594 = vcmp.ge.f32.partialorder %v1583, 0.0
        %vm1595 = vcmp.ge.f32.partialorder %v1584, 0.0
        %vm1596 = vcmp.ge.f32.partialorder %v1585, 0.0
        %vm1597 = vcmp.ge.f32.partialorder %v1586, 0.0
        %vm1598 = vcmp.ge.f32.partialorder %v1587, 0.0
        %vm1599 = vcmp.ge.f32.partialorder %v1588, 0.0
        %v1600 = vstv %s1257
        %v1601 = vmul.f32 %v1600, %v1578
        %v1602 = vmul.f32 %v1600, %v1579
        %v1603 = vmul.f32 %v1600, %v1580
        %v1604 = vmul.f32 %v1600, %v1581
        %v1605 = vmul.f32 %v1600, %v1582
        %v1606 = vmul.f32 %v1600, %v1583
        %v1607 = vmul.f32 %v1600, %v1584
        %v1608 = vmul.f32 %v1600, %v1585
        %v1609 = vmul.f32 %v1600, %v1586
        %v1610 = vmul.f32 %v1600, %v1587
        %v1611 = vmul.f32 %v1600, %v1588
        %v1612 = vsel %vm1589, %v1578, %v1601
        %v1613 = vsel %vm1590, %v1579, %v1602
        %v1614 = vsel %vm1591, %v1580, %v1603
        %v1615 = vsel %vm1592, %v1581, %v1604
        %v1616 = vsel %vm1593, %v1582, %v1605
        %v1617 = vsel %vm1594, %v1583, %v1606
        %v1618 = vsel %vm1595, %v1584, %v1607
        %v1619 = vsel %vm1596, %v1585, %v1608
        %v1620 = vsel %vm1597, %v1586, %v1609
        %v1621 = vsel %vm1598, %v1587, %v1610
        %v1622 = vsel %vm1599, %v1588, %v1611
        %vm1633 = vcmask 1046528
        %v1634 = vrot.slane %v1612, 1
        %v1635 = vrot.slane %v1613, 1
        %v1636 = vsel %vm1633, %v1634, %v1635
        %v1637 = vrot.slane %v1614, 1
        %v1638 = vsel %vm1633, %v1635, %v1637
        %v1639 = vrot.slane %v1615, 1
        %v1640 = vsel %vm1633, %v1637, %v1639
        %v1641 = vrot.slane %v1616, 1
        %v1642 = vsel %vm1633, %v1639, %v1641
        %v1643 = vrot.slane %v1617, 1
        %v1644 = vsel %vm1633, %v1641, %v1643
        %v1645 = vrot.slane %v1618, 1
        %v1646 = vsel %vm1633, %v1643, %v1645
        %v1647 = vrot.slane %v1619, 1
        %v1648 = vsel %vm1633, %v1645, %v1647
        %v1649 = vrot.slane %v1620, 1
        %v1650 = vsel %vm1633, %v1647, %v1649
        %v1651 = vrot.slane %v1621, 1
        %v1652 = vsel %vm1633, %v1649, %v1651
        %v1663 = vmax.f32 %v1612, %v1636
        %v1664 = vmax.f32 %v1613, %v1638
        %v1665 = vmax.f32 %v1614, %v1640
        %v1666 = vmax.f32 %v1615, %v1642
        %v1667 = vmax.f32 %v1616, %v1644
        %v1668 = vmax.f32 %v1617, %v1646
        %v1669 = vmax.f32 %v1618, %v1648
        %v1670 = vmax.f32 %v1619, %v1650
        %v1671 = vmax.f32 %v1620, %v1652
        %v1672 = vmax.f32 %v1621, %v1651
        %vm1674 = vcmask 1045504
        %v1675 = vrot.slane %v1612, 2
        %v1676 = vrot.slane %v1613, 2
        %v1677 = vsel %vm1674, %v1675, %v1676
        %v1678 = vrot.slane %v1614, 2
        %v1679 = vsel %vm1674, %v1676, %v1678
        %v1680 = vrot.slane %v1615, 2
        %v1681 = vsel %vm1674, %v1678, %v1680
        %v1682 = vrot.slane %v1616, 2
        %v1683 = vsel %vm1674, %v1680, %v1682
        %v1684 = vrot.slane %v1617, 2
        %v1685 = vsel %vm1674, %v1682, %v1684
        %v1686 = vrot.slane %v1618, 2
        %v1687 = vsel %vm1674, %v1684, %v1686
        %v1688 = vrot.slane %v1619, 2
        %v1689 = vsel %vm1674, %v1686, %v1688
        %v1690 = vrot.slane %v1620, 2
        %v1691 = vsel %vm1674, %v1688, %v1690
        %v1692 = vrot.slane %v1621, 2
        %v1693 = vsel %vm1674, %v1690, %v1692
        %v1694 = vrot.slane %v1622, 2
        %v1695 = vsel %vm1674, %v1692, %v1694
        %v1706 = vmax.f32 %v1663, %v1677
        %v1707 = vmax.f32 %v1664, %v1679
        %v1708 = vmax.f32 %v1665, %v1681
        %v1709 = vmax.f32 %v1666, %v1683
        %v1710 = vmax.f32 %v1667, %v1685
        %v1711 = vmax.f32 %v1668, %v1687
        %v1712 = vmax.f32 %v1669, %v1689
        %v1713 = vmax.f32 %v1670, %v1691
        %v1714 = vmax.f32 %v1671, %v1693
        %v1715 = vmax.f32 %v1672, %v1695
        %1716 = vst [vmem:[#allocation4] sm:$0xff] %v1706
        %1717 = vst [vmem:[#allocation4 + $0x8] sm:$0xff] %v1707
        %1718 = vst [vmem:[#allocation4 + $0x10] sm:$0xff] %v1708
        %1719 = vst [vmem:[#allocation4 + $0x18] sm:$0xff] %v1709
        %1720 = vst [vmem:[#allocation4 + $0x20] sm:$0xff] %v1710
        %1721 = vst [vmem:[#allocation4 + $0x28] sm:$0xff] %v1711
        %1722 = vst [vmem:[#allocation4 + $0x30] sm:$0xff] %v1712
        %1723 = vst [vmem:[#allocation4 + $0x38] sm:$0xff] %v1713
        %1724 = vst [vmem:[#allocation4 + $0x40] sm:$0xff] %v1714
        %1725 = vst [vmem:[#allocation4 + $0x48] sm:$0x7f] %v1715
        %v1726 = vld [vmem:[#allocation4] ss:$3 sm:$0xff]
        %s1727 = scalar_lea.vmem [#allocation4], 24
        %v1728 = vld [vmem:[%s1727] ss:$3 sm:$0xff]
        %s1729 = scalar_lea.vmem [#allocation4], 48
        %v1730 = vld [vmem:[%s1729] ss:$3 sm:$0xff]
        %s1731 = scalar_lea.vmem [#allocation4], 72
        %v1732 = vld [vmem:[%s1731] ss:$3 sm:$0x7]
        %s1733 = sld [smem:[#allocation5 + $0x2]]
        %s1734 = sld [smem:[#allocation5 + $0x3]]
        %v1735 = vld [vmem:[#allocation16] sm:$0xff]
        %v1736 = vld [vmem:[#allocation16 + $0x8] sm:$0xff]
        %v1737 = vld [vmem:[#allocation16 + $0x10] sm:$0xff]
        %v1738 = vld [vmem:[#allocation16 + $0x18] sm:$0xff]
        %v1739 = vld [vmem:[#allocation16 + $0x20] sm:$0xff]
        %v1740 = vld [vmem:[#allocation16 + $0x28] sm:$0xff]
        %v1741 = vld [vmem:[#allocation16 + $0x30] sm:$0xff]
        %v1742 = vld [vmem:[#allocation16 + $0x38] sm:$0xff]
        %v1743 = vld [vmem:[#allocation16 + $0x40] sm:$0xff]
        %v1744 = vld [vmem:[#allocation16 + $0x48] sm:$0xff]
        %v1745 = vld [vmem:[#allocation16 + $0x50] sm:$0xff]
        %v1746 = vld [vmem:[#allocation16 + $0x58] sm:$0xff]
        %v1747 = vld [vmem:[#allocation16 + $0x60] sm:$0xff]
        %v1748 = vld [vmem:[#allocation16 + $0x68] sm:$0xff]
        %v1749 = vld [vmem:[#allocation16 + $0x70] sm:$0xff]
        %v1750 = vld [vmem:[#allocation16 + $0x78] sm:$0xff]
        %v1751 = vld [vmem:[#allocation16 + $0x80] sm:$0xff]
        %v1752 = vld [vmem:[#allocation16 + $0x88] sm:$0xff]
        %v1753 = vld [vmem:[#allocation16 + $0x90] sm:$0xff]
        %v1754 = vld [vmem:[#allocation16 + $0x98] sm:$0xff]
        %v1755 = vld [vmem:[#allocation16 + $0xa0] sm:$0xff]
        %v1756 = vld [vmem:[#allocation16 + $0xa8] sm:$0xff]
        %v1757 = vld [vmem:[#allocation16 + $0xb0] sm:$0xff]
        %v1758 = vld [vmem:[#allocation16 + $0xb8] sm:$0xff]
        %v1759 = vld [vmem:[#allocation16 + $0xc0] sm:$0xff]
        %v1760 = vld [vmem:[#allocation16 + $0xc8] sm:$0xff]
        %v1761 = vld [vmem:[#allocation16 + $0xd0] sm:$0xff]
        %v1762 = vld [vmem:[#allocation16 + $0xd8] sm:$0xff]
        %v1763 = vld [vmem:[#allocation16 + $0xe0] sm:$0xff]
        %v1764 = vld [vmem:[#allocation16 + $0xe8] sm:$0xff]
        %v1765 = vld [vmem:[#allocation16 + $0xf0] sm:$0xff]
        %v1766 = vld [vmem:[#allocation16 + $0xf8] sm:$0xff]
        %v1767 = vld [vmem:[#allocation18] sm:$0x3]
        %v1769 = vlaneseq
        %v1770 = vshrl.u32 %v1769, 7
        %v1771 = vsub.s32 0, %v1770
        %v1772 = vrot.slane %v1767, %v1771
        %v1773 = vlaneseq
        %v1774 = vshrl.u32 %v1773, 7
        %v1775 = vsub.s32 1, %v1774
        %v1776 = vrot.slane %v1767, %v1775
        %1779 = vmatprep.subr.mxu0 %v1766
        %1780 = vmatpush1.msra.mxu0 %v1765
        %1781 = vmatprep.subr.mxu0 %v1764
        %1782 = vmatpush1.msra.mxu0 %v1763
        %1783 = vmatprep.subr.mxu0 %v1762
        %1784 = vmatpush1.msra.mxu0 %v1761
        %1785 = vmatprep.subr.mxu0 %v1760
        %1786 = vmatpush1.msra.mxu0 %v1759
        %1787 = vmatprep.subr.mxu0 %v1758
        %1788 = vmatpush1.msra.mxu0 %v1757
        %1789 = vmatprep.subr.mxu0 %v1756
        %1790 = vmatpush1.msra.mxu0 %v1755
        %1791 = vmatprep.subr.mxu0 %v1754
        %1792 = vmatpush1.msra.mxu0 %v1753
        %1793 = vmatprep.subr.mxu0 %v1752
        %1794 = vmatpush1.msra.mxu0 %v1751
        %1795 = vmatprep.subr.mxu0 %v1750
        %1796 = vmatpush1.msra.mxu0 %v1749
        %1797 = vmatprep.subr.mxu0 %v1748
        %1798 = vmatpush1.msra.mxu0 %v1747
        %1799 = vmatprep.subr.mxu0 %v1746
        %1800 = vmatpush1.msra.mxu0 %v1745
        %1801 = vmatprep.subr.mxu0 %v1744
        %1802 = vmatpush1.msra.mxu0 %v1743
        %1803 = vmatprep.subr.mxu0 %v1742
        %1804 = vmatpush1.msra.mxu0 %v1741
        %1805 = vmatprep.subr.mxu0 %v1740
        %1806 = vmatpush1.msra.mxu0 %v1739
        %1807 = vmatprep.subr.mxu0 %v1738
        %1808 = vmatpush1.msra.mxu0 %v1737
        %1809 = vmatprep.subr.mxu0 %v1736
        %1810 = vmatpush1.msra.mxu0 %v1735
        %1811 = vmatprep.subr.mxu0 0.0
        %1812 = vmatpush2.msra.mxu0 0.0
        %1813 = vmatprep.subr.mxu0 0.0
        %1814 = vmatpush2.msra.mxu0 0.0
        %1815 = vmatprep.subr.mxu0 0.0
        %1816 = vmatpush2.msra.mxu0 0.0
        %1817 = vmatprep.subr.mxu0 0.0
        %1818 = vmatpush2.msra.mxu0 0.0
        %1819 = vmatprep.subr.mxu0 0.0
        %1820 = vmatpush2.msra.mxu0 0.0
        %1821 = vmatprep.subr.mxu0 0.0
        %1822 = vmatpush2.msra.mxu0 0.0
        %1823 = vmatprep.subr.mxu0 0.0
        %1824 = vmatpush2.msra.mxu0 0.0
        %1825 = vmatprep.subr.mxu0 0.0
        %1826 = vmatpush2.msra.mxu0 0.0
        %1827 = vmatprep.subr.mxu0 0.0
        %1828 = vmatpush2.msra.mxu0 0.0
        %1829 = vmatprep.subr.mxu0 0.0
        %1830 = vmatpush2.msra.mxu0 0.0
        %1831 = vmatprep.subr.mxu0 0.0
        %1832 = vmatpush2.msra.mxu0 0.0
        %1833 = vmatprep.subr.mxu0 0.0
        %1834 = vmatpush2.msra.mxu0 0.0
        %1835 = vmatprep.subr.mxu0 0.0
        %1836 = vmatpush2.msra.mxu0 0.0
        %1837 = vmatprep.subr.mxu0 0.0
        %1838 = vmatpush2.msra.mxu0 0.0
        %1839 = vmatprep.subr.mxu0 0.0
        %1840 = vmatpush2.msra.mxu0 0.0
        %1841 = vmatprep.subr.mxu0 0.0
        %1842 = vmatpush2.msra.mxu0 0.0
        %1843 = vmatprep.mubr.f32.mxu0 0.0
        %1844 = vmatmul.mubr.f32.gmra.mxu0 %v1726
        %v1845 = vpop.f32.mrf.mxu0
        %v1846 = vadd.f32 %v1772, %v1845
        %v1847 = vpop.f32.mrf.mxu0
        %v1848 = vadd.f32 %v1776, %v1847
        %1849 = vmatprep.mubr.f32.mxu0 0.0
        %1850 = vmatmul.mubr.f32.gmra.mxu0 %v1728
        %v1851 = vpop.f32.mrf.mxu0
        %v1852 = vadd.f32 %v1772, %v1851
        %v1853 = vpop.f32.mrf.mxu0
        %v1854 = vadd.f32 %v1776, %v1853
        %1855 = vmatprep.mubr.f32.mxu0 0.0
        %1856 = vmatmul.mubr.f32.gmra.mxu0 %v1730
        %v1857 = vpop.f32.mrf.mxu0
        %v1858 = vadd.f32 %v1772, %v1857
        %v1859 = vpop.f32.mrf.mxu0
        %v1860 = vadd.f32 %v1776, %v1859
        %1861 = vmatprep.mubr.f32.mxu0 0.0
        %1862 = vmatmul.mubr.f32.gmra.mxu0 %v1732
        %v1863 = vpop.f32.mrf.mxu0
        %v1864 = vadd.f32 %v1772, %v1863
        %v1865 = vpop.f32.mrf.mxu0
        %v1866 = vadd.f32 %v1776, %v1865
        %1867 = vdwg.mxu0
        %vm1868 = vcmp.ge.f32.partialorder %v1846, 0.0
        %vm1869 = vcmp.ge.f32.partialorder %v1852, 0.0
        %vm1870 = vcmp.ge.f32.partialorder %v1858, 0.0
        %vm1871 = vcmp.ge.f32.partialorder %v1864, 0.0
        %v1872 = vstv %s1733
        %v1873 = vmul.f32 %v1872, %v1846
        %v1874 = vmul.f32 %v1872, %v1852
        %v1875 = vmul.f32 %v1872, %v1858
        %v1876 = vmul.f32 %v1872, %v1864
        %v1877 = vsel %vm1868, %v1846, %v1873
        %v1878 = vsel %vm1869, %v1852, %v1874
        %v1879 = vsel %vm1870, %v1858, %v1875
        %v1880 = vsel %vm1871, %v1864, %v1876
        %v1881 = vld [vmem:[#allocation19] sm:$0xff]
        %v1882 = vld [vmem:[#allocation19 + $0x8] sm:$0xff]
        %v1883 = vld [vmem:[#allocation19 + $0x10] sm:$0xff]
        %v1884 = vld [vmem:[#allocation19 + $0x18] sm:$0xff]
        %v1885 = vld [vmem:[#allocation19 + $0x20] sm:$0xff]
        %v1886 = vld [vmem:[#allocation19 + $0x28] sm:$0xff]
        %v1887 = vld [vmem:[#allocation19 + $0x30] sm:$0xff]
        %v1888 = vld [vmem:[#allocation19 + $0x38] sm:$0xff]
        %v1889 = vld [vmem:[#allocation19 + $0x40] sm:$0xff]
        %v1890 = vld [vmem:[#allocation19 + $0x48] sm:$0xff]
        %v1891 = vld [vmem:[#allocation19 + $0x50] sm:$0xff]
        %v1892 = vld [vmem:[#allocation19 + $0x58] sm:$0xff]
        %v1893 = vld [vmem:[#allocation19 + $0x60] sm:$0xff]
        %v1894 = vld [vmem:[#allocation19 + $0x68] sm:$0xff]
        %v1895 = vld [vmem:[#allocation19 + $0x70] sm:$0xff]
        %v1896 = vld [vmem:[#allocation19 + $0x78] sm:$0xff]
        %v1897 = vld [vmem:[#allocation21] sm:$0x1]
        %v1899 = vlaneseq
        %v1900 = vshrl.u32 %v1899, 7
        %v1901 = vsub.s32 0, %v1900
        %v1902 = vrot.slane %v1897, %v1901
        %1904 = vmatprep.subr.mxu0 0.0
        %1905 = vmatpush1.msra.mxu0 %v1896
        %1906 = vmatprep.subr.mxu0 0.0
        %1907 = vmatpush1.msra.mxu0 %v1895
        %1908 = vmatprep.subr.mxu0 0.0
        %1909 = vmatpush1.msra.mxu0 %v1894
        %1910 = vmatprep.subr.mxu0 0.0
        %1911 = vmatpush1.msra.mxu0 %v1893
        %1912 = vmatprep.subr.mxu0 0.0
        %1913 = vmatpush1.msra.mxu0 %v1892
        %1914 = vmatprep.subr.mxu0 0.0
        %1915 = vmatpush1.msra.mxu0 %v1891
        %1916 = vmatprep.subr.mxu0 0.0
        %1917 = vmatpush1.msra.mxu0 %v1890
        %1918 = vmatprep.subr.mxu0 0.0
        %1919 = vmatpush1.msra.mxu0 %v1889
        %1920 = vmatprep.subr.mxu0 0.0
        %1921 = vmatpush1.msra.mxu0 %v1888
        %1922 = vmatprep.subr.mxu0 0.0
        %1923 = vmatpush1.msra.mxu0 %v1887
        %1924 = vmatprep.subr.mxu0 0.0
        %1925 = vmatpush1.msra.mxu0 %v1886
        %1926 = vmatprep.subr.mxu0 0.0
        %1927 = vmatpush1.msra.mxu0 %v1885
        %1928 = vmatprep.subr.mxu0 0.0
        %1929 = vmatpush1.msra.mxu0 %v1884
        %1930 = vmatprep.subr.mxu0 0.0
        %1931 = vmatpush1.msra.mxu0 %v1883
        %1932 = vmatprep.subr.mxu0 0.0
        %1933 = vmatpush1.msra.mxu0 %v1882
        %1934 = vmatprep.subr.mxu0 0.0
        %1935 = vmatpush1.msra.mxu0 %v1881
        %1936 = vmatprep.subr.mxu0 0.0
        %1937 = vmatpush2.msra.mxu0 0.0
        %1938 = vmatprep.subr.mxu0 0.0
        %1939 = vmatpush2.msra.mxu0 0.0
        %1940 = vmatprep.subr.mxu0 0.0
        %1941 = vmatpush2.msra.mxu0 0.0
        %1942 = vmatprep.subr.mxu0 0.0
        %1943 = vmatpush2.msra.mxu0 0.0
        %1944 = vmatprep.subr.mxu0 0.0
        %1945 = vmatpush2.msra.mxu0 0.0
        %1946 = vmatprep.subr.mxu0 0.0
        %1947 = vmatpush2.msra.mxu0 0.0
        %1948 = vmatprep.subr.mxu0 0.0
        %1949 = vmatpush2.msra.mxu0 0.0
        %1950 = vmatprep.subr.mxu0 0.0
        %1951 = vmatpush2.msra.mxu0 0.0
        %1952 = vmatprep.subr.mxu0 0.0
        %1953 = vmatpush2.msra.mxu0 0.0
        %1954 = vmatprep.subr.mxu0 0.0
        %1955 = vmatpush2.msra.mxu0 0.0
        %1956 = vmatprep.subr.mxu0 0.0
        %1957 = vmatpush2.msra.mxu0 0.0
        %1958 = vmatprep.subr.mxu0 0.0
        %1959 = vmatpush2.msra.mxu0 0.0
        %1960 = vmatprep.subr.mxu0 0.0
        %1961 = vmatpush2.msra.mxu0 0.0
        %1962 = vmatprep.subr.mxu0 0.0
        %1963 = vmatpush2.msra.mxu0 0.0
        %1964 = vmatprep.subr.mxu0 0.0
        %1965 = vmatpush2.msra.mxu0 0.0
        %1966 = vmatprep.subr.mxu0 0.0
        %1967 = vmatpush2.msra.mxu0 0.0
        %1968 = vmatprep.mubr.f32.mxu0 0.0
        %1969 = vmatmul.mubr.f32.gmra.mxu0 %v1877
        %v1970 = vpop.f32.mrf.mxu0
        %v1971 = vadd.f32 %v1902, %v1970
        %v1972 = vpop.f32.mrf.mxu0
        %1973 = vmatprep.mubr.f32.mxu0 0.0
        %1974 = vmatmul.mubr.f32.gmra.mxu0 %v1878
        %v1975 = vpop.f32.mrf.mxu0
        %v1976 = vadd.f32 %v1902, %v1975
        %v1977 = vpop.f32.mrf.mxu0
        %1978 = vmatprep.mubr.f32.mxu0 0.0
        %1979 = vmatmul.mubr.f32.gmra.mxu0 %v1879
        %v1980 = vpop.f32.mrf.mxu0
        %v1981 = vadd.f32 %v1902, %v1980
        %v1982 = vpop.f32.mrf.mxu0
        %1983 = vmatprep.mubr.f32.mxu0 0.0
        %1984 = vmatmul.mubr.f32.gmra.mxu0 %v1880
        %v1985 = vpop.f32.mrf.mxu0
        %v1986 = vadd.f32 %v1902, %v1985
        %v1987 = vpop.f32.mrf.mxu0
        %1988 = vdwg.mxu0
        %v1989 = vadd.f32 %v1971, %v1848
        %v1990 = vadd.f32 %v1976, %v1854
        %v1991 = vadd.f32 %v1981, %v1860
        %v1992 = vadd.f32 %v1986, %v1866
        %vm1993 = vcmp.ge.f32.partialorder %v1989, 0.0
        %vm1994 = vcmp.ge.f32.partialorder %v1990, 0.0
        %vm1995 = vcmp.ge.f32.partialorder %v1991, 0.0
        %vm1996 = vcmp.ge.f32.partialorder %v1992, 0.0
        %v1997 = vstv %s1734
        %v1998 = vmul.f32 %v1997, %v1989
        %v1999 = vmul.f32 %v1997, %v1990
        %v2000 = vmul.f32 %v1997, %v1991
        %v2001 = vmul.f32 %v1997, %v1992
        %v2002 = vsel %vm1993, %v1989, %v1998
        %v2003 = vsel %vm1994, %v1990, %v1999
        %v2004 = vsel %vm1995, %v1991, %v2000
        %v2005 = vsel %vm1996, %v1992, %v2001
        %v2010 = vrot.slane %v2002, 1
        %v2011 = vrot.slane %v2003, 1
        %v2012 = vsel %vm1633, %v2010, %v2011
        %v2013 = vrot.slane %v2004, 1
        %v2014 = vsel %vm1633, %v2011, %v2013
        %v2015 = vrot.slane %v2005, 1
        %v2016 = vsel %vm1633, %v2013, %v2015
        %v2021 = vmax.f32 %v2002, %v2012
        %v2022 = vmax.f32 %v2003, %v2014
        %v2023 = vmax.f32 %v2004, %v2016
        %v2024 = vmax.f32 %v2005, %v2015
        %v2025 = vrot.slane %v2002, 2
        %v2026 = vrot.slane %v2003, 2
        %v2027 = vsel %vm1674, %v2025, %v2026
        %v2028 = vrot.slane %v2004, 2
        %v2029 = vsel %vm1674, %v2026, %v2028
        %v2030 = vrot.slane %v2005, 2
        %v2031 = vsel %vm1674, %v2028, %v2030
        %v2036 = vmax.f32 %v2021, %v2027
        %v2037 = vmax.f32 %v2022, %v2029
        %v2038 = vmax.f32 %v2023, %v2031
        %v2039 = vmax.f32 %v2024, %v2030
        %2040 = vst [vmem:[#allocation4] sm:$0xff] %v2036
        %2041 = vst [vmem:[#allocation4 + $0x8] sm:$0xff] %v2037
        %2042 = vst [vmem:[#allocation4 + $0x10] sm:$0xff] %v2038
        %2043 = vst [vmem:[#allocation4 + $0x18] sm:$0x1] %v2039
        %v2044 = vld [vmem:[#allocation4] ss:$3 sm:$0xff]
        %s2045 = scalar_lea.vmem [#allocation4], 24
        %v2046 = vld [vmem:[%s2045] ss:$3 sm:$0x1]
        %s2047 = sld [smem:[#allocation5 + $0x4]]
        %s2048 = sld [smem:[#allocation5 + $0x5]]
        %v2049 = vld [vmem:[#allocation22] sm:$0xff]
        %v2050 = vld [vmem:[#allocation22 + $0x8] sm:$0xff]
        %v2051 = vld [vmem:[#allocation22 + $0x10] sm:$0xff]
        %v2052 = vld [vmem:[#allocation22 + $0x18] sm:$0xff]
        %v2053 = vld [vmem:[#allocation22 + $0x20] sm:$0xff]
        %v2054 = vld [vmem:[#allocation22 + $0x28] sm:$0xff]
        %v2055 = vld [vmem:[#allocation22 + $0x30] sm:$0xff]
        %v2056 = vld [vmem:[#allocation22 + $0x38] sm:$0xff]
        %v2057 = vld [vmem:[#allocation22 + $0x40] sm:$0xff]
        %v2058 = vld [vmem:[#allocation22 + $0x48] sm:$0xff]
        %v2059 = vld [vmem:[#allocation22 + $0x50] sm:$0xff]
        %v2060 = vld [vmem:[#allocation22 + $0x58] sm:$0xff]
        %v2061 = vld [vmem:[#allocation22 + $0x60] sm:$0xff]
        %v2062 = vld [vmem:[#allocation22 + $0x68] sm:$0xff]
        %v2063 = vld [vmem:[#allocation22 + $0x70] sm:$0xff]
        %v2064 = vld [vmem:[#allocation22 + $0x78] sm:$0xff]
        %v2065 = vld [vmem:[#allocation24] sm:$0x1]
        %v2067 = vlaneseq
        %v2068 = vshrl.u32 %v2067, 7
        %v2069 = vsub.s32 0, %v2068
        %v2070 = vrot.slane %v2065, %v2069
        %2072 = vmatprep.subr.mxu0 0.0
        %2073 = vmatpush1.msra.mxu0 %v2064
        %2074 = vmatprep.subr.mxu0 0.0
        %2075 = vmatpush1.msra.mxu0 %v2063
        %2076 = vmatprep.subr.mxu0 0.0
        %2077 = vmatpush1.msra.mxu0 %v2062
        %2078 = vmatprep.subr.mxu0 0.0
        %2079 = vmatpush1.msra.mxu0 %v2061
        %2080 = vmatprep.subr.mxu0 0.0
        %2081 = vmatpush1.msra.mxu0 %v2060
        %2082 = vmatprep.subr.mxu0 0.0
        %2083 = vmatpush1.msra.mxu0 %v2059
        %2084 = vmatprep.subr.mxu0 0.0
        %2085 = vmatpush1.msra.mxu0 %v2058
        %2086 = vmatprep.subr.mxu0 0.0
        %2087 = vmatpush1.msra.mxu0 %v2057
        %2088 = vmatprep.subr.mxu0 0.0
        %2089 = vmatpush1.msra.mxu0 %v2056
        %2090 = vmatprep.subr.mxu0 0.0
        %2091 = vmatpush1.msra.mxu0 %v2055
        %2092 = vmatprep.subr.mxu0 0.0
        %2093 = vmatpush1.msra.mxu0 %v2054
        %2094 = vmatprep.subr.mxu0 0.0
        %2095 = vmatpush1.msra.mxu0 %v2053
        %2096 = vmatprep.subr.mxu0 0.0
        %2097 = vmatpush1.msra.mxu0 %v2052
        %2098 = vmatprep.subr.mxu0 0.0
        %2099 = vmatpush1.msra.mxu0 %v2051
        %2100 = vmatprep.subr.mxu0 0.0
        %2101 = vmatpush1.msra.mxu0 %v2050
        %2102 = vmatprep.subr.mxu0 0.0
        %2103 = vmatpush1.msra.mxu0 %v2049
        %2104 = vmatprep.subr.mxu0 0.0
        %2105 = vmatpush2.msra.mxu0 0.0
        %2106 = vmatprep.subr.mxu0 0.0
        %2107 = vmatpush2.msra.mxu0 0.0
        %2108 = vmatprep.subr.mxu0 0.0
        %2109 = vmatpush2.msra.mxu0 0.0
        %2110 = vmatprep.subr.mxu0 0.0
        %2111 = vmatpush2.msra.mxu0 0.0
        %2112 = vmatprep.subr.mxu0 0.0
        %2113 = vmatpush2.msra.mxu0 0.0
        %2114 = vmatprep.subr.mxu0 0.0
        %2115 = vmatpush2.msra.mxu0 0.0
        %2116 = vmatprep.subr.mxu0 0.0
        %2117 = vmatpush2.msra.mxu0 0.0
        %2118 = vmatprep.subr.mxu0 0.0
        %2119 = vmatpush2.msra.mxu0 0.0
        %2120 = vmatprep.subr.mxu0 0.0
        %2121 = vmatpush2.msra.mxu0 0.0
        %2122 = vmatprep.subr.mxu0 0.0
        %2123 = vmatpush2.msra.mxu0 0.0
        %2124 = vmatprep.subr.mxu0 0.0
        %2125 = vmatpush2.msra.mxu0 0.0
        %2126 = vmatprep.subr.mxu0 0.0
        %2127 = vmatpush2.msra.mxu0 0.0
        %2128 = vmatprep.subr.mxu0 0.0
        %2129 = vmatpush2.msra.mxu0 0.0
        %2130 = vmatprep.subr.mxu0 0.0
        %2131 = vmatpush2.msra.mxu0 0.0
        %2132 = vmatprep.subr.mxu0 0.0
        %2133 = vmatpush2.msra.mxu0 0.0
        %2134 = vmatprep.subr.mxu0 0.0
        %2135 = vmatpush2.msra.mxu0 0.0
        %2136 = vmatprep.mubr.f32.mxu0 0.0
        %2137 = vmatmul.mubr.f32.gmra.mxu0 %v2044
        %v2138 = vpop.f32.mrf.mxu0
        %v2139 = vadd.f32 %v2070, %v2138
        %v2140 = vpop.f32.mrf.mxu0
        %2141 = vmatprep.mubr.f32.mxu0 0.0
        %2142 = vmatmul.mubr.f32.gmra.mxu0 %v2046
        %v2143 = vpop.f32.mrf.mxu0
        %v2144 = vadd.f32 %v2070, %v2143
        %v2145 = vpop.f32.mrf.mxu0
        %2146 = vdwg.mxu0
        %vm2147 = vcmp.ge.f32.partialorder %v2139, 0.0
        %vm2148 = vcmp.ge.f32.partialorder %v2144, 0.0
        %v2149 = vstv %s2047
        %v2150 = vmul.f32 %v2149, %v2139
        %v2151 = vmul.f32 %v2149, %v2144
        %v2152 = vsel %vm2147, %v2139, %v2150
        %v2153 = vsel %vm2148, %v2144, %v2151
        %v2154 = vld [vmem:[#allocation25] sm:$0xff]
        %v2155 = vld [vmem:[#allocation25 + $0x8] sm:$0xff]
        %v2156 = vld [vmem:[#allocation25 + $0x10] sm:$0xff]
        %v2157 = vld [vmem:[#allocation25 + $0x18] sm:$0xff]
        %v2158 = vld [vmem:[#allocation25 + $0x20] sm:$0xff]
        %v2159 = vld [vmem:[#allocation25 + $0x28] sm:$0xff]
        %v2160 = vld [vmem:[#allocation25 + $0x30] sm:$0xff]
        %v2161 = vld [vmem:[#allocation25 + $0x38] sm:$0xff]
        %v2162 = vld [vmem:[#allocation25 + $0x40] sm:$0xff]
        %v2163 = vld [vmem:[#allocation25 + $0x48] sm:$0xff]
        %v2164 = vld [vmem:[#allocation25 + $0x50] sm:$0xff]
        %v2165 = vld [vmem:[#allocation25 + $0x58] sm:$0xff]
        %v2166 = vld [vmem:[#allocation25 + $0x60] sm:$0xff]
        %v2167 = vld [vmem:[#allocation25 + $0x68] sm:$0xff]
        %v2168 = vld [vmem:[#allocation25 + $0x70] sm:$0xff]
        %v2169 = vld [vmem:[#allocation25 + $0x78] sm:$0xff]
        %v2170 = vld [vmem:[#allocation27] sm:$0x1]
        %v2172 = vlaneseq
        %v2173 = vshrl.u32 %v2172, 7
        %v2174 = vsub.s32 0, %v2173
        %v2175 = vrot.slane %v2170, %v2174
        %2177 = vmatprep.subr.mxu0 0.0
        %2178 = vmatpush1.msra.mxu0 %v2169
        %2179 = vmatprep.subr.mxu0 0.0
        %2180 = vmatpush1.msra.mxu0 %v2168
        %2181 = vmatprep.subr.mxu0 0.0
        %2182 = vmatpush1.msra.mxu0 %v2167
        %2183 = vmatprep.subr.mxu0 0.0
        %2184 = vmatpush1.msra.mxu0 %v2166
        %2185 = vmatprep.subr.mxu0 0.0
        %2186 = vmatpush1.msra.mxu0 %v2165
        %2187 = vmatprep.subr.mxu0 0.0
        %2188 = vmatpush1.msra.mxu0 %v2164
        %2189 = vmatprep.subr.mxu0 0.0
        %2190 = vmatpush1.msra.mxu0 %v2163
        %2191 = vmatprep.subr.mxu0 0.0
        %2192 = vmatpush1.msra.mxu0 %v2162
        %2193 = vmatprep.subr.mxu0 0.0
        %2194 = vmatpush1.msra.mxu0 %v2161
        %2195 = vmatprep.subr.mxu0 0.0
        %2196 = vmatpush1.msra.mxu0 %v2160
        %2197 = vmatprep.subr.mxu0 0.0
        %2198 = vmatpush1.msra.mxu0 %v2159
        %2199 = vmatprep.subr.mxu0 0.0
        %2200 = vmatpush1.msra.mxu0 %v2158
        %2201 = vmatprep.subr.mxu0 0.0
        %2202 = vmatpush1.msra.mxu0 %v2157
        %2203 = vmatprep.subr.mxu0 0.0
        %2204 = vmatpush1.msra.mxu0 %v2156
        %2205 = vmatprep.subr.mxu0 0.0
        %2206 = vmatpush1.msra.mxu0 %v2155
        %2207 = vmatprep.subr.mxu0 0.0
        %2208 = vmatpush1.msra.mxu0 %v2154
        %2209 = vmatprep.subr.mxu0 0.0
        %2210 = vmatpush2.msra.mxu0 0.0
        %2211 = vmatprep.subr.mxu0 0.0
        %2212 = vmatpush2.msra.mxu0 0.0
        %2213 = vmatprep.subr.mxu0 0.0
        %2214 = vmatpush2.msra.mxu0 0.0
        %2215 = vmatprep.subr.mxu0 0.0
        %2216 = vmatpush2.msra.mxu0 0.0
        %2217 = vmatprep.subr.mxu0 0.0
        %2218 = vmatpush2.msra.mxu0 0.0
        %2219 = vmatprep.subr.mxu0 0.0
        %2220 = vmatpush2.msra.mxu0 0.0
        %2221 = vmatprep.subr.mxu0 0.0
        %2222 = vmatpush2.msra.mxu0 0.0
        %2223 = vmatprep.subr.mxu0 0.0
        %2224 = vmatpush2.msra.mxu0 0.0
        %2225 = vmatprep.subr.mxu0 0.0
        %2226 = vmatpush2.msra.mxu0 0.0
        %2227 = vmatprep.subr.mxu0 0.0
        %2228 = vmatpush2.msra.mxu0 0.0
        %2229 = vmatprep.subr.mxu0 0.0
        %2230 = vmatpush2.msra.mxu0 0.0
        %2231 = vmatprep.subr.mxu0 0.0
        %2232 = vmatpush2.msra.mxu0 0.0
        %2233 = vmatprep.subr.mxu0 0.0
        %2234 = vmatpush2.msra.mxu0 0.0
        %2235 = vmatprep.subr.mxu0 0.0
        %2236 = vmatpush2.msra.mxu0 0.0
        %2237 = vmatprep.subr.mxu0 0.0
        %2238 = vmatpush2.msra.mxu0 0.0
        %2239 = vmatprep.subr.mxu0 0.0
        %2240 = vmatpush2.msra.mxu0 0.0
        %2241 = vmatprep.mubr.f32.mxu0 0.0
        %2242 = vmatmul.mubr.f32.gmra.mxu0 %v2152
        %v2243 = vpop.f32.mrf.mxu0
        %v2244 = vadd.f32 %v2175, %v2243
        %v2245 = vpop.f32.mrf.mxu0
        %2246 = vmatprep.mubr.f32.mxu0 0.0
        %2247 = vmatmul.mubr.f32.gmra.mxu0 %v2153
        %v2248 = vpop.f32.mrf.mxu0
        %v2249 = vadd.f32 %v2175, %v2248
        %v2250 = vpop.f32.mrf.mxu0
        %2251 = vdwg.mxu0
        %v2252 = vadd.f32 %v2244, %v2044
        %v2253 = vadd.f32 %v2249, %v2046
        %vm2254 = vcmp.ge.f32.partialorder %v2252, 0.0
        %vm2255 = vcmp.ge.f32.partialorder %v2253, 0.0
        %v2256 = vstv %s2048
        %v2257 = vmul.f32 %v2256, %v2252
        %v2258 = vmul.f32 %v2256, %v2253
        %v2259 = vsel %vm2254, %v2252, %v2257
        %v2260 = vsel %vm2255, %v2253, %v2258
        %v2262 = vrot.slane %v2259, 1
        %v2264 = vmax.f32 %v2259, %v2262
        %v2266 = vrot.slane %v2259, 2
        %v2267 = vrot.slane %v2260, 2
        %v2268 = vsel %vm1674, %v2266, %v2267
        %v2270 = vmax.f32 %v2264, %v2268
        %2271 = vst [vmem:[#allocation4] sm:$0x7f] %v2270
        %v2272 = vld [vmem:[#allocation4] ss:$3 sm:$0x7]
        %s2273 = smul.u32 %s54, 3
        %s2274 = ssub.s32 3, %s2273
        %p2275 = scmp.gt.s32.totalorder %s2274, 0
        %s2276 = scalar_select %p2275, %s2274, 0
        %p2277 = scmp.lt.s32.totalorder %s2276, 3
        %s2278 = scalar_select %p2277, %s2276, 3
        %v2279 = vlaneseq
        %v2280 = vshrl.u32 %v2279, 7
        %v2281 = vld [vmem:[#allocation2] sm:$0x1]
        %v2282 = vstv %s2278
        %vm2283 = vcmp.lt.s32.totalorder %v2280, %v2282
        %v2284 = vsel %vm2283, %v2272, 0.0
        %vm2285 = vcmask 1042432
        %v2286 = vsel %vm2285, %v2284, 0.0
        %v2287 = vrot.slane %v2286, 4
        %v2288 = vadd.f32 %v2286, %v2287
        %v2289 = vrot.slane %v2288, 2
        %v2290 = vadd.f32 %v2288, %v2289
        %v2291 = vrot.slane %v2290, 1
        %v2292 = vadd.f32 %v2290, %v2291
        %v2293 = vadd.f32 %v2281, %v2292
        %2294 = vst [vmem:[#allocation2] sm:$0x1] %v2293
        // Predicated region
        $region173: #{tpu_custom_call.1} parent=99 // pred_check
          %p2295 = pneg %p919
        $region174: #{tpu_custom_call.1} parent=99 // pred_check_branch
          %2297 = sbr.rel (%p2295) target = $region176
        $region175: #{tpu_custom_call.1} parent=99 // pred_region
          %v2298 = vld [vmem:[#allocation2] sm:$0x1]
          %v2299 = vmul.f32 %v2298, 0.33333334
          %v2300 = vld [vmem:[#allocation28] sm:$0xff]
          %v2301 = vld [vmem:[#allocation28 + $0x8] sm:$0xff]
          %v2302 = vld [vmem:[#allocation28 + $0x10] sm:$0xff]
          %v2303 = vld [vmem:[#allocation28 + $0x18] sm:$0xff]
          %v2304 = vld [vmem:[#allocation28 + $0x20] sm:$0xff]
          %v2305 = vld [vmem:[#allocation28 + $0x28] sm:$0xff]
          %v2306 = vld [vmem:[#allocation28 + $0x30] sm:$0xff]
          %v2307 = vld [vmem:[#allocation28 + $0x38] sm:$0xff]
          %v2308 = vld [vmem:[#allocation28 + $0x40] sm:$0xff]
          %v2309 = vld [vmem:[#allocation28 + $0x48] sm:$0xff]
          %v2310 = vld [vmem:[#allocation28 + $0x50] sm:$0xff]
          %v2311 = vld [vmem:[#allocation28 + $0x58] sm:$0xff]
          %v2312 = vld [vmem:[#allocation28 + $0x60] sm:$0xff]
          %v2313 = vld [vmem:[#allocation28 + $0x68] sm:$0xff]
          %v2314 = vld [vmem:[#allocation28 + $0x70] sm:$0xff]
          %v2315 = vld [vmem:[#allocation28 + $0x78] sm:$0xff]
          %v2316 = vld [vmem:[#allocation30] sm:$0x1]
          %2317 = vmatprep.subr.mxu0 0.0
          %2318 = vmatpush1.msra.mxu0 %v2315
          %2319 = vmatprep.subr.mxu0 0.0
          %2320 = vmatpush1.msra.mxu0 %v2314
          %2321 = vmatprep.subr.mxu0 0.0
          %2322 = vmatpush1.msra.mxu0 %v2313
          %2323 = vmatprep.subr.mxu0 0.0
          %2324 = vmatpush1.msra.mxu0 %v2312
          %2325 = vmatprep.subr.mxu0 0.0
          %2326 = vmatpush1.msra.mxu0 %v2311
          %2327 = vmatprep.subr.mxu0 0.0
          %2328 = vmatpush1.msra.mxu0 %v2310
          %2329 = vmatprep.subr.mxu0 0.0
          %2330 = vmatpush1.msra.mxu0 %v2309
          %2331 = vmatprep.subr.mxu0 0.0
          %2332 = vmatpush1.msra.mxu0 %v2308
          %2333 = vmatprep.subr.mxu0 0.0
          %2334 = vmatpush1.msra.mxu0 %v2307
          %2335 = vmatprep.subr.mxu0 0.0
          %2336 = vmatpush1.msra.mxu0 %v2306
          %2337 = vmatprep.subr.mxu0 0.0
          %2338 = vmatpush1.msra.mxu0 %v2305
          %2339 = vmatprep.subr.mxu0 0.0
          %2340 = vmatpush1.msra.mxu0 %v2304
          %2341 = vmatprep.subr.mxu0 0.0
          %2342 = vmatpush1.msra.mxu0 %v2303
          %2343 = vmatprep.subr.mxu0 0.0
          %2344 = vmatpush1.msra.mxu0 %v2302
          %2345 = vmatprep.subr.mxu0 0.0
          %2346 = vmatpush1.msra.mxu0 %v2301
          %2347 = vmatprep.subr.mxu0 0.0
          %2348 = vmatpush1.msra.mxu0 %v2300
          %2349 = vmatprep.subr.mxu0 0.0
          %2350 = vmatpush2.msra.mxu0 0.0
          %2351 = vmatprep.subr.mxu0 0.0
          %2352 = vmatpush2.msra.mxu0 0.0
          %2353 = vmatprep.subr.mxu0 0.0
          %2354 = vmatpush2.msra.mxu0 0.0
          %2355 = vmatprep.subr.mxu0 0.0
          %2356 = vmatpush2.msra.mxu0 0.0
          %2357 = vmatprep.subr.mxu0 0.0
          %2358 = vmatpush2.msra.mxu0 0.0
          %2359 = vmatprep.subr.mxu0 0.0
          %2360 = vmatpush2.msra.mxu0 0.0
          %2361 = vmatprep.subr.mxu0 0.0
          %2362 = vmatpush2.msra.mxu0 0.0
          %2363 = vmatprep.subr.mxu0 0.0
          %2364 = vmatpush2.msra.mxu0 0.0
          %2365 = vmatprep.subr.mxu0 0.0
          %2366 = vmatpush2.msra.mxu0 0.0
          %2367 = vmatprep.subr.mxu0 0.0
          %2368 = vmatpush2.msra.mxu0 0.0
          %2369 = vmatprep.subr.mxu0 0.0
          %2370 = vmatpush2.msra.mxu0 0.0
          %2371 = vmatprep.subr.mxu0 0.0
          %2372 = vmatpush2.msra.mxu0 0.0
          %2373 = vmatprep.subr.mxu0 0.0
          %2374 = vmatpush2.msra.mxu0 0.0
          %2375 = vmatprep.subr.mxu0 0.0
          %2376 = vmatpush2.msra.mxu0 0.0
          %2377 = vmatprep.subr.mxu0 0.0
          %2378 = vmatpush2.msra.mxu0 0.0
          %2379 = vmatprep.subr.mxu0 0.0
          %2380 = vmatpush2.msra.mxu0 0.0
          %2381 = vmatprep.mubr.f32.mxu0 0.0
          %2382 = vmatmul.mubr.f32.gmra.mxu0 %v2299
          %v2383 = vpop.f32.mrf.mxu0
          %v2384 = vadd.f32 %v2316, %v2383
          %v2385 = vpop.f32.mrf.mxu0
          %2386 = vdwg.mxu0
          %2387 = vst [vmem:[%s902] sm:$0x1] %v2384
          %v2388 = vld [vmem:[%s18] sm:$0xff]
          %v2389 = vld [vmem:[%s18 + $0x8] sm:$0xff]
          %v2390 = vld [vmem:[%s18 + $0x10] sm:$0xff]
          %v2391 = vld [vmem:[%s18 + $0x18] sm:$0xff]
          %v2392 = vld [vmem:[%s18 + $0x20] sm:$0xff]
          %v2393 = vld [vmem:[%s18 + $0x28] sm:$0xff]
          %v2394 = vld [vmem:[%s18 + $0x30] sm:$0xff]
          %v2395 = vld [vmem:[%s18 + $0x38] sm:$0xff]
          %v2396 = vld [vmem:[%s18 + $0x40] sm:$0xff]
          %v2397 = vld [vmem:[%s18 + $0x48] sm:$0xff]
          %v2398 = vld [vmem:[%s18 + $0x50] sm:$0xff]
          %v2399 = vld [vmem:[%s18 + $0x58] sm:$0xff]
          %v2400 = vld [vmem:[%s18 + $0x60] sm:$0xff]
          %v2401 = vld [vmem:[%s18 + $0x68] sm:$0xff]
          %v2402 = vld [vmem:[%s18 + $0x70] sm:$0xff]
          %v2403 = vld [vmem:[%s18 + $0x78] sm:$0xff]
          %v2404 = vld [vmem:[#allocation31] sm:$0x1]
          %2405 = vmatprep.subr.mxu0 0.0
          %2406 = vmatpush1.msra.mxu0 %v2403
          %2407 = vmatprep.subr.mxu0 0.0
          %2408 = vmatpush1.msra.mxu0 %v2402
          %2409 = vmatprep.subr.mxu0 0.0
          %2410 = vmatpush1.msra.mxu0 %v2401
          %2411 = vmatprep.subr.mxu0 0.0
          %2412 = vmatpush1.msra.mxu0 %v2400
          %2413 = vmatprep.subr.mxu0 0.0
          %2414 = vmatpush1.msra.mxu0 %v2399
          %2415 = vmatprep.subr.mxu0 0.0
          %2416 = vmatpush1.msra.mxu0 %v2398
          %2417 = vmatprep.subr.mxu0 0.0
          %2418 = vmatpush1.msra.mxu0 %v2397
          %2419 = vmatprep.subr.mxu0 0.0
          %2420 = vmatpush1.msra.mxu0 %v2396
          %2421 = vmatprep.subr.mxu0 0.0
          %2422 = vmatpush1.msra.mxu0 %v2395
          %2423 = vmatprep.subr.mxu0 0.0
          %2424 = vmatpush1.msra.mxu0 %v2394
          %2425 = vmatprep.subr.mxu0 0.0
          %2426 = vmatpush1.msra.mxu0 %v2393
          %2427 = vmatprep.subr.mxu0 0.0
          %2428 = vmatpush1.msra.mxu0 %v2392
          %2429 = vmatprep.subr.mxu0 0.0
          %2430 = vmatpush1.msra.mxu0 %v2391
          %2431 = vmatprep.subr.mxu0 0.0
          %2432 = vmatpush1.msra.mxu0 %v2390
          %2433 = vmatprep.subr.mxu0 0.0
          %2434 = vmatpush1.msra.mxu0 %v2389
          %2435 = vmatprep.subr.mxu0 0.0
          %2436 = vmatpush1.msra.mxu0 %v2388
          %2437 = vmatprep.subr.mxu0 0.0
          %2438 = vmatpush2.msra.mxu0 0.0
          %2439 = vmatprep.subr.mxu0 0.0
          %2440 = vmatpush2.msra.mxu0 0.0
          %2441 = vmatprep.subr.mxu0 0.0
          %2442 = vmatpush2.msra.mxu0 0.0
          %2443 = vmatprep.subr.mxu0 0.0
          %2444 = vmatpush2.msra.mxu0 0.0
          %2445 = vmatprep.subr.mxu0 0.0
          %2446 = vmatpush2.msra.mxu0 0.0
          %2447 = vmatprep.subr.mxu0 0.0
          %2448 = vmatpush2.msra.mxu0 0.0
          %2449 = vmatprep.subr.mxu0 0.0
          %2450 = vmatpush2.msra.mxu0 0.0
          %2451 = vmatprep.subr.mxu0 0.0
          %2452 = vmatpush2.msra.mxu0 0.0
          %2453 = vmatprep.subr.mxu0 0.0
          %2454 = vmatpush2.msra.mxu0 0.0
          %2455 = vmatprep.subr.mxu0 0.0
          %2456 = vmatpush2.msra.mxu0 0.0
          %2457 = vmatprep.subr.mxu0 0.0
          %2458 = vmatpush2.msra.mxu0 0.0
          %2459 = vmatprep.subr.mxu0 0.0
          %2460 = vmatpush2.msra.mxu0 0.0
          %2461 = vmatprep.subr.mxu0 0.0
          %2462 = vmatpush2.msra.mxu0 0.0
          %2463 = vmatprep.subr.mxu0 0.0
          %2464 = vmatpush2.msra.mxu0 0.0
          %2465 = vmatprep.subr.mxu0 0.0
          %2466 = vmatpush2.msra.mxu0 0.0
          %2467 = vmatprep.subr.mxu0 0.0
          %2468 = vmatpush2.msra.mxu0 0.0
          %2469 = vmatprep.mubr.f32.mxu0 0.0
          %2470 = vmatmul.mubr.f32.gmra.mxu0 %v2384
          %v2471 = vpop.f32.mrf.mxu0
          %v2472 = vadd.f32 %v2404, %v2471
          %v2473 = vpop.f32.mrf.mxu0
          %2474 = vdwg.mxu0
          %2475 = vst [vmem:[%s908] sm:$0x1] %v2472
        $region176: #{tpu_custom_call.1} parent=99 // pred_fallthru
          _
        %s2476 = sand.u32 %s496, 1
        %s2477 = scalar_lea.sflag [#allocation7], %s2476
        %s2478 = sand.u32 %s496, 1
        %s2479 = scalar_lea.vmem [#allocation33], %s2478
        %s2480 = sand.u32 %s522, 1
        %s2481 = scalar_lea.sflag [#allocation35], %s2480
        %s2482 = sand.u32 %s522, 1
        %s2483 = scalar_lea.vmem [#allocation34], %s2482
        // Predicated region
        $region177: #{tpu_custom_call.1} parent=99 // pred_check
          %p2484 = pneg %p506
        $region178: #{tpu_custom_call.1} parent=99 // pred_check_branch
          %2486 = sbr.rel (%p2484) target = $region180
        $region179: #{tpu_custom_call.1} parent=99 // pred_region
          %s2488 = ssub.s32 16, 16
          %2489 = vsyncadd %s2477, %s2488
          %s2490 = smul.addr %s53, 16
          %s2491 = scalar_lea.hbm %s20, %s2490
          %s2493 = sshll.u32 %s2479, 4
          %s2494 = int_to_ptr.vmem [resolvable:$true] %s2493
          %2496 = dma.vmem_to_hbm [thread:$0]  %s2494, 16, %s2491, %s2477
        $region180: #{tpu_custom_call.1} parent=99 // pred_fallthru
          _
        // Predicated region
        $region181: #{tpu_custom_call.1} parent=99 // pred_check
          %p2497 = pneg %p532
        $region182: #{tpu_custom_call.1} parent=99 // pred_check_branch
          %2499 = sbr.rel (%p2497) target = $region184
        $region183: #{tpu_custom_call.1} parent=99 // pred_region
          %s2501 = ssub.s32 16, 16
          %2502 = vsyncadd %s2481, %s2501
          %s2503 = smul.addr %s53, 16
          %s2504 = scalar_lea.hbm %s21, %s2503
          %s2506 = sshll.u32 %s2483, 4
          %s2507 = int_to_ptr.vmem [resolvable:$true] %s2506
          %2509 = dma.vmem_to_hbm [thread:$0]  %s2507, 16, %s2504, %s2481
        $region184: #{tpu_custom_call.1} parent=99 // pred_fallthru
          _
      $region100: #{tpu_custom_call.1} parent=5 // pred_fallthru
        _
      %p2510 = scmp.le.s32.totalorder 2, %s44
      // Predicated region
      $region185: #{tpu_custom_call.1} parent=5 // pred_check
        %p2511 = pneg %p2510
      $region186: #{tpu_custom_call.1} parent=5 // pred_check_branch
        %2513 = sbr.rel (%p2511) target = $region188
      $region187: #{tpu_custom_call.1} parent=5 // pred_region
        %s2514 = ssub.s32 %s44, 2
        // Predicated region
        $region189: #{tpu_custom_call.1} parent=187 // pred_check
          %p2515 = pneg %p512
        $region190: #{tpu_custom_call.1} parent=187 // pred_check_branch
          %2517 = sbr.rel (%p2515) target = $region192
        $region191: #{tpu_custom_call.1} parent=187 // pred_region
          %s2518 = sand.u32 %s497, 1
          %s2519 = scalar_lea.sflag [#allocation7], %s2518
          %s2520 = sand.u32 %s497, 1
          %s2521 = scalar_lea.vmem [#allocation33], %s2520
          %2522 = dma.done %s2519, 16
        $region192: #{tpu_custom_call.1} parent=187 // pred_fallthru
          _
        // Predicated region
        $region193: #{tpu_custom_call.1} parent=187 // pred_check
          %p2523 = pneg %p538
        $region194: #{tpu_custom_call.1} parent=187 // pred_check_branch
          %2525 = sbr.rel (%p2523) target = $region196
        $region195: #{tpu_custom_call.1} parent=187 // pred_region
          %s2526 = sand.u32 %s523, 1
          %s2527 = scalar_lea.sflag [#allocation35], %s2526
          %s2528 = sand.u32 %s523, 1
          %s2529 = scalar_lea.vmem [#allocation34], %s2528
          %2530 = dma.done %s2527, 16
        $region196: #{tpu_custom_call.1} parent=187 // pred_fallthru
          _
      $region188: #{tpu_custom_call.1} parent=5 // pred_fallthru
        _
    $region6: #{tpu_custom_call.1} parent=1 // loop_footer
      %s48 = sadd.s32 1, %s44
    $region7: #{tpu_custom_call.1} parent=1 // loop_footer_branch
      %43 = sbr.rel target = $region3
    $region8: #{tpu_custom_call.1} parent=1 // loop_exit
      _
    %2531 = vsyncpa [#allocation6], 1
    %s2532 = scalar_lea.sflag [#allocation6], 1
    %2533 = vsyncpa %s2532, 1
    %2534 = vsyncpa [#allocation11], 1
    %2535 = vsyncpa [#allocation14], 1
    %2536 = vsyncpa [#allocation17], 1
    %2537 = vsyncpa [#allocation20], 1
    %2538 = vsyncpa [#allocation23], 1
    %2539 = vsyncpa [#allocation26], 1
    %2540 = vsyncpa [#allocation29], 1
    %2541 = vsyncpa [#allocation32], 1
    %2542 = vsyncpa [#allocation7], 1
    %s2543 = scalar_lea.sflag [#allocation7], 1
    %2544 = vsyncpa %s2543, 1
    %2545 = vsyncpa [#allocation35], 1
    %s2546 = scalar_lea.sflag [#allocation35], 1
    %2547 = vsyncpa %s2546, 1
    %2548 = vsyncpa [#allocation8], 1
    %s2549 = scalar_lea.sflag [#allocation8], 1
    %2550 = vsyncpa %s2549, 1

</llo_original>
